<compile_context>
chip_gen: v5e
topology: v5e:2x2
jax: 0.10.0
libtpu: 0.0.40
codegen_flags: <defaults>
</compile_context>

<pallas_src>
import functools

import numpy as np
import jax
import jax.numpy as jnp
from jax.experimental import pallas as pl
from jax.experimental.pallas import tpu as pltpu

EPS = 1e-5  # nn.InstanceNorm2d default eps


# ---------------------------------------------------------------------------
# Static (trace-time) helpers: separable interpolation/pad matrices, tap masks.
# ---------------------------------------------------------------------------
def _interp_matrix_1d(n_in, n_out):
    """(n_out, n_in) matrix for 1-D bilinear resize, align_corners=True."""
    A = np.zeros((n_out, n_in), np.float64)
    if n_in == 1 or n_out == 1:
        A[:, 0] = 1.0
        return A
    scale = (n_in - 1) / (n_out - 1)
    for o in range(n_out):
        c = o * scale
        lo = min(int(np.floor(c)), n_in - 1)
        hi = min(lo + 1, n_in - 1)
        t = c - lo
        A[o, lo] += 1.0 - t
        A[o, hi] += t
    return A


def _sep_upsample_pad_matrices(h, w, H, W):
    """Separable upsample+pad maps: Ah_p (H, h), Aw_p (W, w) as numpy f32."""
    Ah = _interp_matrix_1d(h, 2 * h)            # (2h, h)
    Aw = _interp_matrix_1d(w, 2 * w)            # (2w, w)
    dy, dx = H - 2 * h, W - 2 * w
    assert dy >= 0 and dx >= 0, "x1 upsampled larger than x2 is not supported"
    Ah_p = np.zeros((H, h), np.float32)
    Aw_p = np.zeros((W, w), np.float32)
    Ah_p[dy // 2: dy // 2 + 2 * h, :] = Ah      # F.pad top/bottom split
    Aw_p[dx // 2: dx // 2 + 2 * w, :] = Aw      # F.pad left/right split
    return Ah_p, Aw_p


def _tap_masks(H, W):
    """(9, 1, H*W) float masks: zero where a 3x3 tap would read the zero padding."""
    i, j = np.meshgrid(np.arange(H), np.arange(W), indexing="ij")
    ms = []
    for dh in (-1, 0, 1):
        for dw in (-1, 0, 1):
            valid = (i + dh >= 0) & (i + dh < H) & (j + dw >= 0) & (j + dw < W)
            ms.append(valid.reshape(1, H * W).astype(np.float32))
    return jnp.asarray(np.stack(ms, axis=0))


# ---------------------------------------------------------------------------
# Fused Pallas kernel:
#   separable upsample+pad + (virtual concat) + (im2col conv3x3 -> IN -> ReLU) x 2
# One grid step == one batch sample (InstanceNorm statistics are per-sample).
# ---------------------------------------------------------------------------
def _up_double_conv_kernel(x2_ref, x1_ref, awT_ref, ah_ref, mask_ref,
                           w1_ref, w2_ref, g1_ref, be1_ref, g2_ref, be2_ref,
                           o_ref, up3_scr, up_scr, col_scr,
                           *, H, W, c1, c2, cout, precision):
    HW = H * W
    cin1 = c1 + c2
    f32 = jnp.float32
    # Roll amounts such that rolled[p] == x_flat[p + dh*W + dw] (np.roll
    # semantics); wrap-around values are zeroed by the per-tap boundary masks.
    shifts = [(-(dh * W + dw)) % HW for dh in (-1, 0, 1) for dw in (-1, 0, 1)]
    masks = [mask_ref[t] for t in range(9)]                      # each (1, HW)

    # ---- x1 path: separable bilinear x2 upsample + F.pad, fully in-kernel ----
    # (c1, h, w) --W-up--> (c1, h, W) --H-up--> (c1, H, W); both are standard
    # batched matmuls (batch = channel), a few KiB of matrix data total.
    x1 = x1_ref[0]                                               # (c1, h, w)
    t1 = jax.lax.dot_general(
        x1, awT_ref[...],
        dimension_numbers=(((2,), (1,)), ((0,), (0,))),
        preferred_element_type=ah_ref.dtype, precision=precision)  # (c1, h, W)
    x1u3 = jax.lax.dot_general(
        ah_ref[...], t1,
        dimension_numbers=(((2,), (1,)), ((0,), (0,))),
        preferred_element_type=f32, precision=precision)           # (c1, H, W)
    up3_scr[...] = x1u3
    # Relayout (c1, H, W) -> lane-dense (c1, H*W) via W-wide strip copies
    # (static ref slices only).
    # TODO(synk): at large H switch this to a pl.loop with pl.ds.
    for hh in range(H):
        up_scr[:, hh * W:(hh + 1) * W] = up3_scr[:, hh, :]
    x1u = up_scr[...]                                            # (c1, HW) f32

    x2 = x2_ref[0].astype(f32)                                   # (c2, HW) f32

    def fill_taps(x_f32, stride, offset):
        """Write the 9 masked/rolled taps of x_f32 (rows, HW) into col_scr.

        Tap t occupies rows [t*stride + offset, t*stride + offset + rows).
        """
        rows = x_f32.shape[0]
        for t, s in enumerate(shifts):
            xt = pltpu.roll(x_f32, shift=s, axis=1) if s != 0 else x_f32
            if t != 4:                                           # center tap in-bounds
                xt = xt * masks[t]
            r0 = t * stride + offset
            col_scr[r0:r0 + rows, :] = xt.astype(col_scr.dtype)

    def in_affine_relu(acc, g_ref, be_ref):
        """InstanceNorm (biased var, one-pass) + affine folded to scale/shift + ReLU."""
        mean = jnp.mean(acc, axis=1, keepdims=True)              # (cout, 1) f32
        ex2 = jnp.mean(acc * acc, axis=1, keepdims=True)
        var = ex2 - mean * mean
        a = g_ref[...] * jax.lax.rsqrt(var + EPS)
        b = be_ref[...] - mean * a
        return jnp.maximum(acc * a + b, 0.0)

    # ---- conv1 over the virtual channel concat [x2, x1u]: ONE im2col dot ----
    fill_taps(x2, cin1, 0)        # rows t*cin1 + [0, c2)
    fill_taps(x1u, cin1, c2)      # rows t*cin1 + [c2, cin1)
    acc1 = jnp.dot(w1_ref[...], col_scr[0:9 * cin1, :],
                   preferred_element_type=f32, precision=precision)  # (cout, HW)
    y1 = in_affine_relu(acc1, g1_ref, be1_ref)

    # ---- conv2: ONE im2col dot ----
    fill_taps(y1, cout, 0)
    acc2 = jnp.dot(w2_ref[...], col_scr[0:9 * cout, :],
                   preferred_element_type=f32, precision=precision)  # (cout, HW)
    y2 = in_affine_relu(acc2, g2_ref, be2_ref)

    o_ref[0] = y2.astype(o_ref.dtype)                            # (cout, HW) lane-dense


# ---------------------------------------------------------------------------
# Parameter init (PyTorch-style defaults; conv weights are OIHW like nn.Conv2d)
# ---------------------------------------------------------------------------
def init_up_params(key, in_channels, out_channels):
    def conv_init(k, cin, cout):
        k1, k2 = jax.random.split(k)
        bound = 1.0 / np.sqrt(cin * 9)
        w = jax.random.uniform(k1, (cout, cin, 3, 3), jnp.float32, -bound, bound)
        b = jax.random.uniform(k2, (cout,), jnp.float32, -bound, bound)
        return w, b

    k1, k2 = jax.random.split(key)
    w1, b1 = conv_init(k1, in_channels, out_channels)
    w2, b2 = conv_init(k2, out_channels, out_channels)
    # b1/b2 kept only for state-dict parity; a conv bias applied right before
    # InstanceNorm is exactly cancelled by the mean subtraction, so the kernel
    # never loads them (dead work removed).
    return {"w1": w1, "b1": b1,
            "g1": jnp.ones((out_channels,), jnp.float32),
            "beta1": jnp.zeros((out_channels,), jnp.float32),
            "w2": w2, "b2": b2,
            "g2": jnp.ones((out_channels,), jnp.float32),
            "beta2": jnp.zeros((out_channels,), jnp.float32)}


# ---------------------------------------------------------------------------
# Up.forward  (NCHW in / NCHW out, like the PyTorch module)
# ---------------------------------------------------------------------------
@functools.partial(jax.jit, static_argnames=("compute_dtype",))
def up_forward(params, x1_nchw, x2_nchw, compute_dtype=jnp.float32):
    cdtype = compute_dtype
    is_f32 = np.dtype(cdtype) == np.dtype(np.float32)

    N, C1, h, w = x1_nchw.shape
    _, C2, H, W = x2_nchw.shape
    Cin = C1 + C2
    Cout = params["w1"].shape[0]
    HW = H * W
    assert params["w1"].shape[1] == Cin, "w1 input channels must equal C1 + C2"

    # Static separable upsample/pad matrices and 3x3 tap masks (numpy, trace time).
    Ah_p, Aw_p = _sep_upsample_pad_matrices(h, w, H, W)          # (H,h), (W,w)
    awT_b = jnp.asarray(np.broadcast_to(Aw_p.T[None], (C1, w, W)), dtype=cdtype)
    ah_b = jnp.asarray(np.broadcast_to(Ah_p[None], (C1, H, h)), dtype=cdtype)
    masks = _tap_masks(H, W)                                     # (9, 1, HW) f32

    # NCHW -> lane-dense layouts (free, contiguous reshapes in HBM).
    x1f = x1_nchw.astype(cdtype)                                 # (N, C1, h, w)
    x2f = x2_nchw.astype(cdtype).reshape(N, C2, HW)              # (N, C2, HW)

    # Conv weights: OIHW -> im2col layout (Cout, 9*Cin), tap-major then channel;
    # within Cin, channels [0, C2) are x2 and [C2, Cin) are x1u (concat order).
    w1m = params["w1"].transpose(0, 2, 3, 1).reshape(Cout, 9 * Cin).astype(cdtype)
    w2m = params["w2"].transpose(0, 2, 3, 1).reshape(Cout, 9 * Cout).astype(cdtype)
    g1 = params["g1"].reshape(Cout, 1).astype(jnp.float32)
    be1 = params["beta1"].reshape(Cout, 1).astype(jnp.float32)
    g2 = params["g2"].reshape(Cout, 1).astype(jnp.float32)
    be2 = params["beta2"].reshape(Cout, 1).astype(jnp.float32)

    precision = jax.lax.Precision.HIGHEST if is_f32 else None
    kernel = functools.partial(_up_double_conv_kernel, H=H, W=W,
                               c1=C1, c2=C2, cout=Cout, precision=precision)
    col_rows = 9 * max(Cin, Cout)

    out = pl.pallas_call(
        kernel,
        out_shape=jax.ShapeDtypeStruct((N, Cout, HW), cdtype),
        grid=(N,),
        in_specs=[
            pl.BlockSpec((1, C2, HW), lambda n: (n, 0, 0)),      # x2 (skip connection)
            pl.BlockSpec((1, C1, h, w), lambda n: (n, 0, 0, 0)), # x1 (low-res decoder feat)
            pl.BlockSpec((C1, w, W), lambda n: (0, 0, 0)),       # Aw^T (per-channel tiled)
            pl.BlockSpec((C1, H, h), lambda n: (0, 0, 0)),       # Ah   (per-channel tiled)
            pl.BlockSpec((9, 1, HW), lambda n: (0, 0, 0)),       # 3x3 tap masks
            pl.BlockSpec((Cout, 9 * Cin), lambda n: (0, 0)),     # conv1 weights (im2col)
            pl.BlockSpec((Cout, 9 * Cout), lambda n: (0, 0)),    # conv2 weights (im2col)
            pl.BlockSpec((Cout, 1), lambda n: (0, 0)),           # gamma1
            pl.BlockSpec((Cout, 1), lambda n: (0, 0)),           # beta1
            pl.BlockSpec((Cout, 1), lambda n: (0, 0)),           # gamma2
            pl.BlockSpec((Cout, 1), lambda n: (0, 0)),           # beta2
        ],
        out_specs=pl.BlockSpec((1, Cout, HW), lambda n: (n, 0, 0)),
        scratch_shapes=[
            pltpu.VMEM((C1, H, W), jnp.float32),   # upsampled x1 (row-major 3D)
            pltpu.VMEM((C1, HW), jnp.float32),     # upsampled x1 (lane-dense)
            pltpu.VMEM((col_rows, HW), cdtype),    # im2col buffer (shared by both convs)
        ],
        compiler_params=pltpu.CompilerParams(
            dimension_semantics=("parallel",),
            # TODO(synk): make this generation-dependent (pltpu.get_tpu_info)
            # once row-strip tiling is added for realistic UNet sizes.
            vmem_limit_bytes=32 * 1024 * 1024),
    )(x2f, x1f, awT_b, ah_b, masks, w1m, w2m, g1, be1, g2, be2)

    return out.reshape(N, Cout, H, W)


# ---------------------------------------------------------------------------
# Pure-JAX/XLA reference of the PyTorch module (for correctness verification).
# ---------------------------------------------------------------------------
def _upsample_x2_align_corners_ref(x):
    N, C, H, W = x.shape
    Ho, Wo = 2 * H, 2 * W
    yc = jnp.arange(Ho, dtype=jnp.float32) * (H - 1) / max(Ho - 1, 1)
    xc = jnp.arange(Wo, dtype=jnp.float32) * (W - 1) / max(Wo - 1, 1)
    y0 = jnp.floor(yc).astype(jnp.int32)
    y1 = jnp.minimum(y0 + 1, H - 1)
    wy = (yc - y0.astype(jnp.float32))[None, None, :, None]
    x0i = jnp.floor(xc).astype(jnp.int32)
    x1i = jnp.minimum(x0i + 1, W - 1)
    wx = (xc - x0i.astype(jnp.float32))[None, None, None, :]
    v = x[:, :, y0, :] * (1.0 - wy) + x[:, :, y1, :] * wy
    return v[:, :, :, x0i] * (1.0 - wx) + v[:, :, :, x1i] * wx


def up_forward_reference(params, x1, x2):
    x1 = x1.astype(jnp.float32)
    x2 = x2.astype(jnp.float32)
    x1 = _upsample_x2_align_corners_ref(x1)
    dy = x2.shape[2] - x1.shape[2]
    dx = x2.shape[3] - x1.shape[3]
    x1 = jnp.pad(x1, ((0, 0), (0, 0),
                      (dy // 2, dy - dy // 2), (dx // 2, dx - dx // 2)))
    x = jnp.concatenate([x2, x1], axis=1)

    def block(x, wk, bk, gk, bek):
        y = jax.lax.conv_general_dilated(
            x, params[wk], (1, 1), ((1, 1), (1, 1)),
            dimension_numbers=("NCHW", "OIHW", "NCHW"),
            precision=jax.lax.Precision.HIGHEST)
        y = y + params[bk][None, :, None, None]   # bias (cancelled by the IN below)
        mean = jnp.mean(y, axis=(2, 3), keepdims=True)
        var = jnp.mean(jnp.square(y - mean), axis=(2, 3), keepdims=True)
        y = (y - mean) * jax.lax.rsqrt(var + EPS)
        y = y * params[gk][None, :, None, None] + params[bek][None, :, None, None]
        return jnp.maximum(y, 0.0)

    y = block(x, "w1", "b1", "g1", "beta1")
    y = block(y, "w2", "b2", "g2", "beta2")
    return y


if __name__ == "__main__":
    key = jax.random.PRNGKey(0)
    k_p, k_x1, k_x2 = jax.random.split(key, 3)

    # Up(in_channels=8, out_channels=4, bilinear=True):
    #   x1 (decoder feature): (N, 4, 8, 8);  x2 (skip connection): (N, 4, 16, 16)
    #   concat -> 8 channels == DoubleConv in_channels.
    in_channels, out_channels = 8, 4
    x1 = jax.random.normal(k_x1, (2, 4, 8, 8), jnp.float32)
    x2 = jax.random.normal(k_x2, (2, 4, 16, 16), jnp.float32)
    params = init_up_params(k_p, in_channels, out_channels)

    ref = jax.block_until_ready(up_forward_reference(params, x1, x2))

    # f32 path (tight tolerance, catches tap/layout/ordering bugs which are O(1)).
    out32 = jax.block_until_ready(
        up_forward(params, x1, x2, compute_dtype=jnp.float32))
    assert out32.shape == (2, out_channels, 16, 16), out32.shape
    assert bool(jnp.all(jnp.isfinite(out32)))
    err32 = float(jnp.max(jnp.abs(out32 - ref)))
    assert err32 < 5e-4, f"f32 path mismatch vs reference: max abs err = {err32}"

    # bf16 MXU path (looser tolerance accounts only for bf16 operand rounding).
    outbf = jax.block_until_ready(
        up_forward(params, x1, x2, compute_dtype=jnp.bfloat16))
    assert outbf.shape == (2, out_channels, 16, 16), outbf.shape
    errbf = float(jnp.max(jnp.abs(outbf.astype(jnp.float32) - ref)))
    assert errbf < 1e-1, f"bf16 path mismatch vs reference: max abs err = {errbf}"

    print("KERNEL_OK")
</pallas_src>

<mosaic_0001>
module attributes {stable_mosaic.version = 11 : i64} {
  func.func @_up_double_conv_kernel(%arg0: i32, %arg1: memref<1x4x256xf32, #tpu.memory_space<vmem>>, %arg2: memref<1x4x8x8xf32, #tpu.memory_space<vmem>>, %arg3: memref<4x8x16xf32, #tpu.memory_space<vmem>>, %arg4: memref<4x16x8xf32, #tpu.memory_space<vmem>>, %arg5: memref<9x1x256xf32, #tpu.memory_space<vmem>>, %arg6: memref<4x72xf32, #tpu.memory_space<vmem>>, %arg7: memref<4x36xf32, #tpu.memory_space<vmem>>, %arg8: memref<4x1xf32, #tpu.memory_space<vmem>>, %arg9: memref<4x1xf32, #tpu.memory_space<vmem>>, %arg10: memref<4x1xf32, #tpu.memory_space<vmem>>, %arg11: memref<4x1xf32, #tpu.memory_space<vmem>>, %arg12: memref<1x4x256xf32, #tpu.memory_space<vmem>>, %arg13: memref<4x16x16xf32, #tpu.memory_space<vmem>>, %arg14: memref<4x256xf32, #tpu.memory_space<vmem>>, %arg15: memref<72x256xf32, #tpu.memory_space<vmem>>) attributes {dimension_semantics = [#tpu.dimension_semantics<parallel>], iteration_bounds = array<i64: 2>, scalar_prefetch = 0 : i64, scratch_operands = 3 : i64, tpu.core_type = #tpu.core_type<tc>, window_params = [{transform_indices = @transform_0, window_bounds = array<i64: 1, 4, 256>}, {transform_indices = @transform_1, window_bounds = array<i64: 1, 4, 8, 8>}, {pipeline_mode = #tpu.pipeline_mode<synchronous>, transform_indices = @transform_2, window_bounds = array<i64: 4, 8, 16>}, {pipeline_mode = #tpu.pipeline_mode<synchronous>, transform_indices = @transform_3, window_bounds = array<i64: 4, 16, 8>}, {pipeline_mode = #tpu.pipeline_mode<synchronous>, transform_indices = @transform_4, window_bounds = array<i64: 9, 1, 256>}, {pipeline_mode = #tpu.pipeline_mode<synchronous>, transform_indices = @transform_5, window_bounds = array<i64: 4, 72>}, {pipeline_mode = #tpu.pipeline_mode<synchronous>, transform_indices = @transform_6, window_bounds = array<i64: 4, 36>}, {pipeline_mode = #tpu.pipeline_mode<synchronous>, transform_indices = @transform_7, window_bounds = array<i64: 4, 1>}, {pipeline_mode = #tpu.pipeline_mode<synchronous>, transform_indices = @transform_8, window_bounds = array<i64: 4, 1>}, {pipeline_mode = #tpu.pipeline_mode<synchronous>, transform_indices = @transform_9, window_bounds = array<i64: 4, 1>}, {pipeline_mode = #tpu.pipeline_mode<synchronous>, transform_indices = @transform_10, window_bounds = array<i64: 4, 1>}, {transform_indices = @transform_11, window_bounds = array<i64: 1, 4, 256>}]} {
    %c0 = arith.constant 0 : index
    %c0_0 = arith.constant 0 : index
    %c0_1 = arith.constant 0 : index
    %0 = vector.load %arg5[%c0, %c0_0, %c0_1] : memref<9x1x256xf32, #tpu.memory_space<vmem>>, vector<1x1x256xf32>
    %1 = vector.shape_cast %0 : vector<1x1x256xf32> to vector<1x256xf32>
    %c1 = arith.constant 1 : index
    %c0_2 = arith.constant 0 : index
    %c0_3 = arith.constant 0 : index
    %2 = vector.load %arg5[%c1, %c0_2, %c0_3] : memref<9x1x256xf32, #tpu.memory_space<vmem>>, vector<1x1x256xf32>
    %3 = vector.shape_cast %2 : vector<1x1x256xf32> to vector<1x256xf32>
    %c2 = arith.constant 2 : index
    %c0_4 = arith.constant 0 : index
    %c0_5 = arith.constant 0 : index
    %4 = vector.load %arg5[%c2, %c0_4, %c0_5] : memref<9x1x256xf32, #tpu.memory_space<vmem>>, vector<1x1x256xf32>
    %5 = vector.shape_cast %4 : vector<1x1x256xf32> to vector<1x256xf32>
    %c3 = arith.constant 3 : index
    %c0_6 = arith.constant 0 : index
    %c0_7 = arith.constant 0 : index
    %6 = vector.load %arg5[%c3, %c0_6, %c0_7] : memref<9x1x256xf32, #tpu.memory_space<vmem>>, vector<1x1x256xf32>
    %7 = vector.shape_cast %6 : vector<1x1x256xf32> to vector<1x256xf32>
    %c5 = arith.constant 5 : index
    %c0_8 = arith.constant 0 : index
    %c0_9 = arith.constant 0 : index
    %8 = vector.load %arg5[%c5, %c0_8, %c0_9] : memref<9x1x256xf32, #tpu.memory_space<vmem>>, vector<1x1x256xf32>
    %9 = vector.shape_cast %8 : vector<1x1x256xf32> to vector<1x256xf32>
    %c6 = arith.constant 6 : index
    %c0_10 = arith.constant 0 : index
    %c0_11 = arith.constant 0 : index
    %10 = vector.load %arg5[%c6, %c0_10, %c0_11] : memref<9x1x256xf32, #tpu.memory_space<vmem>>, vector<1x1x256xf32>
    %11 = vector.shape_cast %10 : vector<1x1x256xf32> to vector<1x256xf32>
    %c7 = arith.constant 7 : index
    %c0_12 = arith.constant 0 : index
    %c0_13 = arith.constant 0 : index
    %12 = vector.load %arg5[%c7, %c0_12, %c0_13] : memref<9x1x256xf32, #tpu.memory_space<vmem>>, vector<1x1x256xf32>
    %13 = vector.shape_cast %12 : vector<1x1x256xf32> to vector<1x256xf32>
    %c8 = arith.constant 8 : index
    %c0_14 = arith.constant 0 : index
    %c0_15 = arith.constant 0 : index
    %14 = vector.load %arg5[%c8, %c0_14, %c0_15] : memref<9x1x256xf32, #tpu.memory_space<vmem>>, vector<1x1x256xf32>
    %15 = vector.shape_cast %14 : vector<1x1x256xf32> to vector<1x256xf32>
    %c0_16 = arith.constant 0 : index
    %c0_17 = arith.constant 0 : index
    %c0_18 = arith.constant 0 : index
    %c0_19 = arith.constant 0 : index
    %16 = vector.load %arg2[%c0_16, %c0_17, %c0_18, %c0_19] : memref<1x4x8x8xf32, #tpu.memory_space<vmem>>, vector<1x4x8x8xf32>
    %17 = vector.shape_cast %16 : vector<1x4x8x8xf32> to vector<4x8x8xf32>
    %c0_20 = arith.constant 0 : index
    %c0_21 = arith.constant 0 : index
    %c0_22 = arith.constant 0 : index
    %18 = vector.load %arg3[%c0_20, %c0_21, %c0_22] : memref<4x8x16xf32, #tpu.memory_space<vmem>>, vector<4x8x16xf32>
    %cst = arith.constant dense<0.000000e+00> : vector<4x8x16xf32>
    %19 = tpu.matmul %17, %18, %cst {dimension_numbers = #tpu.dot_dimension_numbers<[2], [1], [1], [2], [0, 0, 0, 1, 1, 2], [0], [0]>, precision = #tpu.contract_precision<fp32>} : vector<4x8x8xf32>, vector<4x8x16xf32>, vector<4x8x16xf32> -> vector<4x8x16xf32>
    %c0_23 = arith.constant 0 : index
    %c0_24 = arith.constant 0 : index
    %c0_25 = arith.constant 0 : index
    %20 = vector.load %arg4[%c0_23, %c0_24, %c0_25] : memref<4x16x8xf32, #tpu.memory_space<vmem>>, vector<4x16x8xf32>
    %cst_26 = arith.constant dense<0.000000e+00> : vector<4x16x16xf32>
    %21 = tpu.matmul %20, %19, %cst_26 {dimension_numbers = #tpu.dot_dimension_numbers<[2], [1], [1], [2], [0, 0, 0, 1, 1, 2], [0], [0]>, precision = #tpu.contract_precision<fp32>} : vector<4x16x8xf32>, vector<4x8x16xf32>, vector<4x16x16xf32> -> vector<4x16x16xf32>
    %c0_27 = arith.constant 0 : index
    %c0_28 = arith.constant 0 : index
    %c0_29 = arith.constant 0 : index
    %22 = vector.load %arg13[%c0_27, %c0_28, %c0_29] : memref<4x16x16xf32, #tpu.memory_space<vmem>>, vector<4x16x16xf32>
    tpu.vector_store %arg13[%c0_27, %c0_28, %c0_29], %21 {strides = array<i32>} : memref<4x16x16xf32, #tpu.memory_space<vmem>>, vector<4x16x16xf32>,
    %c0_30 = arith.constant 0 : index
    %c0_31 = arith.constant 0 : index
    %c0_32 = arith.constant 0 : index
    %23 = vector.load %arg13[%c0_30, %c0_31, %c0_32] : memref<4x16x16xf32, #tpu.memory_space<vmem>>, vector<4x1x16xf32>
    %24 = vector.shape_cast %23 : vector<4x1x16xf32> to vector<4x16xf32>
    %c0_33 = arith.constant 0 : index
    %c0_34 = arith.constant 0 : index
    %25 = vector.load %arg14[%c0_33, %c0_34] : memref<4x256xf32, #tpu.memory_space<vmem>>, vector<4x16xf32>
    tpu.vector_store %arg14[%c0_33, %c0_34], %24 {strides = array<i32>} : memref<4x256xf32, #tpu.memory_space<vmem>>, vector<4x16xf32>,
    %c0_35 = arith.constant 0 : index
    %c1_36 = arith.constant 1 : index
    %c0_37 = arith.constant 0 : index
    %26 = vector.load %arg13[%c0_35, %c1_36, %c0_37] : memref<4x16x16xf32, #tpu.memory_space<vmem>>, vector<4x1x16xf32>
    %27 = vector.shape_cast %26 : vector<4x1x16xf32> to vector<4x16xf32>
    %c0_38 = arith.constant 0 : index
    %c16 = arith.constant 16 : index
    %28 = vector.load %arg14[%c0_38, %c16] : memref<4x256xf32, #tpu.memory_space<vmem>>, vector<4x16xf32>
    tpu.vector_store %arg14[%c0_38, %c16], %27 {strides = array<i32>} : memref<4x256xf32, #tpu.memory_space<vmem>>, vector<4x16xf32>,
    %c0_39 = arith.constant 0 : index
    %c2_40 = arith.constant 2 : index
    %c0_41 = arith.constant 0 : index
    %29 = vector.load %arg13[%c0_39, %c2_40, %c0_41] : memref<4x16x16xf32, #tpu.memory_space<vmem>>, vector<4x1x16xf32>
    %30 = vector.shape_cast %29 : vector<4x1x16xf32> to vector<4x16xf32>
    %c0_42 = arith.constant 0 : index
    %c32 = arith.constant 32 : index
    %31 = vector.load %arg14[%c0_42, %c32] : memref<4x256xf32, #tpu.memory_space<vmem>>, vector<4x16xf32>
    tpu.vector_store %arg14[%c0_42, %c32], %30 {strides = array<i32>} : memref<4x256xf32, #tpu.memory_space<vmem>>, vector<4x16xf32>,
    %c0_43 = arith.constant 0 : index
    %c3_44 = arith.constant 3 : index
    %c0_45 = arith.constant 0 : index
    %32 = vector.load %arg13[%c0_43, %c3_44, %c0_45] : memref<4x16x16xf32, #tpu.memory_space<vmem>>, vector<4x1x16xf32>
    %33 = vector.shape_cast %32 : vector<4x1x16xf32> to vector<4x16xf32>
    %c0_46 = arith.constant 0 : index
    %c48 = arith.constant 48 : index
    %34 = vector.load %arg14[%c0_46, %c48] : memref<4x256xf32, #tpu.memory_space<vmem>>, vector<4x16xf32>
    tpu.vector_store %arg14[%c0_46, %c48], %33 {strides = array<i32>} : memref<4x256xf32, #tpu.memory_space<vmem>>, vector<4x16xf32>,
    %c0_47 = arith.constant 0 : index
    %c4 = arith.constant 4 : index
    %c0_48 = arith.constant 0 : index
    %35 = vector.load %arg13[%c0_47, %c4, %c0_48] : memref<4x16x16xf32, #tpu.memory_space<vmem>>, vector<4x1x16xf32>
    %36 = vector.shape_cast %35 : vector<4x1x16xf32> to vector<4x16xf32>
    %c0_49 = arith.constant 0 : index
    %c64 = arith.constant 64 : index
    %37 = vector.load %arg14[%c0_49, %c64] : memref<4x256xf32, #tpu.memory_space<vmem>>, vector<4x16xf32>
    tpu.vector_store %arg14[%c0_49, %c64], %36 {strides = array<i32>} : memref<4x256xf32, #tpu.memory_space<vmem>>, vector<4x16xf32>,
    %c0_50 = arith.constant 0 : index
    %c5_51 = arith.constant 5 : index
    %c0_52 = arith.constant 0 : index
    %38 = vector.load %arg13[%c0_50, %c5_51, %c0_52] : memref<4x16x16xf32, #tpu.memory_space<vmem>>, vector<4x1x16xf32>
    %39 = vector.shape_cast %38 : vector<4x1x16xf32> to vector<4x16xf32>
    %c0_53 = arith.constant 0 : index
    %c80 = arith.constant 80 : index
    %40 = vector.load %arg14[%c0_53, %c80] : memref<4x256xf32, #tpu.memory_space<vmem>>, vector<4x16xf32>
    tpu.vector_store %arg14[%c0_53, %c80], %39 {strides = array<i32>} : memref<4x256xf32, #tpu.memory_space<vmem>>, vector<4x16xf32>,
    %c0_54 = arith.constant 0 : index
    %c6_55 = arith.constant 6 : index
    %c0_56 = arith.constant 0 : index
    %41 = vector.load %arg13[%c0_54, %c6_55, %c0_56] : memref<4x16x16xf32, #tpu.memory_space<vmem>>, vector<4x1x16xf32>
    %42 = vector.shape_cast %41 : vector<4x1x16xf32> to vector<4x16xf32>
    %c0_57 = arith.constant 0 : index
    %c96 = arith.constant 96 : index
    %43 = vector.load %arg14[%c0_57, %c96] : memref<4x256xf32, #tpu.memory_space<vmem>>, vector<4x16xf32>
    tpu.vector_store %arg14[%c0_57, %c96], %42 {strides = array<i32>} : memref<4x256xf32, #tpu.memory_space<vmem>>, vector<4x16xf32>,
    %c0_58 = arith.constant 0 : index
    %c7_59 = arith.constant 7 : index
    %c0_60 = arith.constant 0 : index
    %44 = vector.load %arg13[%c0_58, %c7_59, %c0_60] : memref<4x16x16xf32, #tpu.memory_space<vmem>>, vector<4x1x16xf32>
    %45 = vector.shape_cast %44 : vector<4x1x16xf32> to vector<4x16xf32>
    %c0_61 = arith.constant 0 : index
    %c112 = arith.constant 112 : index
    %46 = vector.load %arg14[%c0_61, %c112] : memref<4x256xf32, #tpu.memory_space<vmem>>, vector<4x16xf32>
    tpu.vector_store %arg14[%c0_61, %c112], %45 {strides = array<i32>} : memref<4x256xf32, #tpu.memory_space<vmem>>, vector<4x16xf32>,
    %c0_62 = arith.constant 0 : index
    %c8_63 = arith.constant 8 : index
    %c0_64 = arith.constant 0 : index
    %47 = vector.load %arg13[%c0_62, %c8_63, %c0_64] : memref<4x16x16xf32, #tpu.memory_space<vmem>>, vector<4x1x16xf32>
    %48 = vector.shape_cast %47 : vector<4x1x16xf32> to vector<4x16xf32>
    %c0_65 = arith.constant 0 : index
    %c128 = arith.constant 128 : index
    %49 = vector.load %arg14[%c0_65, %c128] : memref<4x256xf32, #tpu.memory_space<vmem>>, vector<4x16xf32>
    tpu.vector_store %arg14[%c0_65, %c128], %48 {strides = array<i32>} : memref<4x256xf32, #tpu.memory_space<vmem>>, vector<4x16xf32>,
    %c0_66 = arith.constant 0 : index
    %c9 = arith.constant 9 : index
    %c0_67 = arith.constant 0 : index
    %50 = vector.load %arg13[%c0_66, %c9, %c0_67] : memref<4x16x16xf32, #tpu.memory_space<vmem>>, vector<4x1x16xf32>
    %51 = vector.shape_cast %50 : vector<4x1x16xf32> to vector<4x16xf32>
    %c0_68 = arith.constant 0 : index
    %c144 = arith.constant 144 : index
    %52 = vector.load %arg14[%c0_68, %c144] : memref<4x256xf32, #tpu.memory_space<vmem>>, vector<4x16xf32>
    tpu.vector_store %arg14[%c0_68, %c144], %51 {strides = array<i32>} : memref<4x256xf32, #tpu.memory_space<vmem>>, vector<4x16xf32>,
    %c0_69 = arith.constant 0 : index
    %c10 = arith.constant 10 : index
    %c0_70 = arith.constant 0 : index
    %53 = vector.load %arg13[%c0_69, %c10, %c0_70] : memref<4x16x16xf32, #tpu.memory_space<vmem>>, vector<4x1x16xf32>
    %54 = vector.shape_cast %53 : vector<4x1x16xf32> to vector<4x16xf32>
    %c0_71 = arith.constant 0 : index
    %c160 = arith.constant 160 : index
    %55 = vector.load %arg14[%c0_71, %c160] : memref<4x256xf32, #tpu.memory_space<vmem>>, vector<4x16xf32>
    tpu.vector_store %arg14[%c0_71, %c160], %54 {strides = array<i32>} : memref<4x256xf32, #tpu.memory_space<vmem>>, vector<4x16xf32>,
    %c0_72 = arith.constant 0 : index
    %c11 = arith.constant 11 : index
    %c0_73 = arith.constant 0 : index
    %56 = vector.load %arg13[%c0_72, %c11, %c0_73] : memref<4x16x16xf32, #tpu.memory_space<vmem>>, vector<4x1x16xf32>
    %57 = vector.shape_cast %56 : vector<4x1x16xf32> to vector<4x16xf32>
    %c0_74 = arith.constant 0 : index
    %c176 = arith.constant 176 : index
    %58 = vector.load %arg14[%c0_74, %c176] : memref<4x256xf32, #tpu.memory_space<vmem>>, vector<4x16xf32>
    tpu.vector_store %arg14[%c0_74, %c176], %57 {strides = array<i32>} : memref<4x256xf32, #tpu.memory_space<vmem>>, vector<4x16xf32>,
    %c0_75 = arith.constant 0 : index
    %c12 = arith.constant 12 : index
    %c0_76 = arith.constant 0 : index
    %59 = vector.load %arg13[%c0_75, %c12, %c0_76] : memref<4x16x16xf32, #tpu.memory_space<vmem>>, vector<4x1x16xf32>
    %60 = vector.shape_cast %59 : vector<4x1x16xf32> to vector<4x16xf32>
    %c0_77 = arith.constant 0 : index
    %c192 = arith.constant 192 : index
    %61 = vector.load %arg14[%c0_77, %c192] : memref<4x256xf32, #tpu.memory_space<vmem>>, vector<4x16xf32>
    tpu.vector_store %arg14[%c0_77, %c192], %60 {strides = array<i32>} : memref<4x256xf32, #tpu.memory_space<vmem>>, vector<4x16xf32>,
    %c0_78 = arith.constant 0 : index
    %c13 = arith.constant 13 : index
    %c0_79 = arith.constant 0 : index
    %62 = vector.load %arg13[%c0_78, %c13, %c0_79] : memref<4x16x16xf32, #tpu.memory_space<vmem>>, vector<4x1x16xf32>
    %63 = vector.shape_cast %62 : vector<4x1x16xf32> to vector<4x16xf32>
    %c0_80 = arith.constant 0 : index
    %c208 = arith.constant 208 : index
    %64 = vector.load %arg14[%c0_80, %c208] : memref<4x256xf32, #tpu.memory_space<vmem>>, vector<4x16xf32>
    tpu.vector_store %arg14[%c0_80, %c208], %63 {strides = array<i32>} : memref<4x256xf32, #tpu.memory_space<vmem>>, vector<4x16xf32>,
    %c0_81 = arith.constant 0 : index
    %c14 = arith.constant 14 : index
    %c0_82 = arith.constant 0 : index
    %65 = vector.load %arg13[%c0_81, %c14, %c0_82] : memref<4x16x16xf32, #tpu.memory_space<vmem>>, vector<4x1x16xf32>
    %66 = vector.shape_cast %65 : vector<4x1x16xf32> to vector<4x16xf32>
    %c0_83 = arith.constant 0 : index
    %c224 = arith.constant 224 : index
    %67 = vector.load %arg14[%c0_83, %c224] : memref<4x256xf32, #tpu.memory_space<vmem>>, vector<4x16xf32>
    tpu.vector_store %arg14[%c0_83, %c224], %66 {strides = array<i32>} : memref<4x256xf32, #tpu.memory_space<vmem>>, vector<4x16xf32>,
    %c0_84 = arith.constant 0 : index
    %c15 = arith.constant 15 : index
    %c0_85 = arith.constant 0 : index
    %68 = vector.load %arg13[%c0_84, %c15, %c0_85] : memref<4x16x16xf32, #tpu.memory_space<vmem>>, vector<4x1x16xf32>
    %69 = vector.shape_cast %68 : vector<4x1x16xf32> to vector<4x16xf32>
    %c0_86 = arith.constant 0 : index
    %c240 = arith.constant 240 : index
    %70 = vector.load %arg14[%c0_86, %c240] : memref<4x256xf32, #tpu.memory_space<vmem>>, vector<4x16xf32>
    tpu.vector_store %arg14[%c0_86, %c240], %69 {strides = array<i32>} : memref<4x256xf32, #tpu.memory_space<vmem>>, vector<4x16xf32>,
    %c0_87 = arith.constant 0 : index
    %c0_88 = arith.constant 0 : index
    %71 = vector.load %arg14[%c0_87, %c0_88] : memref<4x256xf32, #tpu.memory_space<vmem>>, vector<4x256xf32>
    %c0_89 = arith.constant 0 : index
    %c0_90 = arith.constant 0 : index
    %c0_91 = arith.constant 0 : index
    %72 = vector.load %arg1[%c0_89, %c0_90, %c0_91] : memref<1x4x256xf32, #tpu.memory_space<vmem>>, vector<1x4x256xf32>
    %73 = vector.shape_cast %72 : vector<1x4x256xf32> to vector<4x256xf32>
    %c17_i32 = arith.constant 17 : i32
    %74 = tpu.dynamic_rotate %73 by %c17_i32 dim 1 : vector<4x256xf32>, i32 -> vector<4x256xf32>
    %75 = vector.broadcast %1 : vector<1x256xf32> to vector<4x256xf32>
    %76 = arith.mulf %74, %75 : vector<4x256xf32>
    %c0_92 = arith.constant 0 : index
    %c0_93 = arith.constant 0 : index
    %77 = vector.load %arg15[%c0_92, %c0_93] : memref<72x256xf32, #tpu.memory_space<vmem>>, vector<4x256xf32>
    tpu.vector_store %arg15[%c0_92, %c0_93], %76 {strides = array<i32>} : memref<72x256xf32, #tpu.memory_space<vmem>>, vector<4x256xf32>,
    %c16_i32 = arith.constant 16 : i32
    %78 = tpu.dynamic_rotate %73 by %c16_i32 dim 1 : vector<4x256xf32>, i32 -> vector<4x256xf32>
    %79 = vector.broadcast %3 : vector<1x256xf32> to vector<4x256xf32>
    %80 = arith.mulf %78, %79 : vector<4x256xf32>
    %c8_94 = arith.constant 8 : index
    %c0_95 = arith.constant 0 : index
    %81 = vector.load %arg15[%c8_94, %c0_95] : memref<72x256xf32, #tpu.memory_space<vmem>>, vector<4x256xf32>
    tpu.vector_store %arg15[%c8_94, %c0_95], %80 {strides = array<i32>} : memref<72x256xf32, #tpu.memory_space<vmem>>, vector<4x256xf32>,
    %c15_i32 = arith.constant 15 : i32
    %82 = tpu.dynamic_rotate %73 by %c15_i32 dim 1 : vector<4x256xf32>, i32 -> vector<4x256xf32>
    %83 = vector.broadcast %5 : vector<1x256xf32> to vector<4x256xf32>
    %84 = arith.mulf %82, %83 : vector<4x256xf32>
    %c16_96 = arith.constant 16 : index
    %c0_97 = arith.constant 0 : index
    %85 = vector.load %arg15[%c16_96, %c0_97] : memref<72x256xf32, #tpu.memory_space<vmem>>, vector<4x256xf32>
    tpu.vector_store %arg15[%c16_96, %c0_97], %84 {strides = array<i32>} : memref<72x256xf32, #tpu.memory_space<vmem>>, vector<4x256xf32>,
    %c1_i32 = arith.constant 1 : i32
    %86 = tpu.dynamic_rotate %73 by %c1_i32 dim 1 : vector<4x256xf32>, i32 -> vector<4x256xf32>
    %87 = vector.broadcast %7 : vector<1x256xf32> to vector<4x256xf32>
    %88 = arith.mulf %86, %87 : vector<4x256xf32>
    %c24 = arith.constant 24 : index
    %c0_98 = arith.constant 0 : index
    %89 = vector.load %arg15[%c24, %c0_98] : memref<72x256xf32, #tpu.memory_space<vmem>>, vector<4x256xf32>
    tpu.vector_store %arg15[%c24, %c0_98], %88 {strides = array<i32>} : memref<72x256xf32, #tpu.memory_space<vmem>>, vector<4x256xf32>,
    %c32_99 = arith.constant 32 : index
    %c0_100 = arith.constant 0 : index
    %90 = vector.load %arg15[%c32_99, %c0_100] : memref<72x256xf32, #tpu.memory_space<vmem>>, vector<4x256xf32>
    tpu.vector_store %arg15[%c32_99, %c0_100], %73 {strides = array<i32>} : memref<72x256xf32, #tpu.memory_space<vmem>>, vector<4x256xf32>,
    %c255_i32 = arith.constant 255 : i32
    %91 = tpu.dynamic_rotate %73 by %c255_i32 dim 1 : vector<4x256xf32>, i32 -> vector<4x256xf32>
    %92 = vector.broadcast %9 : vector<1x256xf32> to vector<4x256xf32>
    %93 = arith.mulf %91, %92 : vector<4x256xf32>
    %c40 = arith.constant 40 : index
    %c0_101 = arith.constant 0 : index
    %94 = vector.load %arg15[%c40, %c0_101] : memref<72x256xf32, #tpu.memory_space<vmem>>, vector<4x256xf32>
    tpu.vector_store %arg15[%c40, %c0_101], %93 {strides = array<i32>} : memref<72x256xf32, #tpu.memory_space<vmem>>, vector<4x256xf32>,
    %c241_i32 = arith.constant 241 : i32
    %95 = tpu.dynamic_rotate %73 by %c241_i32 dim 1 : vector<4x256xf32>, i32 -> vector<4x256xf32>
    %96 = vector.broadcast %11 : vector<1x256xf32> to vector<4x256xf32>
    %97 = arith.mulf %95, %96 : vector<4x256xf32>
    %c48_102 = arith.constant 48 : index
    %c0_103 = arith.constant 0 : index
    %98 = vector.load %arg15[%c48_102, %c0_103] : memref<72x256xf32, #tpu.memory_space<vmem>>, vector<4x256xf32>
    tpu.vector_store %arg15[%c48_102, %c0_103], %97 {strides = array<i32>} : memref<72x256xf32, #tpu.memory_space<vmem>>, vector<4x256xf32>,
    %c240_i32 = arith.constant 240 : i32
    %99 = tpu.dynamic_rotate %73 by %c240_i32 dim 1 : vector<4x256xf32>, i32 -> vector<4x256xf32>
    %100 = vector.broadcast %13 : vector<1x256xf32> to vector<4x256xf32>
    %101 = arith.mulf %99, %100 : vector<4x256xf32>
    %c56 = arith.constant 56 : index
    %c0_104 = arith.constant 0 : index
    %102 = vector.load %arg15[%c56, %c0_104] : memref<72x256xf32, #tpu.memory_space<vmem>>, vector<4x256xf32>
    tpu.vector_store %arg15[%c56, %c0_104], %101 {strides = array<i32>} : memref<72x256xf32, #tpu.memory_space<vmem>>, vector<4x256xf32>,
    %c239_i32 = arith.constant 239 : i32
    %103 = tpu.dynamic_rotate %73 by %c239_i32 dim 1 : vector<4x256xf32>, i32 -> vector<4x256xf32>
    %104 = vector.broadcast %15 : vector<1x256xf32> to vector<4x256xf32>
    %105 = arith.mulf %103, %104 : vector<4x256xf32>
    %c64_105 = arith.constant 64 : index
    %c0_106 = arith.constant 0 : index
    %106 = vector.load %arg15[%c64_105, %c0_106] : memref<72x256xf32, #tpu.memory_space<vmem>>, vector<4x256xf32>
    tpu.vector_store %arg15[%c64_105, %c0_106], %105 {strides = array<i32>} : memref<72x256xf32, #tpu.memory_space<vmem>>, vector<4x256xf32>,
    %c17_i32_107 = arith.constant 17 : i32
    %107 = tpu.dynamic_rotate %71 by %c17_i32_107 dim 1 : vector<4x256xf32>, i32 -> vector<4x256xf32>
    %108 = vector.broadcast %1 : vector<1x256xf32> to vector<4x256xf32>
    %109 = arith.mulf %107, %108 : vector<4x256xf32>
    %c4_108 = arith.constant 4 : index
    %c0_109 = arith.constant 0 : index
    %110 = vector.load %arg15[%c4_108, %c0_109] : memref<72x256xf32, #tpu.memory_space<vmem>>, vector<4x256xf32>
    tpu.vector_store %arg15[%c4_108, %c0_109], %109 {strides = array<i32>} : memref<72x256xf32, #tpu.memory_space<vmem>>, vector<4x256xf32>,
    %c16_i32_110 = arith.constant 16 : i32
    %111 = tpu.dynamic_rotate %71 by %c16_i32_110 dim 1 : vector<4x256xf32>, i32 -> vector<4x256xf32>
    %112 = vector.broadcast %3 : vector<1x256xf32> to vector<4x256xf32>
    %113 = arith.mulf %111, %112 : vector<4x256xf32>
    %c12_111 = arith.constant 12 : index
    %c0_112 = arith.constant 0 : index
    %114 = vector.load %arg15[%c12_111, %c0_112] : memref<72x256xf32, #tpu.memory_space<vmem>>, vector<4x256xf32>
    tpu.vector_store %arg15[%c12_111, %c0_112], %113 {strides = array<i32>} : memref<72x256xf32, #tpu.memory_space<vmem>>, vector<4x256xf32>,
    %c15_i32_113 = arith.constant 15 : i32
    %115 = tpu.dynamic_rotate %71 by %c15_i32_113 dim 1 : vector<4x256xf32>, i32 -> vector<4x256xf32>
    %116 = vector.broadcast %5 : vector<1x256xf32> to vector<4x256xf32>
    %117 = arith.mulf %115, %116 : vector<4x256xf32>
    %c20 = arith.constant 20 : index
    %c0_114 = arith.constant 0 : index
    %118 = vector.load %arg15[%c20, %c0_114] : memref<72x256xf32, #tpu.memory_space<vmem>>, vector<4x256xf32>
    tpu.vector_store %arg15[%c20, %c0_114], %117 {strides = array<i32>} : memref<72x256xf32, #tpu.memory_space<vmem>>, vector<4x256xf32>,
    %c1_i32_115 = arith.constant 1 : i32
    %119 = tpu.dynamic_rotate %71 by %c1_i32_115 dim 1 : vector<4x256xf32>, i32 -> vector<4x256xf32>
    %120 = vector.broadcast %7 : vector<1x256xf32> to vector<4x256xf32>
    %121 = arith.mulf %119, %120 : vector<4x256xf32>
    %c28 = arith.constant 28 : index
    %c0_116 = arith.constant 0 : index
    %122 = vector.load %arg15[%c28, %c0_116] : memref<72x256xf32, #tpu.memory_space<vmem>>, vector<4x256xf32>
    tpu.vector_store %arg15[%c28, %c0_116], %121 {strides = array<i32>} : memref<72x256xf32, #tpu.memory_space<vmem>>, vector<4x256xf32>,
    %c36 = arith.constant 36 : index
    %c0_117 = arith.constant 0 : index
    %123 = vector.load %arg15[%c36, %c0_117] : memref<72x256xf32, #tpu.memory_space<vmem>>, vector<4x256xf32>
    tpu.vector_store %arg15[%c36, %c0_117], %71 {strides = array<i32>} : memref<72x256xf32, #tpu.memory_space<vmem>>, vector<4x256xf32>,
    %c255_i32_118 = arith.constant 255 : i32
    %124 = tpu.dynamic_rotate %71 by %c255_i32_118 dim 1 : vector<4x256xf32>, i32 -> vector<4x256xf32>
    %125 = vector.broadcast %9 : vector<1x256xf32> to vector<4x256xf32>
    %126 = arith.mulf %124, %125 : vector<4x256xf32>
    %c44 = arith.constant 44 : index
    %c0_119 = arith.constant 0 : index
    %127 = vector.load %arg15[%c44, %c0_119] : memref<72x256xf32, #tpu.memory_space<vmem>>, vector<4x256xf32>
    tpu.vector_store %arg15[%c44, %c0_119], %126 {strides = array<i32>} : memref<72x256xf32, #tpu.memory_space<vmem>>, vector<4x256xf32>,
    %c241_i32_120 = arith.constant 241 : i32
    %128 = tpu.dynamic_rotate %71 by %c241_i32_120 dim 1 : vector<4x256xf32>, i32 -> vector<4x256xf32>
    %129 = vector.broadcast %11 : vector<1x256xf32> to vector<4x256xf32>
    %130 = arith.mulf %128, %129 : vector<4x256xf32>
    %c52 = arith.constant 52 : index
    %c0_121 = arith.constant 0 : index
    %131 = vector.load %arg15[%c52, %c0_121] : memref<72x256xf32, #tpu.memory_space<vmem>>, vector<4x256xf32>
    tpu.vector_store %arg15[%c52, %c0_121], %130 {strides = array<i32>} : memref<72x256xf32, #tpu.memory_space<vmem>>, vector<4x256xf32>,
    %c240_i32_122 = arith.constant 240 : i32
    %132 = tpu.dynamic_rotate %71 by %c240_i32_122 dim 1 : vector<4x256xf32>, i32 -> vector<4x256xf32>
    %133 = vector.broadcast %13 : vector<1x256xf32> to vector<4x256xf32>
    %134 = arith.mulf %132, %133 : vector<4x256xf32>
    %c60 = arith.constant 60 : index
    %c0_123 = arith.constant 0 : index
    %135 = vector.load %arg15[%c60, %c0_123] : memref<72x256xf32, #tpu.memory_space<vmem>>, vector<4x256xf32>
    tpu.vector_store %arg15[%c60, %c0_123], %134 {strides = array<i32>} : memref<72x256xf32, #tpu.memory_space<vmem>>, vector<4x256xf32>,
    %c239_i32_124 = arith.constant 239 : i32
    %136 = tpu.dynamic_rotate %71 by %c239_i32_124 dim 1 : vector<4x256xf32>, i32 -> vector<4x256xf32>
    %137 = vector.broadcast %15 : vector<1x256xf32> to vector<4x256xf32>
    %138 = arith.mulf %136, %137 : vector<4x256xf32>
    %c68 = arith.constant 68 : index
    %c0_125 = arith.constant 0 : index
    %139 = vector.load %arg15[%c68, %c0_125] : memref<72x256xf32, #tpu.memory_space<vmem>>, vector<4x256xf32>
    tpu.vector_store %arg15[%c68, %c0_125], %138 {strides = array<i32>} : memref<72x256xf32, #tpu.memory_space<vmem>>, vector<4x256xf32>,
    %c0_126 = arith.constant 0 : index
    %c0_127 = arith.constant 0 : index
    %140 = vector.load %arg6[%c0_126, %c0_127] : memref<4x72xf32, #tpu.memory_space<vmem>>, vector<4x72xf32>
    %c0_128 = arith.constant 0 : index
    %c0_129 = arith.constant 0 : index
    %141 = vector.load %arg15[%c0_128, %c0_129] : memref<72x256xf32, #tpu.memory_space<vmem>>, vector<72x256xf32>
    %cst_130 = arith.constant dense<0.000000e+00> : vector<4x256xf32>
    %142 = tpu.matmul %140, %141, %cst_130 {dimension_numbers = #tpu.dot_dimension_numbers<[1], [0], [0], [1], [0, 0, 1, 1], [], []>, precision = #tpu.contract_precision<fp32>} : vector<4x72xf32>, vector<72x256xf32>, vector<4x256xf32> -> vector<4x256xf32>
    %cst_131 = arith.constant dense<0.000000e+00> : vector<4xf32>
    %143 = vector.multi_reduction <add>, %142, %cst_131 [1] : vector<4x256xf32> to vector<4xf32>
    %144 = vector.shape_cast %143 : vector<4xf32> to vector<4x1xf32>
    %cst_132 = arith.constant 2.560000e+02 : f32
    %145 = vector.broadcast %cst_132 : f32 to vector<4x1xf32>
    %146 = arith.divf %144, %145 : vector<4x1xf32>
    %147 = arith.mulf %142, %142 : vector<4x256xf32>
    %cst_133 = arith.constant dense<0.000000e+00> : vector<4xf32>
    %148 = vector.multi_reduction <add>, %147, %cst_133 [1] : vector<4x256xf32> to vector<4xf32>
    %149 = vector.shape_cast %148 : vector<4xf32> to vector<4x1xf32>
    %cst_134 = arith.constant 2.560000e+02 : f32
    %150 = vector.broadcast %cst_134 : f32 to vector<4x1xf32>
    %151 = arith.divf %149, %150 : vector<4x1xf32>
    %152 = arith.mulf %146, %146 : vector<4x1xf32>
    %153 = arith.subf %151, %152 : vector<4x1xf32>
    %c0_135 = arith.constant 0 : index
    %c0_136 = arith.constant 0 : index
    %154 = vector.load %arg8[%c0_135, %c0_136] : memref<4x1xf32, #tpu.memory_space<vmem>>, vector<4x1xf32>
    %cst_137 = arith.constant 9.99999974E-6 : f32
    %155 = vector.broadcast %cst_137 : f32 to vector<4x1xf32>
    %156 = arith.addf %153, %155 : vector<4x1xf32>
    %157 = math.rsqrt %156 : vector<4x1xf32>
    %158 = arith.mulf %154, %157 : vector<4x1xf32>
    %c0_138 = arith.constant 0 : index
    %c0_139 = arith.constant 0 : index
    %159 = vector.load %arg9[%c0_138, %c0_139] : memref<4x1xf32, #tpu.memory_space<vmem>>, vector<4x1xf32>
    %160 = arith.mulf %146, %158 : vector<4x1xf32>
    %161 = arith.subf %159, %160 : vector<4x1xf32>
    %162 = vector.broadcast %158 : vector<4x1xf32> to vector<4x256xf32>
    %163 = arith.mulf %142, %162 : vector<4x256xf32>
    %164 = vector.broadcast %161 : vector<4x1xf32> to vector<4x256xf32>
    %165 = arith.addf %163, %164 : vector<4x256xf32>
    %cst_140 = arith.constant 0.000000e+00 : f32
    %166 = vector.broadcast %cst_140 : f32 to vector<4x256xf32>
    %167 = arith.maximumf %165, %166 : vector<4x256xf32>
    %c17_i32_141 = arith.constant 17 : i32
    %168 = tpu.dynamic_rotate %167 by %c17_i32_141 dim 1 : vector<4x256xf32>, i32 -> vector<4x256xf32>
    %169 = vector.broadcast %1 : vector<1x256xf32> to vector<4x256xf32>
    %170 = arith.mulf %168, %169 : vector<4x256xf32>
    %c0_142 = arith.constant 0 : index
    %c0_143 = arith.constant 0 : index
    %171 = vector.load %arg15[%c0_142, %c0_143] : memref<72x256xf32, #tpu.memory_space<vmem>>, vector<4x256xf32>
    tpu.vector_store %arg15[%c0_142, %c0_143], %170 {strides = array<i32>} : memref<72x256xf32, #tpu.memory_space<vmem>>, vector<4x256xf32>,
    %c16_i32_144 = arith.constant 16 : i32
    %172 = tpu.dynamic_rotate %167 by %c16_i32_144 dim 1 : vector<4x256xf32>, i32 -> vector<4x256xf32>
    %173 = vector.broadcast %3 : vector<1x256xf32> to vector<4x256xf32>
    %174 = arith.mulf %172, %173 : vector<4x256xf32>
    %c4_145 = arith.constant 4 : index
    %c0_146 = arith.constant 0 : index
    %175 = vector.load %arg15[%c4_145, %c0_146] : memref<72x256xf32, #tpu.memory_space<vmem>>, vector<4x256xf32>
    tpu.vector_store %arg15[%c4_145, %c0_146], %174 {strides = array<i32>} : memref<72x256xf32, #tpu.memory_space<vmem>>, vector<4x256xf32>,
    %c15_i32_147 = arith.constant 15 : i32
    %176 = tpu.dynamic_rotate %167 by %c15_i32_147 dim 1 : vector<4x256xf32>, i32 -> vector<4x256xf32>
    %177 = vector.broadcast %5 : vector<1x256xf32> to vector<4x256xf32>
    %178 = arith.mulf %176, %177 : vector<4x256xf32>
    %c8_148 = arith.constant 8 : index
    %c0_149 = arith.constant 0 : index
    %179 = vector.load %arg15[%c8_148, %c0_149] : memref<72x256xf32, #tpu.memory_space<vmem>>, vector<4x256xf32>
    tpu.vector_store %arg15[%c8_148, %c0_149], %178 {strides = array<i32>} : memref<72x256xf32, #tpu.memory_space<vmem>>, vector<4x256xf32>,
    %c1_i32_150 = arith.constant 1 : i32
    %180 = tpu.dynamic_rotate %167 by %c1_i32_150 dim 1 : vector<4x256xf32>, i32 -> vector<4x256xf32>
    %181 = vector.broadcast %7 : vector<1x256xf32> to vector<4x256xf32>
    %182 = arith.mulf %180, %181 : vector<4x256xf32>
    %c12_151 = arith.constant 12 : index
    %c0_152 = arith.constant 0 : index
    %183 = vector.load %arg15[%c12_151, %c0_152] : memref<72x256xf32, #tpu.memory_space<vmem>>, vector<4x256xf32>
    tpu.vector_store %arg15[%c12_151, %c0_152], %182 {strides = array<i32>} : memref<72x256xf32, #tpu.memory_space<vmem>>, vector<4x256xf32>,
    %c16_153 = arith.constant 16 : index
    %c0_154 = arith.constant 0 : index
    %184 = vector.load %arg15[%c16_153, %c0_154] : memref<72x256xf32, #tpu.memory_space<vmem>>, vector<4x256xf32>
    tpu.vector_store %arg15[%c16_153, %c0_154], %167 {strides = array<i32>} : memref<72x256xf32, #tpu.memory_space<vmem>>, vector<4x256xf32>,
    %c255_i32_155 = arith.constant 255 : i32
    %185 = tpu.dynamic_rotate %167 by %c255_i32_155 dim 1 : vector<4x256xf32>, i32 -> vector<4x256xf32>
    %186 = vector.broadcast %9 : vector<1x256xf32> to vector<4x256xf32>
    %187 = arith.mulf %185, %186 : vector<4x256xf32>
    %c20_156 = arith.constant 20 : index
    %c0_157 = arith.constant 0 : index
    %188 = vector.load %arg15[%c20_156, %c0_157] : memref<72x256xf32, #tpu.memory_space<vmem>>, vector<4x256xf32>
    tpu.vector_store %arg15[%c20_156, %c0_157], %187 {strides = array<i32>} : memref<72x256xf32, #tpu.memory_space<vmem>>, vector<4x256xf32>,
    %c241_i32_158 = arith.constant 241 : i32
    %189 = tpu.dynamic_rotate %167 by %c241_i32_158 dim 1 : vector<4x256xf32>, i32 -> vector<4x256xf32>
    %190 = vector.broadcast %11 : vector<1x256xf32> to vector<4x256xf32>
    %191 = arith.mulf %189, %190 : vector<4x256xf32>
    %c24_159 = arith.constant 24 : index
    %c0_160 = arith.constant 0 : index
    %192 = vector.load %arg15[%c24_159, %c0_160] : memref<72x256xf32, #tpu.memory_space<vmem>>, vector<4x256xf32>
    tpu.vector_store %arg15[%c24_159, %c0_160], %191 {strides = array<i32>} : memref<72x256xf32, #tpu.memory_space<vmem>>, vector<4x256xf32>,
    %c240_i32_161 = arith.constant 240 : i32
    %193 = tpu.dynamic_rotate %167 by %c240_i32_161 dim 1 : vector<4x256xf32>, i32 -> vector<4x256xf32>
    %194 = vector.broadcast %13 : vector<1x256xf32> to vector<4x256xf32>
    %195 = arith.mulf %193, %194 : vector<4x256xf32>
    %c28_162 = arith.constant 28 : index
    %c0_163 = arith.constant 0 : index
    %196 = vector.load %arg15[%c28_162, %c0_163] : memref<72x256xf32, #tpu.memory_space<vmem>>, vector<4x256xf32>
    tpu.vector_store %arg15[%c28_162, %c0_163], %195 {strides = array<i32>} : memref<72x256xf32, #tpu.memory_space<vmem>>, vector<4x256xf32>,
    %c239_i32_164 = arith.constant 239 : i32
    %197 = tpu.dynamic_rotate %167 by %c239_i32_164 dim 1 : vector<4x256xf32>, i32 -> vector<4x256xf32>
    %198 = vector.broadcast %15 : vector<1x256xf32> to vector<4x256xf32>
    %199 = arith.mulf %197, %198 : vector<4x256xf32>
    %c32_165 = arith.constant 32 : index
    %c0_166 = arith.constant 0 : index
    %200 = vector.load %arg15[%c32_165, %c0_166] : memref<72x256xf32, #tpu.memory_space<vmem>>, vector<4x256xf32>
    tpu.vector_store %arg15[%c32_165, %c0_166], %199 {strides = array<i32>} : memref<72x256xf32, #tpu.memory_space<vmem>>, vector<4x256xf32>,
    %c0_167 = arith.constant 0 : index
    %c0_168 = arith.constant 0 : index
    %201 = vector.load %arg7[%c0_167, %c0_168] : memref<4x36xf32, #tpu.memory_space<vmem>>, vector<4x36xf32>
    %c0_169 = arith.constant 0 : index
    %c0_170 = arith.constant 0 : index
    %202 = vector.load %arg15[%c0_169, %c0_170] : memref<72x256xf32, #tpu.memory_space<vmem>>, vector<36x256xf32>
    %cst_171 = arith.constant dense<0.000000e+00> : vector<4x256xf32>
    %203 = tpu.matmul %201, %202, %cst_171 {dimension_numbers = #tpu.dot_dimension_numbers<[1], [0], [0], [1], [0, 0, 1, 1], [], []>, precision = #tpu.contract_precision<fp32>} : vector<4x36xf32>, vector<36x256xf32>, vector<4x256xf32> -> vector<4x256xf32>
    %cst_172 = arith.constant dense<0.000000e+00> : vector<4xf32>
    %204 = vector.multi_reduction <add>, %203, %cst_172 [1] : vector<4x256xf32> to vector<4xf32>
    %205 = vector.shape_cast %204 : vector<4xf32> to vector<4x1xf32>
    %cst_173 = arith.constant 2.560000e+02 : f32
    %206 = vector.broadcast %cst_173 : f32 to vector<4x1xf32>
    %207 = arith.divf %205, %206 : vector<4x1xf32>
    %208 = arith.mulf %203, %203 : vector<4x256xf32>
    %cst_174 = arith.constant dense<0.000000e+00> : vector<4xf32>
    %209 = vector.multi_reduction <add>, %208, %cst_174 [1] : vector<4x256xf32> to vector<4xf32>
    %210 = vector.shape_cast %209 : vector<4xf32> to vector<4x1xf32>
    %cst_175 = arith.constant 2.560000e+02 : f32
    %211 = vector.broadcast %cst_175 : f32 to vector<4x1xf32>
    %212 = arith.divf %210, %211 : vector<4x1xf32>
    %213 = arith.mulf %207, %207 : vector<4x1xf32>
    %214 = arith.subf %212, %213 : vector<4x1xf32>
    %c0_176 = arith.constant 0 : index
    %c0_177 = arith.constant 0 : index
    %215 = vector.load %arg10[%c0_176, %c0_177] : memref<4x1xf32, #tpu.memory_space<vmem>>, vector<4x1xf32>
    %cst_178 = arith.constant 9.99999974E-6 : f32
    %216 = vector.broadcast %cst_178 : f32 to vector<4x1xf32>
    %217 = arith.addf %214, %216 : vector<4x1xf32>
    %218 = math.rsqrt %217 : vector<4x1xf32>
    %219 = arith.mulf %215, %218 : vector<4x1xf32>
    %c0_179 = arith.constant 0 : index
    %c0_180 = arith.constant 0 : index
    %220 = vector.load %arg11[%c0_179, %c0_180] : memref<4x1xf32, #tpu.memory_space<vmem>>, vector<4x1xf32>
    %221 = arith.mulf %207, %219 : vector<4x1xf32>
    %222 = arith.subf %220, %221 : vector<4x1xf32>
    %223 = vector.broadcast %219 : vector<4x1xf32> to vector<4x256xf32>
    %224 = arith.mulf %203, %223 : vector<4x256xf32>
    %225 = vector.broadcast %222 : vector<4x1xf32> to vector<4x256xf32>
    %226 = arith.addf %224, %225 : vector<4x256xf32>
    %cst_181 = arith.constant 0.000000e+00 : f32
    %227 = vector.broadcast %cst_181 : f32 to vector<4x256xf32>
    %228 = arith.maximumf %226, %227 : vector<4x256xf32>
    %c0_182 = arith.constant 0 : index
    %c0_183 = arith.constant 0 : index
    %c0_184 = arith.constant 0 : index
    %229 = vector.load %arg12[%c0_182, %c0_183, %c0_184] : memref<1x4x256xf32, #tpu.memory_space<vmem>>, vector<1x4x256xf32>
    %230 = vector.shape_cast %229 : vector<1x4x256xf32> to vector<4x256xf32>
    %231 = vector.shape_cast %228 : vector<4x256xf32> to vector<1x4x256xf32>
    tpu.vector_store %arg12[%c0_182, %c0_183, %c0_184], %231 {strides = array<i32>} : memref<1x4x256xf32, #tpu.memory_space<vmem>>, vector<1x4x256xf32>,
    return
  }
  func.func @transform_0(%arg0: i32) -> (i32, i32, i32) {
    %c0_i32 = arith.constant 0 : i32
    %c0_i32_0 = arith.constant 0 : i32
    %c0_i32_1 = arith.constant 0 : i32
    return %arg0, %c0_i32, %c0_i32_0 : i32, i32, i32
  }
  func.func @transform_1(%arg0: i32) -> (i32, i32, i32, i32) {
    %c0_i32 = arith.constant 0 : i32
    %c0_i32_0 = arith.constant 0 : i32
    %c0_i32_1 = arith.constant 0 : i32
    %c0_i32_2 = arith.constant 0 : i32
    return %arg0, %c0_i32, %c0_i32_0, %c0_i32_1 : i32, i32, i32, i32
  }
  func.func @transform_2(%arg0: i32) -> (i32, i32, i32) {
    %c0_i32 = arith.constant 0 : i32
    %c0_i32_0 = arith.constant 0 : i32
    %c0_i32_1 = arith.constant 0 : i32
    %c0_i32_2 = arith.constant 0 : i32
    return %c0_i32, %c0_i32_0, %c0_i32_1 : i32, i32, i32
  }
  func.func @transform_3(%arg0: i32) -> (i32, i32, i32) {
    %c0_i32 = arith.constant 0 : i32
    %c0_i32_0 = arith.constant 0 : i32
    %c0_i32_1 = arith.constant 0 : i32
    %c0_i32_2 = arith.constant 0 : i32
    return %c0_i32, %c0_i32_0, %c0_i32_1 : i32, i32, i32
  }
  func.func @transform_4(%arg0: i32) -> (i32, i32, i32) {
    %c0_i32 = arith.constant 0 : i32
    %c0_i32_0 = arith.constant 0 : i32
    %c0_i32_1 = arith.constant 0 : i32
    %c0_i32_2 = arith.constant 0 : i32
    return %c0_i32, %c0_i32_0, %c0_i32_1 : i32, i32, i32
  }
  func.func @transform_5(%arg0: i32) -> (i32, i32) {
    %c0_i32 = arith.constant 0 : i32
    %c0_i32_0 = arith.constant 0 : i32
    %c0_i32_1 = arith.constant 0 : i32
    return %c0_i32, %c0_i32_0 : i32, i32
  }
  func.func @transform_6(%arg0: i32) -> (i32, i32) {
    %c0_i32 = arith.constant 0 : i32
    %c0_i32_0 = arith.constant 0 : i32
    %c0_i32_1 = arith.constant 0 : i32
    return %c0_i32, %c0_i32_0 : i32, i32
  }
  func.func @transform_7(%arg0: i32) -> (i32, i32) {
    %c0_i32 = arith.constant 0 : i32
    %c0_i32_0 = arith.constant 0 : i32
    %c0_i32_1 = arith.constant 0 : i32
    return %c0_i32, %c0_i32_0 : i32, i32
  }
  func.func @transform_8(%arg0: i32) -> (i32, i32) {
    %c0_i32 = arith.constant 0 : i32
    %c0_i32_0 = arith.constant 0 : i32
    %c0_i32_1 = arith.constant 0 : i32
    return %c0_i32, %c0_i32_0 : i32, i32
  }
  func.func @transform_9(%arg0: i32) -> (i32, i32) {
    %c0_i32 = arith.constant 0 : i32
    %c0_i32_0 = arith.constant 0 : i32
    %c0_i32_1 = arith.constant 0 : i32
    return %c0_i32, %c0_i32_0 : i32, i32
  }
  func.func @transform_10(%arg0: i32) -> (i32, i32) {
    %c0_i32 = arith.constant 0 : i32
    %c0_i32_0 = arith.constant 0 : i32
    %c0_i32_1 = arith.constant 0 : i32
    return %c0_i32, %c0_i32_0 : i32, i32
  }
  func.func @transform_11(%arg0: i32) -> (i32, i32, i32) {
    %c0_i32 = arith.constant 0 : i32
    %c0_i32_0 = arith.constant 0 : i32
    %c0_i32_1 = arith.constant 0 : i32
    return %arg0, %c0_i32, %c0_i32_0 : i32, i32, i32
  }
}

</mosaic_0001>

<llo_original>
// kernel: up_forward.1
$region0: #{up_forward.1}
  #allocation0 [shape = 'u32[]', space=smem, size = 0x4, offset = 0x4, fixed_abs, tag = 'smem constant byte address 0x4 - core index']
  #allocation1 [shape = 'u32[72,128]{1,0:T(1,128)}', space=vmem, size = 0x9000, scoped, tag = 'internal scratch']
  #allocation2 [shape = 'f32[4,16,16]{2,1,0:T(8,128)}', space=vmem, size = 0x8000, scoped, tag = 'scratch operand']
  #allocation3 [shape = 'f32[4,256]{1,0:T(4,128)}', space=vmem, size = 0x1000, scoped, tag = 'scratch operand']
  #allocation4 [shape = 'f32[72,256]{1,0:T(8,128)}', space=vmem, size = 0x12000, scoped, tag = 'scratch operand']
  %s0 = inlined_call_operand.vmem [shape: f32[2,4,256], index: 0, kind: input, shape index: {}]
  %s1 = inlined_call_operand.vmem [shape: f32[2,4,8,8], index: 1, kind: input, shape index: {}]
  %s2 = inlined_call_operand.vmem [shape: f32[4,8,16], index: 2, kind: input, shape index: {}]
  %s3 = inlined_call_operand.vmem [shape: f32[4,16,8], index: 3, kind: input, shape index: {}]
  %s4 = inlined_call_operand.vmem [shape: f32[9,1,256], index: 4, kind: input, shape index: {}]
  %s5 = inlined_call_operand.vmem [shape: f32[4,72], index: 5, kind: input, shape index: {}]
  %s6 = inlined_call_operand.vmem [shape: f32[4,36], index: 6, kind: input, shape index: {}]
  %s7 = inlined_call_operand.vmem [shape: f32[4,1], index: 7, kind: input, shape index: {}]
  %s8 = inlined_call_operand.vmem [shape: f32[4,1], index: 8, kind: input, shape index: {}]
  %s9 = inlined_call_operand.vmem [shape: f32[4,1], index: 9, kind: input, shape index: {}]
  %s10 = inlined_call_operand.vmem [shape: f32[4,1], index: 10, kind: input, shape index: {}]
  %s11 = inlined_call_operand.vmem [shape: f32[2,4,256], index: 11, kind: output, shape index: {}]
  %s12 = sld [smem:[#allocation0]]
  $region77: #{up_forward.1} parent=0
    _
  %s14 = ssub.s32 1, %s12
  %s15 = scalar_select 0, %s14, %s12
  loop: start=0, step=1, limit=4
  $region2: #{up_forward.1} parent=0 // loop_pre_header
    _
  $region3: #{up_forward.1} parent=0 // loop_header
    %s17 = sphi 0, %s21
    %p18 = scmp.ge.s32.totalorder %s17, 4
    %s27 = sphi 0, %s29
    %s30 = sphi 0, %s27
    %s31 = sphi 0, %s30
    %s47 = sphi 0, %s31
    %s53 = sphi 0, %s55
    %s56 = sphi 0, %s53
    %s57 = sphi 0, %s56
    %s73 = sphi 0, %s57
    %s77 = sphi 0, %s77
    %s79 = sphi 0, %s77
    %s80 = sphi 0, %s79
    %s94 = sphi 0, %s80
    %s98 = sphi 0, %s98
    %s100 = sphi 0, %s98
    %s101 = sphi 0, %s100
    %s115 = sphi 0, %s101
    %s119 = sphi 0, %s119
    %s121 = sphi 0, %s119
    %s122 = sphi 0, %s121
    %s136 = sphi 0, %s122
    %s140 = sphi 0, %s140
    %s142 = sphi 0, %s140
    %s143 = sphi 0, %s142
    %s157 = sphi 0, %s143
    %s161 = sphi 0, %s161
    %s163 = sphi 0, %s161
    %s164 = sphi 0, %s163
    %s178 = sphi 0, %s164
    %s182 = sphi 0, %s182
    %s184 = sphi 0, %s182
    %s185 = sphi 0, %s184
    %s199 = sphi 0, %s185
    %s203 = sphi 0, %s203
    %s205 = sphi 0, %s203
    %s206 = sphi 0, %s205
    %s220 = sphi 0, %s206
    %s224 = sphi 0, %s224
    %s226 = sphi 0, %s224
    %s227 = sphi 0, %s226
    %s241 = sphi 0, %s227
    %s245 = sphi 0, %s245
    %s247 = sphi 0, %s245
    %s248 = sphi 0, %s247
    %s262 = sphi 0, %s248
    %s268 = sphi 0, %s270
    %s271 = sphi 0, %s268
    %s272 = sphi 0, %s271
    %s288 = sphi 0, %s272
  $region4: #{up_forward.1} parent=0 // loop_header_branch
    %20 = sbr.rel (%p18) target = $region8
  $region5: #{up_forward.1} parent=0 // loop_body
    %s22 = ssub.s32 %s17, 1
    %s23 = ssub.s32 %s17, 2
    %s24 = sadd.s32 %s17, 1
    %s25 = ssub.s32 %s17, %s24
    %p26 = scmp.eq.s32.totalorder %s25, 0
    %s28 = sadd.s32 %s27, 1
    %s29 = scalar_select %p26, %s27, %s28
    %p32 = pneg %p26
    %p33 = scmp.eq.s32.totalorder %s17, 1
    %p34 = por %p32, %p33
    %p35 = scmp.ne.s32.totalorder %s27, %s30
    %p36 = scmp.eq.s32.totalorder %s17, 0
    %p37 = por %p35, %p36
    %p38 = scmp.ne.s32.totalorder %s27, %s30
    %p39 = scmp.eq.s32.totalorder %s22, 1
    %p40 = por %p38, %p39
    %p41 = scmp.ne.s32.totalorder %s30, %s31
    %p42 = scmp.eq.s32.totalorder %s22, 0
    %p43 = por %p41, %p42
    %p44 = scmp.ne.s32.totalorder %s30, %s31
    %p45 = scmp.eq.s32.totalorder %s23, 1
    %p46 = por %p44, %p45
    %p48 = scmp.ne.s32.totalorder %s31, %s47
    %p49 = scmp.eq.s32.totalorder %s23, 0
    %p50 = por %p48, %p49
    %s51 = ssub.s32 %s17, %s24
    %p52 = scmp.eq.s32.totalorder %s51, 0
    %s54 = sadd.s32 %s53, 1
    %s55 = scalar_select %p52, %s53, %s54
    %p58 = pneg %p52
    %p59 = scmp.eq.s32.totalorder %s17, 1
    %p60 = por %p58, %p59
    %p61 = scmp.ne.s32.totalorder %s53, %s56
    %p62 = scmp.eq.s32.totalorder %s17, 0
    %p63 = por %p61, %p62
    %p64 = scmp.ne.s32.totalorder %s53, %s56
    %p65 = scmp.eq.s32.totalorder %s22, 1
    %p66 = por %p64, %p65
    %p67 = scmp.ne.s32.totalorder %s56, %s57
    %p68 = scmp.eq.s32.totalorder %s22, 0
    %p69 = por %p67, %p68
    %p70 = scmp.ne.s32.totalorder %s56, %s57
    %p71 = scmp.eq.s32.totalorder %s23, 1
    %p72 = por %p70, %p71
    %p74 = scmp.ne.s32.totalorder %s57, %s73
    %p75 = scmp.eq.s32.totalorder %s23, 0
    %p76 = por %p74, %p75
    %s78 = sadd.s32 %s77, 1
    %p81 = scmp.eq.s32.totalorder %s17, 1
    %p82 = scmp.ne.s32.totalorder %s77, %s79
    %p83 = scmp.eq.s32.totalorder %s17, 0
    %p84 = por %p82, %p83
    %p85 = scmp.ne.s32.totalorder %s77, %s79
    %p86 = scmp.eq.s32.totalorder %s22, 1
    %p87 = por %p85, %p86
    %p88 = scmp.ne.s32.totalorder %s79, %s80
    %p89 = scmp.eq.s32.totalorder %s22, 0
    %p90 = por %p88, %p89
    %p91 = scmp.ne.s32.totalorder %s79, %s80
    %p92 = scmp.eq.s32.totalorder %s23, 1
    %p93 = por %p91, %p92
    %p95 = scmp.ne.s32.totalorder %s80, %s94
    %p96 = scmp.eq.s32.totalorder %s23, 0
    %p97 = por %p95, %p96
    %s99 = sadd.s32 %s98, 1
    %p102 = scmp.eq.s32.totalorder %s17, 1
    %p103 = scmp.ne.s32.totalorder %s98, %s100
    %p104 = scmp.eq.s32.totalorder %s17, 0
    %p105 = por %p103, %p104
    %p106 = scmp.ne.s32.totalorder %s98, %s100
    %p107 = scmp.eq.s32.totalorder %s22, 1
    %p108 = por %p106, %p107
    %p109 = scmp.ne.s32.totalorder %s100, %s101
    %p110 = scmp.eq.s32.totalorder %s22, 0
    %p111 = por %p109, %p110
    %p112 = scmp.ne.s32.totalorder %s100, %s101
    %p113 = scmp.eq.s32.totalorder %s23, 1
    %p114 = por %p112, %p113
    %p116 = scmp.ne.s32.totalorder %s101, %s115
    %p117 = scmp.eq.s32.totalorder %s23, 0
    %p118 = por %p116, %p117
    %s120 = sadd.s32 %s119, 1
    %p123 = scmp.eq.s32.totalorder %s17, 1
    %p124 = scmp.ne.s32.totalorder %s119, %s121
    %p125 = scmp.eq.s32.totalorder %s17, 0
    %p126 = por %p124, %p125
    %p127 = scmp.ne.s32.totalorder %s119, %s121
    %p128 = scmp.eq.s32.totalorder %s22, 1
    %p129 = por %p127, %p128
    %p130 = scmp.ne.s32.totalorder %s121, %s122
    %p131 = scmp.eq.s32.totalorder %s22, 0
    %p132 = por %p130, %p131
    %p133 = scmp.ne.s32.totalorder %s121, %s122
    %p134 = scmp.eq.s32.totalorder %s23, 1
    %p135 = por %p133, %p134
    %p137 = scmp.ne.s32.totalorder %s122, %s136
    %p138 = scmp.eq.s32.totalorder %s23, 0
    %p139 = por %p137, %p138
    %s141 = sadd.s32 %s140, 1
    %p144 = scmp.eq.s32.totalorder %s17, 1
    %p145 = scmp.ne.s32.totalorder %s140, %s142
    %p146 = scmp.eq.s32.totalorder %s17, 0
    %p147 = por %p145, %p146
    %p148 = scmp.ne.s32.totalorder %s140, %s142
    %p149 = scmp.eq.s32.totalorder %s22, 1
    %p150 = por %p148, %p149
    %p151 = scmp.ne.s32.totalorder %s142, %s143
    %p152 = scmp.eq.s32.totalorder %s22, 0
    %p153 = por %p151, %p152
    %p154 = scmp.ne.s32.totalorder %s142, %s143
    %p155 = scmp.eq.s32.totalorder %s23, 1
    %p156 = por %p154, %p155
    %p158 = scmp.ne.s32.totalorder %s143, %s157
    %p159 = scmp.eq.s32.totalorder %s23, 0
    %p160 = por %p158, %p159
    %s162 = sadd.s32 %s161, 1
    %p165 = scmp.eq.s32.totalorder %s17, 1
    %p166 = scmp.ne.s32.totalorder %s161, %s163
    %p167 = scmp.eq.s32.totalorder %s17, 0
    %p168 = por %p166, %p167
    %p169 = scmp.ne.s32.totalorder %s161, %s163
    %p170 = scmp.eq.s32.totalorder %s22, 1
    %p171 = por %p169, %p170
    %p172 = scmp.ne.s32.totalorder %s163, %s164
    %p173 = scmp.eq.s32.totalorder %s22, 0
    %p174 = por %p172, %p173
    %p175 = scmp.ne.s32.totalorder %s163, %s164
    %p176 = scmp.eq.s32.totalorder %s23, 1
    %p177 = por %p175, %p176
    %p179 = scmp.ne.s32.totalorder %s164, %s178
    %p180 = scmp.eq.s32.totalorder %s23, 0
    %p181 = por %p179, %p180
    %s183 = sadd.s32 %s182, 1
    %p186 = scmp.eq.s32.totalorder %s17, 1
    %p187 = scmp.ne.s32.totalorder %s182, %s184
    %p188 = scmp.eq.s32.totalorder %s17, 0
    %p189 = por %p187, %p188
    %p190 = scmp.ne.s32.totalorder %s182, %s184
    %p191 = scmp.eq.s32.totalorder %s22, 1
    %p192 = por %p190, %p191
    %p193 = scmp.ne.s32.totalorder %s184, %s185
    %p194 = scmp.eq.s32.totalorder %s22, 0
    %p195 = por %p193, %p194
    %p196 = scmp.ne.s32.totalorder %s184, %s185
    %p197 = scmp.eq.s32.totalorder %s23, 1
    %p198 = por %p196, %p197
    %p200 = scmp.ne.s32.totalorder %s185, %s199
    %p201 = scmp.eq.s32.totalorder %s23, 0
    %p202 = por %p200, %p201
    %s204 = sadd.s32 %s203, 1
    %p207 = scmp.eq.s32.totalorder %s17, 1
    %p208 = scmp.ne.s32.totalorder %s203, %s205
    %p209 = scmp.eq.s32.totalorder %s17, 0
    %p210 = por %p208, %p209
    %p211 = scmp.ne.s32.totalorder %s203, %s205
    %p212 = scmp.eq.s32.totalorder %s22, 1
    %p213 = por %p211, %p212
    %p214 = scmp.ne.s32.totalorder %s205, %s206
    %p215 = scmp.eq.s32.totalorder %s22, 0
    %p216 = por %p214, %p215
    %p217 = scmp.ne.s32.totalorder %s205, %s206
    %p218 = scmp.eq.s32.totalorder %s23, 1
    %p219 = por %p217, %p218
    %p221 = scmp.ne.s32.totalorder %s206, %s220
    %p222 = scmp.eq.s32.totalorder %s23, 0
    %p223 = por %p221, %p222
    %s225 = sadd.s32 %s224, 1
    %p228 = scmp.eq.s32.totalorder %s17, 1
    %p229 = scmp.ne.s32.totalorder %s224, %s226
    %p230 = scmp.eq.s32.totalorder %s17, 0
    %p231 = por %p229, %p230
    %p232 = scmp.ne.s32.totalorder %s224, %s226
    %p233 = scmp.eq.s32.totalorder %s22, 1
    %p234 = por %p232, %p233
    %p235 = scmp.ne.s32.totalorder %s226, %s227
    %p236 = scmp.eq.s32.totalorder %s22, 0
    %p237 = por %p235, %p236
    %p238 = scmp.ne.s32.totalorder %s226, %s227
    %p239 = scmp.eq.s32.totalorder %s23, 1
    %p240 = por %p238, %p239
    %p242 = scmp.ne.s32.totalorder %s227, %s241
    %p243 = scmp.eq.s32.totalorder %s23, 0
    %p244 = por %p242, %p243
    %s246 = sadd.s32 %s245, 1
    %p249 = scmp.eq.s32.totalorder %s17, 1
    %p250 = scmp.ne.s32.totalorder %s245, %s247
    %p251 = scmp.eq.s32.totalorder %s17, 0
    %p252 = por %p250, %p251
    %p253 = scmp.ne.s32.totalorder %s245, %s247
    %p254 = scmp.eq.s32.totalorder %s22, 1
    %p255 = por %p253, %p254
    %p256 = scmp.ne.s32.totalorder %s247, %s248
    %p257 = scmp.eq.s32.totalorder %s22, 0
    %p258 = por %p256, %p257
    %p259 = scmp.ne.s32.totalorder %s247, %s248
    %p260 = scmp.eq.s32.totalorder %s23, 1
    %p261 = por %p259, %p260
    %p263 = scmp.ne.s32.totalorder %s248, %s262
    %p264 = scmp.eq.s32.totalorder %s23, 0
    %p265 = por %p263, %p264
    %s266 = ssub.s32 %s17, %s24
    %p267 = scmp.eq.s32.totalorder %s266, 0
    %s269 = sadd.s32 %s268, 1
    %s270 = scalar_select %p267, %s268, %s269
    %p273 = pneg %p267
    %p274 = scmp.eq.s32.totalorder %s17, 1
    %p275 = por %p273, %p274
    %p276 = scmp.ne.s32.totalorder %s268, %s271
    %p277 = scmp.eq.s32.totalorder %s17, 0
    %p278 = por %p276, %p277
    %p279 = scmp.ne.s32.totalorder %s268, %s271
    %p280 = scmp.eq.s32.totalorder %s22, 1
    %p281 = por %p279, %p280
    %p282 = scmp.ne.s32.totalorder %s271, %s272
    %p283 = scmp.eq.s32.totalorder %s22, 0
    %p284 = por %p282, %p283
    %p285 = scmp.ne.s32.totalorder %s271, %s272
    %p286 = scmp.eq.s32.totalorder %s23, 1
    %p287 = por %p285, %p286
    %p289 = scmp.ne.s32.totalorder %s272, %s288
    %p290 = scmp.eq.s32.totalorder %s23, 0
    %p291 = por %p289, %p290
    %p292 = scmp.le.s32.totalorder 1, %s17
    %p293 = scmp.lt.s32.totalorder %s17, 3
    %p294 = pnand %p292, %p293
    %p295 = pneg %p294
    // Predicated region
    $region9: #{up_forward.1} parent=5 // pred_check
      _
    $region10: #{up_forward.1} parent=5 // pred_check_branch
      %297 = sbr.rel (%p294) target = $region12
    $region11: #{up_forward.1} parent=5 // pred_region
      %s298 = ssub.s32 %s17, 1
      // Predicated region
      $region13: #{up_forward.1} parent=11 // pred_check
        %p299 = pneg %p90
      $region14: #{up_forward.1} parent=11 // pred_check_branch
        %301 = sbr.rel (%p299) target = $region16
      $region15: #{up_forward.1} parent=11 // pred_region
        _
      $region16: #{up_forward.1} parent=11 // pred_fallthru
        _
      // Predicated region
      $region17: #{up_forward.1} parent=11 // pred_check
        %p302 = pneg %p111
      $region18: #{up_forward.1} parent=11 // pred_check_branch
        %304 = sbr.rel (%p302) target = $region20
      $region19: #{up_forward.1} parent=11 // pred_region
        _
      $region20: #{up_forward.1} parent=11 // pred_fallthru
        _
      // Predicated region
      $region21: #{up_forward.1} parent=11 // pred_check
        %p305 = pneg %p132
      $region22: #{up_forward.1} parent=11 // pred_check_branch
        %307 = sbr.rel (%p305) target = $region24
      $region23: #{up_forward.1} parent=11 // pred_region
        _
      $region24: #{up_forward.1} parent=11 // pred_fallthru
        _
      // Predicated region
      $region25: #{up_forward.1} parent=11 // pred_check
        %p308 = pneg %p153
      $region26: #{up_forward.1} parent=11 // pred_check_branch
        %310 = sbr.rel (%p308) target = $region28
      $region27: #{up_forward.1} parent=11 // pred_region
        _
      $region28: #{up_forward.1} parent=11 // pred_fallthru
        _
      // Predicated region
      $region29: #{up_forward.1} parent=11 // pred_check
        %p311 = pneg %p174
      $region30: #{up_forward.1} parent=11 // pred_check_branch
        %313 = sbr.rel (%p311) target = $region32
      $region31: #{up_forward.1} parent=11 // pred_region
        _
      $region32: #{up_forward.1} parent=11 // pred_fallthru
        _
      // Predicated region
      $region33: #{up_forward.1} parent=11 // pred_check
        %p314 = pneg %p195
      $region34: #{up_forward.1} parent=11 // pred_check_branch
        %316 = sbr.rel (%p314) target = $region36
      $region35: #{up_forward.1} parent=11 // pred_region
        _
      $region36: #{up_forward.1} parent=11 // pred_fallthru
        _
      // Predicated region
      $region37: #{up_forward.1} parent=11 // pred_check
        %p317 = pneg %p216
      $region38: #{up_forward.1} parent=11 // pred_check_branch
        %319 = sbr.rel (%p317) target = $region40
      $region39: #{up_forward.1} parent=11 // pred_region
        _
      $region40: #{up_forward.1} parent=11 // pred_fallthru
        _
      // Predicated region
      $region41: #{up_forward.1} parent=11 // pred_check
        %p320 = pneg %p237
      $region42: #{up_forward.1} parent=11 // pred_check_branch
        %322 = sbr.rel (%p320) target = $region44
      $region43: #{up_forward.1} parent=11 // pred_region
        _
      $region44: #{up_forward.1} parent=11 // pred_fallthru
        _
      // Predicated region
      $region45: #{up_forward.1} parent=11 // pred_check
        %p323 = pneg %p258
      $region46: #{up_forward.1} parent=11 // pred_check_branch
        %325 = sbr.rel (%p323) target = $region48
      $region47: #{up_forward.1} parent=11 // pred_region
        _
      $region48: #{up_forward.1} parent=11 // pred_fallthru
        _
    $region12: #{up_forward.1} parent=5 // pred_fallthru
      _
    %p326 = scmp.lt.s32.totalorder %s17, 2
    // Predicated region
    $region49: #{up_forward.1} parent=5 // pred_check
      %p327 = pneg %p326
    $region50: #{up_forward.1} parent=5 // pred_check_branch
      %329 = sbr.rel (%p327) target = $region52
    $region51: #{up_forward.1} parent=5 // pred_region
      // Predicated region
      $region53: #{up_forward.1} parent=51 // pred_check
        %p330 = pneg %p37
      $region54: #{up_forward.1} parent=51 // pred_check_branch
        %332 = sbr.rel (%p330) target = $region56
      $region55: #{up_forward.1} parent=51 // pred_region
        %p333 = scmp.lt.s32.totalorder %s17, 1
        %s334 = scalar_select %p333, %s17, 1
        %s335 = smul.addr %s334, 2
        %s336 = smul.addr %s335, 4
        %s337 = scalar_lea.vmem %s0, %s336
      $region56: #{up_forward.1} parent=51 // pred_fallthru
        _
      // Predicated region
      $region57: #{up_forward.1} parent=51 // pred_check
        %p338 = pneg %p63
      $region58: #{up_forward.1} parent=51 // pred_check_branch
        %340 = sbr.rel (%p338) target = $region60
      $region59: #{up_forward.1} parent=51 // pred_region
        %p341 = scmp.lt.s32.totalorder %s17, 1
        %s342 = scalar_select %p341, %s17, 1
        %s343 = smul.addr %s342, 4
        %s344 = smul.addr %s343, 8
        %s345 = scalar_lea.vmem %s1, %s344
      $region60: #{up_forward.1} parent=51 // pred_fallthru
        _
    $region52: #{up_forward.1} parent=5 // pred_fallthru
      _
    %p346 = scmp.le.s32.totalorder 1, %s17
    %p347 = scmp.lt.s32.totalorder %s17, 3
    %p348 = pnand %p346, %p347
    %p349 = pneg %p348
    // Predicated region
    $region61: #{up_forward.1} parent=5 // pred_check
      _
    $region62: #{up_forward.1} parent=5 // pred_check_branch
      %351 = sbr.rel (%p348) target = $region64
    $region63: #{up_forward.1} parent=5 // pred_region
      %s352 = ssub.s32 %s17, 1
      %p353 = scmp.lt.s32.totalorder %s22, 1
      %s354 = scalar_select %p353, %s22, 1
      %s355 = smul.addr %s354, 2
      %s356 = smul.addr %s355, 4
      %s357 = scalar_lea.vmem %s0, %s356
      %p358 = pneg %p43
      %p359 = pneg %p40
      %p360 = scmp.lt.s32.totalorder %s22, 1
      %s361 = scalar_select %p360, %s22, 1
      %s362 = smul.addr %s361, 4
      %s363 = smul.addr %s362, 8
      %s364 = scalar_lea.vmem %s1, %s363
      %p365 = pneg %p69
      %p366 = pneg %p66
      %p367 = pneg %p90
      %p368 = pneg %p87
      %p369 = pneg %p111
      %p370 = pneg %p108
      %p371 = pneg %p132
      %p372 = pneg %p129
      %p373 = pneg %p153
      %p374 = pneg %p150
      %p375 = pneg %p174
      %p376 = pneg %p171
      %p377 = pneg %p195
      %p378 = pneg %p192
      %p379 = pneg %p216
      %p380 = pneg %p213
      %p381 = pneg %p237
      %p382 = pneg %p234
      %p383 = pneg %p258
      %p384 = pneg %p255
      %p385 = pneg %p284
      %p386 = pneg %p281
      %p387 = scmp.lt.s32.totalorder %s22, 1
      %s388 = scalar_select %p387, %s22, 1
      %s389 = smul.addr %s388, 2
      %s390 = smul.addr %s389, 4
      %s391 = scalar_lea.vmem %s11, %s390
      %p392 = scmp.lt.s32.totalorder %s22, 1
      %s393 = scalar_select %p392, %s22, 1
      %s394 = smul.addr %s393, 2
      %s395 = smul.addr %s394, 4
      %s396 = scalar_lea.vmem %s0, %s395
      %p397 = scmp.lt.s32.totalorder %s22, 1
      %s398 = scalar_select %p397, %s22, 1
      %s399 = smul.addr %s398, 4
      %s400 = smul.addr %s399, 8
      %s401 = scalar_lea.vmem %s1, %s400
      %p402 = scmp.lt.s32.totalorder %s22, 1
      %s403 = scalar_select %p402, %s22, 1
      %s404 = smul.addr %s403, 2
      %s405 = smul.addr %s404, 4
      %s406 = scalar_lea.vmem %s11, %s405
      %v407 = vld [vmem:[%s4] sm:$0x3]
      %s408 = scalar_lea.vmem %s4, 2
      %v409 = vld [vmem:[%s408] sm:$0x3]
      %s410 = scalar_lea.vmem %s4, 4
      %v411 = vld [vmem:[%s410] sm:$0x3]
      %s412 = scalar_lea.vmem %s4, 6
      %v413 = vld [vmem:[%s412] sm:$0x3]
      %s414 = scalar_lea.vmem %s4, 10
      %v415 = vld [vmem:[%s414] sm:$0x3]
      %s416 = scalar_lea.vmem %s4, 12
      %v417 = vld [vmem:[%s416] sm:$0x3]
      %s418 = scalar_lea.vmem %s4, 14
      %v419 = vld [vmem:[%s418] sm:$0x3]
      %s420 = scalar_lea.vmem %s4, 16
      %v421 = vld [vmem:[%s420] sm:$0x3]
      %v422 = vld [vmem:[%s401] sm:$0xff]
      %v423 = vld [vmem:[%s401 + $0x8] sm:$0xff]
      %v424 = vld [vmem:[%s401 + $0x10] sm:$0xff]
      %v425 = vld [vmem:[%s401 + $0x18] sm:$0xff]
      %v426 = vld [vmem:[%s2] sm:$0xff]
      %v427 = vld [vmem:[%s2 + $0x8] sm:$0xff]
      %v428 = vld [vmem:[%s2 + $0x10] sm:$0xff]
      %v429 = vld [vmem:[%s2 + $0x18] sm:$0xff]
      %vm430 = vcmask 64512
      %v432 = vsel %vm430, %v422, 0
      %434 = vmatpush.msra.mxu0 0.0
      %435 = vmatpush.msra.mxu0 0.0
      %436 = vmatpush.msra.mxu0 0.0
      %437 = vmatpush.msra.mxu0 0.0
      %438 = vmatpush.msra.mxu0 0.0
      %439 = vmatpush.msra.mxu0 0.0
      %440 = vmatpush.msra.mxu0 0.0
      %441 = vmatpush.msra.mxu0 0.0
      %442 = vmatpush.msra.mxu0 0.0
      %443 = vmatpush.msra.mxu0 0.0
      %444 = vmatpush.msra.mxu0 0.0
      %445 = vmatpush.msra.mxu0 0.0
      %446 = vmatpush.msra.mxu0 0.0
      %447 = vmatpush.msra.mxu0 0.0
      %448 = vmatpush.msra.mxu0 0.0
      %v449 = vand.u32 %v426, 4294901760
      %450 = vmatpush.msra.mxu0 %v449
      %v451 = vand.u32 %v432, 4294901760
      %v452 = vsub.f32 %v432, %v451
      %v453 = vand.u32 %v452, 4294901760
      %v454 = vsub.f32 %v452, %v453
      %v455 = vand.u32 %v454, 4294901760
      %456 = vmatmul.f32.gmra.mxu0 %v455
      %v457 = vpop.f32.mrf.mxu0
      %v458 = vadd.f32 0.0, %v457
      %459 = vdwg.mxu0
      %460 = vmatpush.msra.mxu0 0.0
      %461 = vmatpush.msra.mxu0 0.0
      %462 = vmatpush.msra.mxu0 0.0
      %463 = vmatpush.msra.mxu0 0.0
      %464 = vmatpush.msra.mxu0 0.0
      %465 = vmatpush.msra.mxu0 0.0
      %466 = vmatpush.msra.mxu0 0.0
      %467 = vmatpush.msra.mxu0 0.0
      %468 = vmatpush.msra.mxu0 0.0
      %469 = vmatpush.msra.mxu0 0.0
      %470 = vmatpush.msra.mxu0 0.0
      %471 = vmatpush.msra.mxu0 0.0
      %472 = vmatpush.msra.mxu0 0.0
      %473 = vmatpush.msra.mxu0 0.0
      %474 = vmatpush.msra.mxu0 0.0
      %v475 = vand.u32 %v426, 4294901760
      %v476 = vsub.f32 %v426, %v475
      %v477 = vand.u32 %v476, 4294901760
      %v478 = vsub.f32 %v476, %v477
      %v479 = vand.u32 %v478, 4294901760
      %480 = vmatpush.msra.mxu0 %v479
      %v481 = vand.u32 %v432, 4294901760
      %482 = vmatmul.f32.gmra.mxu0 %v481
      %v483 = vpop.f32.mrf.mxu0
      %v484 = vadd.f32 %v458, %v483
      %485 = vdwg.mxu0
      %486 = vmatpush.msra.mxu0 0.0
      %487 = vmatpush.msra.mxu0 0.0
      %488 = vmatpush.msra.mxu0 0.0
      %489 = vmatpush.msra.mxu0 0.0
      %490 = vmatpush.msra.mxu0 0.0
      %491 = vmatpush.msra.mxu0 0.0
      %492 = vmatpush.msra.mxu0 0.0
      %493 = vmatpush.msra.mxu0 0.0
      %494 = vmatpush.msra.mxu0 0.0
      %495 = vmatpush.msra.mxu0 0.0
      %496 = vmatpush.msra.mxu0 0.0
      %497 = vmatpush.msra.mxu0 0.0
      %498 = vmatpush.msra.mxu0 0.0
      %499 = vmatpush.msra.mxu0 0.0
      %500 = vmatpush.msra.mxu0 0.0
      %v501 = vand.u32 %v426, 4294901760
      %v502 = vsub.f32 %v426, %v501
      %503 = vmatpush.msra.mxu0 %v502
      %v504 = vand.u32 %v432, 4294901760
      %v505 = vsub.f32 %v432, %v504
      %506 = vmatmul.f32.gmra.mxu0 %v505
      %v507 = vpop.f32.mrf.mxu0
      %v508 = vadd.f32 %v484, %v507
      %509 = vdwg.mxu0
      %510 = vmatpush.msra.mxu0 0.0
      %511 = vmatpush.msra.mxu0 0.0
      %512 = vmatpush.msra.mxu0 0.0
      %513 = vmatpush.msra.mxu0 0.0
      %514 = vmatpush.msra.mxu0 0.0
      %515 = vmatpush.msra.mxu0 0.0
      %516 = vmatpush.msra.mxu0 0.0
      %517 = vmatpush.msra.mxu0 0.0
      %518 = vmatpush.msra.mxu0 0.0
      %519 = vmatpush.msra.mxu0 0.0
      %520 = vmatpush.msra.mxu0 0.0
      %521 = vmatpush.msra.mxu0 0.0
      %522 = vmatpush.msra.mxu0 0.0
      %523 = vmatpush.msra.mxu0 0.0
      %524 = vmatpush.msra.mxu0 0.0
      %v525 = vand.u32 %v426, 4294901760
      %526 = vmatpush.msra.mxu0 %v525
      %v527 = vand.u32 %v432, 4294901760
      %v528 = vsub.f32 %v432, %v527
      %v529 = vand.u32 %v528, 4294901760
      %530 = vmatmul.f32.gmra.mxu0 %v529
      %v531 = vpop.f32.mrf.mxu0
      %v532 = vadd.f32 %v508, %v531
      %533 = vdwg.mxu0
      %534 = vmatpush.msra.mxu0 0.0
      %535 = vmatpush.msra.mxu0 0.0
      %536 = vmatpush.msra.mxu0 0.0
      %537 = vmatpush.msra.mxu0 0.0
      %538 = vmatpush.msra.mxu0 0.0
      %539 = vmatpush.msra.mxu0 0.0
      %540 = vmatpush.msra.mxu0 0.0
      %541 = vmatpush.msra.mxu0 0.0
      %542 = vmatpush.msra.mxu0 0.0
      %543 = vmatpush.msra.mxu0 0.0
      %544 = vmatpush.msra.mxu0 0.0
      %545 = vmatpush.msra.mxu0 0.0
      %546 = vmatpush.msra.mxu0 0.0
      %547 = vmatpush.msra.mxu0 0.0
      %548 = vmatpush.msra.mxu0 0.0
      %v549 = vand.u32 %v426, 4294901760
      %v550 = vsub.f32 %v426, %v549
      %v551 = vand.u32 %v550, 4294901760
      %552 = vmatpush.msra.mxu0 %v551
      %v553 = vand.u32 %v432, 4294901760
      %554 = vmatmul.f32.gmra.mxu0 %v553
      %v555 = vpop.f32.mrf.mxu0
      %v556 = vadd.f32 %v532, %v555
      %557 = vdwg.mxu0
      %558 = vmatpush.msra.mxu0 0.0
      %559 = vmatpush.msra.mxu0 0.0
      %560 = vmatpush.msra.mxu0 0.0
      %561 = vmatpush.msra.mxu0 0.0
      %562 = vmatpush.msra.mxu0 0.0
      %563 = vmatpush.msra.mxu0 0.0
      %564 = vmatpush.msra.mxu0 0.0
      %565 = vmatpush.msra.mxu0 0.0
      %566 = vmatpush.msra.mxu0 0.0
      %567 = vmatpush.msra.mxu0 0.0
      %568 = vmatpush.msra.mxu0 0.0
      %569 = vmatpush.msra.mxu0 0.0
      %570 = vmatpush.msra.mxu0 0.0
      %571 = vmatpush.msra.mxu0 0.0
      %572 = vmatpush.msra.mxu0 0.0
      %v573 = vand.u32 %v426, 4294901760
      %574 = vmatpush.msra.mxu0 %v573
      %v575 = vand.u32 %v432, 4294901760
      %576 = vmatmul.f32.gmra.mxu0 %v575
      %v577 = vpop.f32.mrf.mxu0
      %v578 = vadd.f32 %v556, %v577
      %579 = vdwg.mxu0
      %v581 = vsel %vm430, %v423, 0
      %583 = vmatpush.msra.mxu0 0.0
      %584 = vmatpush.msra.mxu0 0.0
      %585 = vmatpush.msra.mxu0 0.0
      %586 = vmatpush.msra.mxu0 0.0
      %587 = vmatpush.msra.mxu0 0.0
      %588 = vmatpush.msra.mxu0 0.0
      %589 = vmatpush.msra.mxu0 0.0
      %590 = vmatpush.msra.mxu0 0.0
      %591 = vmatpush.msra.mxu0 0.0
      %592 = vmatpush.msra.mxu0 0.0
      %593 = vmatpush.msra.mxu0 0.0
      %594 = vmatpush.msra.mxu0 0.0
      %595 = vmatpush.msra.mxu0 0.0
      %596 = vmatpush.msra.mxu0 0.0
      %597 = vmatpush.msra.mxu0 0.0
      %v598 = vand.u32 %v427, 4294901760
      %599 = vmatpush.msra.mxu0 %v598
      %v600 = vand.u32 %v581, 4294901760
      %v601 = vsub.f32 %v581, %v600
      %v602 = vand.u32 %v601, 4294901760
      %v603 = vsub.f32 %v601, %v602
      %v604 = vand.u32 %v603, 4294901760
      %605 = vmatmul.f32.gmra.mxu0 %v604
      %v606 = vpop.f32.mrf.mxu0
      %v607 = vadd.f32 0.0, %v606
      %608 = vdwg.mxu0
      %609 = vmatpush.msra.mxu0 0.0
      %610 = vmatpush.msra.mxu0 0.0
      %611 = vmatpush.msra.mxu0 0.0
      %612 = vmatpush.msra.mxu0 0.0
      %613 = vmatpush.msra.mxu0 0.0
      %614 = vmatpush.msra.mxu0 0.0
      %615 = vmatpush.msra.mxu0 0.0
      %616 = vmatpush.msra.mxu0 0.0
      %617 = vmatpush.msra.mxu0 0.0
      %618 = vmatpush.msra.mxu0 0.0
      %619 = vmatpush.msra.mxu0 0.0
      %620 = vmatpush.msra.mxu0 0.0
      %621 = vmatpush.msra.mxu0 0.0
      %622 = vmatpush.msra.mxu0 0.0
      %623 = vmatpush.msra.mxu0 0.0
      %v624 = vand.u32 %v427, 4294901760
      %v625 = vsub.f32 %v427, %v624
      %v626 = vand.u32 %v625, 4294901760
      %v627 = vsub.f32 %v625, %v626
      %v628 = vand.u32 %v627, 4294901760
      %629 = vmatpush.msra.mxu0 %v628
      %v630 = vand.u32 %v581, 4294901760
      %631 = vmatmul.f32.gmra.mxu0 %v630
      %v632 = vpop.f32.mrf.mxu0
      %v633 = vadd.f32 %v607, %v632
      %634 = vdwg.mxu0
      %635 = vmatpush.msra.mxu0 0.0
      %636 = vmatpush.msra.mxu0 0.0
      %637 = vmatpush.msra.mxu0 0.0
      %638 = vmatpush.msra.mxu0 0.0
      %639 = vmatpush.msra.mxu0 0.0
      %640 = vmatpush.msra.mxu0 0.0
      %641 = vmatpush.msra.mxu0 0.0
      %642 = vmatpush.msra.mxu0 0.0
      %643 = vmatpush.msra.mxu0 0.0
      %644 = vmatpush.msra.mxu0 0.0
      %645 = vmatpush.msra.mxu0 0.0
      %646 = vmatpush.msra.mxu0 0.0
      %647 = vmatpush.msra.mxu0 0.0
      %648 = vmatpush.msra.mxu0 0.0
      %649 = vmatpush.msra.mxu0 0.0
      %v650 = vand.u32 %v427, 4294901760
      %v651 = vsub.f32 %v427, %v650
      %652 = vmatpush.msra.mxu0 %v651
      %v653 = vand.u32 %v581, 4294901760
      %v654 = vsub.f32 %v581, %v653
      %655 = vmatmul.f32.gmra.mxu0 %v654
      %v656 = vpop.f32.mrf.mxu0
      %v657 = vadd.f32 %v633, %v656
      %658 = vdwg.mxu0
      %659 = vmatpush.msra.mxu0 0.0
      %660 = vmatpush.msra.mxu0 0.0
      %661 = vmatpush.msra.mxu0 0.0
      %662 = vmatpush.msra.mxu0 0.0
      %663 = vmatpush.msra.mxu0 0.0
      %664 = vmatpush.msra.mxu0 0.0
      %665 = vmatpush.msra.mxu0 0.0
      %666 = vmatpush.msra.mxu0 0.0
      %667 = vmatpush.msra.mxu0 0.0
      %668 = vmatpush.msra.mxu0 0.0
      %669 = vmatpush.msra.mxu0 0.0
      %670 = vmatpush.msra.mxu0 0.0
      %671 = vmatpush.msra.mxu0 0.0
      %672 = vmatpush.msra.mxu0 0.0
      %673 = vmatpush.msra.mxu0 0.0
      %v674 = vand.u32 %v427, 4294901760
      %675 = vmatpush.msra.mxu0 %v674
      %v676 = vand.u32 %v581, 4294901760
      %v677 = vsub.f32 %v581, %v676
      %v678 = vand.u32 %v677, 4294901760
      %679 = vmatmul.f32.gmra.mxu0 %v678
      %v680 = vpop.f32.mrf.mxu0
      %v681 = vadd.f32 %v657, %v680
      %682 = vdwg.mxu0
      %683 = vmatpush.msra.mxu0 0.0
      %684 = vmatpush.msra.mxu0 0.0
      %685 = vmatpush.msra.mxu0 0.0
      %686 = vmatpush.msra.mxu0 0.0
      %687 = vmatpush.msra.mxu0 0.0
      %688 = vmatpush.msra.mxu0 0.0
      %689 = vmatpush.msra.mxu0 0.0
      %690 = vmatpush.msra.mxu0 0.0
      %691 = vmatpush.msra.mxu0 0.0
      %692 = vmatpush.msra.mxu0 0.0
      %693 = vmatpush.msra.mxu0 0.0
      %694 = vmatpush.msra.mxu0 0.0
      %695 = vmatpush.msra.mxu0 0.0
      %696 = vmatpush.msra.mxu0 0.0
      %697 = vmatpush.msra.mxu0 0.0
      %v698 = vand.u32 %v427, 4294901760
      %v699 = vsub.f32 %v427, %v698
      %v700 = vand.u32 %v699, 4294901760
      %701 = vmatpush.msra.mxu0 %v700
      %v702 = vand.u32 %v581, 4294901760
      %703 = vmatmul.f32.gmra.mxu0 %v702
      %v704 = vpop.f32.mrf.mxu0
      %v705 = vadd.f32 %v681, %v704
      %706 = vdwg.mxu0
      %707 = vmatpush.msra.mxu0 0.0
      %708 = vmatpush.msra.mxu0 0.0
      %709 = vmatpush.msra.mxu0 0.0
      %710 = vmatpush.msra.mxu0 0.0
      %711 = vmatpush.msra.mxu0 0.0
      %712 = vmatpush.msra.mxu0 0.0
      %713 = vmatpush.msra.mxu0 0.0
      %714 = vmatpush.msra.mxu0 0.0
      %715 = vmatpush.msra.mxu0 0.0
      %716 = vmatpush.msra.mxu0 0.0
      %717 = vmatpush.msra.mxu0 0.0
      %718 = vmatpush.msra.mxu0 0.0
      %719 = vmatpush.msra.mxu0 0.0
      %720 = vmatpush.msra.mxu0 0.0
      %721 = vmatpush.msra.mxu0 0.0
      %v722 = vand.u32 %v427, 4294901760
      %723 = vmatpush.msra.mxu0 %v722
      %v724 = vand.u32 %v581, 4294901760
      %725 = vmatmul.f32.gmra.mxu0 %v724
      %v726 = vpop.f32.mrf.mxu0
      %v727 = vadd.f32 %v705, %v726
      %728 = vdwg.mxu0
      %v730 = vsel %vm430, %v424, 0
      %732 = vmatpush.msra.mxu0 0.0
      %733 = vmatpush.msra.mxu0 0.0
      %734 = vmatpush.msra.mxu0 0.0
      %735 = vmatpush.msra.mxu0 0.0
      %736 = vmatpush.msra.mxu0 0.0
      %737 = vmatpush.msra.mxu0 0.0
      %738 = vmatpush.msra.mxu0 0.0
      %739 = vmatpush.msra.mxu0 0.0
      %740 = vmatpush.msra.mxu0 0.0
      %741 = vmatpush.msra.mxu0 0.0
      %742 = vmatpush.msra.mxu0 0.0
      %743 = vmatpush.msra.mxu0 0.0
      %744 = vmatpush.msra.mxu0 0.0
      %745 = vmatpush.msra.mxu0 0.0
      %746 = vmatpush.msra.mxu0 0.0
      %v747 = vand.u32 %v428, 4294901760
      %748 = vmatpush.msra.mxu0 %v747
      %v749 = vand.u32 %v730, 4294901760
      %v750 = vsub.f32 %v730, %v749
      %v751 = vand.u32 %v750, 4294901760
      %v752 = vsub.f32 %v750, %v751
      %v753 = vand.u32 %v752, 4294901760
      %754 = vmatmul.f32.gmra.mxu0 %v753
      %v755 = vpop.f32.mrf.mxu0
      %v756 = vadd.f32 0.0, %v755
      %757 = vdwg.mxu0
      %758 = vmatpush.msra.mxu0 0.0
      %759 = vmatpush.msra.mxu0 0.0
      %760 = vmatpush.msra.mxu0 0.0
      %761 = vmatpush.msra.mxu0 0.0
      %762 = vmatpush.msra.mxu0 0.0
      %763 = vmatpush.msra.mxu0 0.0
      %764 = vmatpush.msra.mxu0 0.0
      %765 = vmatpush.msra.mxu0 0.0
      %766 = vmatpush.msra.mxu0 0.0
      %767 = vmatpush.msra.mxu0 0.0
      %768 = vmatpush.msra.mxu0 0.0
      %769 = vmatpush.msra.mxu0 0.0
      %770 = vmatpush.msra.mxu0 0.0
      %771 = vmatpush.msra.mxu0 0.0
      %772 = vmatpush.msra.mxu0 0.0
      %v773 = vand.u32 %v428, 4294901760
      %v774 = vsub.f32 %v428, %v773
      %v775 = vand.u32 %v774, 4294901760
      %v776 = vsub.f32 %v774, %v775
      %v777 = vand.u32 %v776, 4294901760
      %778 = vmatpush.msra.mxu0 %v777
      %v779 = vand.u32 %v730, 4294901760
      %780 = vmatmul.f32.gmra.mxu0 %v779
      %v781 = vpop.f32.mrf.mxu0
      %v782 = vadd.f32 %v756, %v781
      %783 = vdwg.mxu0
      %784 = vmatpush.msra.mxu0 0.0
      %785 = vmatpush.msra.mxu0 0.0
      %786 = vmatpush.msra.mxu0 0.0
      %787 = vmatpush.msra.mxu0 0.0
      %788 = vmatpush.msra.mxu0 0.0
      %789 = vmatpush.msra.mxu0 0.0
      %790 = vmatpush.msra.mxu0 0.0
      %791 = vmatpush.msra.mxu0 0.0
      %792 = vmatpush.msra.mxu0 0.0
      %793 = vmatpush.msra.mxu0 0.0
      %794 = vmatpush.msra.mxu0 0.0
      %795 = vmatpush.msra.mxu0 0.0
      %796 = vmatpush.msra.mxu0 0.0
      %797 = vmatpush.msra.mxu0 0.0
      %798 = vmatpush.msra.mxu0 0.0
      %v799 = vand.u32 %v428, 4294901760
      %v800 = vsub.f32 %v428, %v799
      %801 = vmatpush.msra.mxu0 %v800
      %v802 = vand.u32 %v730, 4294901760
      %v803 = vsub.f32 %v730, %v802
      %804 = vmatmul.f32.gmra.mxu0 %v803
      %v805 = vpop.f32.mrf.mxu0
      %v806 = vadd.f32 %v782, %v805
      %807 = vdwg.mxu0
      %808 = vmatpush.msra.mxu0 0.0
      %809 = vmatpush.msra.mxu0 0.0
      %810 = vmatpush.msra.mxu0 0.0
      %811 = vmatpush.msra.mxu0 0.0
      %812 = vmatpush.msra.mxu0 0.0
      %813 = vmatpush.msra.mxu0 0.0
      %814 = vmatpush.msra.mxu0 0.0
      %815 = vmatpush.msra.mxu0 0.0
      %816 = vmatpush.msra.mxu0 0.0
      %817 = vmatpush.msra.mxu0 0.0
      %818 = vmatpush.msra.mxu0 0.0
      %819 = vmatpush.msra.mxu0 0.0
      %820 = vmatpush.msra.mxu0 0.0
      %821 = vmatpush.msra.mxu0 0.0
      %822 = vmatpush.msra.mxu0 0.0
      %v823 = vand.u32 %v428, 4294901760
      %824 = vmatpush.msra.mxu0 %v823
      %v825 = vand.u32 %v730, 4294901760
      %v826 = vsub.f32 %v730, %v825
      %v827 = vand.u32 %v826, 4294901760
      %828 = vmatmul.f32.gmra.mxu0 %v827
      %v829 = vpop.f32.mrf.mxu0
      %v830 = vadd.f32 %v806, %v829
      %831 = vdwg.mxu0
      %832 = vmatpush.msra.mxu0 0.0
      %833 = vmatpush.msra.mxu0 0.0
      %834 = vmatpush.msra.mxu0 0.0
      %835 = vmatpush.msra.mxu0 0.0
      %836 = vmatpush.msra.mxu0 0.0
      %837 = vmatpush.msra.mxu0 0.0
      %838 = vmatpush.msra.mxu0 0.0
      %839 = vmatpush.msra.mxu0 0.0
      %840 = vmatpush.msra.mxu0 0.0
      %841 = vmatpush.msra.mxu0 0.0
      %842 = vmatpush.msra.mxu0 0.0
      %843 = vmatpush.msra.mxu0 0.0
      %844 = vmatpush.msra.mxu0 0.0
      %845 = vmatpush.msra.mxu0 0.0
      %846 = vmatpush.msra.mxu0 0.0
      %v847 = vand.u32 %v428, 4294901760
      %v848 = vsub.f32 %v428, %v847
      %v849 = vand.u32 %v848, 4294901760
      %850 = vmatpush.msra.mxu0 %v849
      %v851 = vand.u32 %v730, 4294901760
      %852 = vmatmul.f32.gmra.mxu0 %v851
      %v853 = vpop.f32.mrf.mxu0
      %v854 = vadd.f32 %v830, %v853
      %855 = vdwg.mxu0
      %856 = vmatpush.msra.mxu0 0.0
      %857 = vmatpush.msra.mxu0 0.0
      %858 = vmatpush.msra.mxu0 0.0
      %859 = vmatpush.msra.mxu0 0.0
      %860 = vmatpush.msra.mxu0 0.0
      %861 = vmatpush.msra.mxu0 0.0
      %862 = vmatpush.msra.mxu0 0.0
      %863 = vmatpush.msra.mxu0 0.0
      %864 = vmatpush.msra.mxu0 0.0
      %865 = vmatpush.msra.mxu0 0.0
      %866 = vmatpush.msra.mxu0 0.0
      %867 = vmatpush.msra.mxu0 0.0
      %868 = vmatpush.msra.mxu0 0.0
      %869 = vmatpush.msra.mxu0 0.0
      %870 = vmatpush.msra.mxu0 0.0
      %v871 = vand.u32 %v428, 4294901760
      %872 = vmatpush.msra.mxu0 %v871
      %v873 = vand.u32 %v730, 4294901760
      %874 = vmatmul.f32.gmra.mxu0 %v873
      %v875 = vpop.f32.mrf.mxu0
      %v876 = vadd.f32 %v854, %v875
      %877 = vdwg.mxu0
      %v879 = vsel %vm430, %v425, 0
      %881 = vmatpush.msra.mxu0 0.0
      %882 = vmatpush.msra.mxu0 0.0
      %883 = vmatpush.msra.mxu0 0.0
      %884 = vmatpush.msra.mxu0 0.0
      %885 = vmatpush.msra.mxu0 0.0
      %886 = vmatpush.msra.mxu0 0.0
      %887 = vmatpush.msra.mxu0 0.0
      %888 = vmatpush.msra.mxu0 0.0
      %889 = vmatpush.msra.mxu0 0.0
      %890 = vmatpush.msra.mxu0 0.0
      %891 = vmatpush.msra.mxu0 0.0
      %892 = vmatpush.msra.mxu0 0.0
      %893 = vmatpush.msra.mxu0 0.0
      %894 = vmatpush.msra.mxu0 0.0
      %895 = vmatpush.msra.mxu0 0.0
      %v896 = vand.u32 %v429, 4294901760
      %897 = vmatpush.msra.mxu0 %v896
      %v898 = vand.u32 %v879, 4294901760
      %v899 = vsub.f32 %v879, %v898
      %v900 = vand.u32 %v899, 4294901760
      %v901 = vsub.f32 %v899, %v900
      %v902 = vand.u32 %v901, 4294901760
      %903 = vmatmul.f32.gmra.mxu0 %v902
      %v904 = vpop.f32.mrf.mxu0
      %v905 = vadd.f32 0.0, %v904
      %906 = vdwg.mxu0
      %907 = vmatpush.msra.mxu0 0.0
      %908 = vmatpush.msra.mxu0 0.0
      %909 = vmatpush.msra.mxu0 0.0
      %910 = vmatpush.msra.mxu0 0.0
      %911 = vmatpush.msra.mxu0 0.0
      %912 = vmatpush.msra.mxu0 0.0
      %913 = vmatpush.msra.mxu0 0.0
      %914 = vmatpush.msra.mxu0 0.0
      %915 = vmatpush.msra.mxu0 0.0
      %916 = vmatpush.msra.mxu0 0.0
      %917 = vmatpush.msra.mxu0 0.0
      %918 = vmatpush.msra.mxu0 0.0
      %919 = vmatpush.msra.mxu0 0.0
      %920 = vmatpush.msra.mxu0 0.0
      %921 = vmatpush.msra.mxu0 0.0
      %v922 = vand.u32 %v429, 4294901760
      %v923 = vsub.f32 %v429, %v922
      %v924 = vand.u32 %v923, 4294901760
      %v925 = vsub.f32 %v923, %v924
      %v926 = vand.u32 %v925, 4294901760
      %927 = vmatpush.msra.mxu0 %v926
      %v928 = vand.u32 %v879, 4294901760
      %929 = vmatmul.f32.gmra.mxu0 %v928
      %v930 = vpop.f32.mrf.mxu0
      %v931 = vadd.f32 %v905, %v930
      %932 = vdwg.mxu0
      %933 = vmatpush.msra.mxu0 0.0
      %934 = vmatpush.msra.mxu0 0.0
      %935 = vmatpush.msra.mxu0 0.0
      %936 = vmatpush.msra.mxu0 0.0
      %937 = vmatpush.msra.mxu0 0.0
      %938 = vmatpush.msra.mxu0 0.0
      %939 = vmatpush.msra.mxu0 0.0
      %940 = vmatpush.msra.mxu0 0.0
      %941 = vmatpush.msra.mxu0 0.0
      %942 = vmatpush.msra.mxu0 0.0
      %943 = vmatpush.msra.mxu0 0.0
      %944 = vmatpush.msra.mxu0 0.0
      %945 = vmatpush.msra.mxu0 0.0
      %946 = vmatpush.msra.mxu0 0.0
      %947 = vmatpush.msra.mxu0 0.0
      %v948 = vand.u32 %v429, 4294901760
      %v949 = vsub.f32 %v429, %v948
      %950 = vmatpush.msra.mxu0 %v949
      %v951 = vand.u32 %v879, 4294901760
      %v952 = vsub.f32 %v879, %v951
      %953 = vmatmul.f32.gmra.mxu0 %v952
      %v954 = vpop.f32.mrf.mxu0
      %v955 = vadd.f32 %v931, %v954
      %956 = vdwg.mxu0
      %957 = vmatpush.msra.mxu0 0.0
      %958 = vmatpush.msra.mxu0 0.0
      %959 = vmatpush.msra.mxu0 0.0
      %960 = vmatpush.msra.mxu0 0.0
      %961 = vmatpush.msra.mxu0 0.0
      %962 = vmatpush.msra.mxu0 0.0
      %963 = vmatpush.msra.mxu0 0.0
      %964 = vmatpush.msra.mxu0 0.0
      %965 = vmatpush.msra.mxu0 0.0
      %966 = vmatpush.msra.mxu0 0.0
      %967 = vmatpush.msra.mxu0 0.0
      %968 = vmatpush.msra.mxu0 0.0
      %969 = vmatpush.msra.mxu0 0.0
      %970 = vmatpush.msra.mxu0 0.0
      %971 = vmatpush.msra.mxu0 0.0
      %v972 = vand.u32 %v429, 4294901760
      %973 = vmatpush.msra.mxu0 %v972
      %v974 = vand.u32 %v879, 4294901760
      %v975 = vsub.f32 %v879, %v974
      %v976 = vand.u32 %v975, 4294901760
      %977 = vmatmul.f32.gmra.mxu0 %v976
      %v978 = vpop.f32.mrf.mxu0
      %v979 = vadd.f32 %v955, %v978
      %980 = vdwg.mxu0
      %981 = vmatpush.msra.mxu0 0.0
      %982 = vmatpush.msra.mxu0 0.0
      %983 = vmatpush.msra.mxu0 0.0
      %984 = vmatpush.msra.mxu0 0.0
      %985 = vmatpush.msra.mxu0 0.0
      %986 = vmatpush.msra.mxu0 0.0
      %987 = vmatpush.msra.mxu0 0.0
      %988 = vmatpush.msra.mxu0 0.0
      %989 = vmatpush.msra.mxu0 0.0
      %990 = vmatpush.msra.mxu0 0.0
      %991 = vmatpush.msra.mxu0 0.0
      %992 = vmatpush.msra.mxu0 0.0
      %993 = vmatpush.msra.mxu0 0.0
      %994 = vmatpush.msra.mxu0 0.0
      %995 = vmatpush.msra.mxu0 0.0
      %v996 = vand.u32 %v429, 4294901760
      %v997 = vsub.f32 %v429, %v996
      %v998 = vand.u32 %v997, 4294901760
      %999 = vmatpush.msra.mxu0 %v998
      %v1000 = vand.u32 %v879, 4294901760
      %1001 = vmatmul.f32.gmra.mxu0 %v1000
      %v1002 = vpop.f32.mrf.mxu0
      %v1003 = vadd.f32 %v979, %v1002
      %1004 = vdwg.mxu0
      %1005 = vmatpush.msra.mxu0 0.0
      %1006 = vmatpush.msra.mxu0 0.0
      %1007 = vmatpush.msra.mxu0 0.0
      %1008 = vmatpush.msra.mxu0 0.0
      %1009 = vmatpush.msra.mxu0 0.0
      %1010 = vmatpush.msra.mxu0 0.0
      %1011 = vmatpush.msra.mxu0 0.0
      %1012 = vmatpush.msra.mxu0 0.0
      %1013 = vmatpush.msra.mxu0 0.0
      %1014 = vmatpush.msra.mxu0 0.0
      %1015 = vmatpush.msra.mxu0 0.0
      %1016 = vmatpush.msra.mxu0 0.0
      %1017 = vmatpush.msra.mxu0 0.0
      %1018 = vmatpush.msra.mxu0 0.0
      %1019 = vmatpush.msra.mxu0 0.0
      %v1020 = vand.u32 %v429, 4294901760
      %1021 = vmatpush.msra.mxu0 %v1020
      %v1022 = vand.u32 %v879, 4294901760
      %1023 = vmatmul.f32.gmra.mxu0 %v1022
      %v1024 = vpop.f32.mrf.mxu0
      %v1025 = vadd.f32 %v1003, %v1024
      %1026 = vdwg.mxu0
      %v1027 = vld [vmem:[%s3] sm:$0xff]
      %v1028 = vld [vmem:[%s3 + $0x8] sm:$0xff]
      %v1029 = vld [vmem:[%s3 + $0x10] sm:$0xff]
      %v1030 = vld [vmem:[%s3 + $0x18] sm:$0xff]
      %v1031 = vld [vmem:[%s3 + $0x20] sm:$0xff]
      %v1032 = vld [vmem:[%s3 + $0x28] sm:$0xff]
      %v1033 = vld [vmem:[%s3 + $0x30] sm:$0xff]
      %v1034 = vld [vmem:[%s3 + $0x38] sm:$0xff]
      %v1036 = vsel %vm430, %v1027, 0
      %v1039 = vsel %vm430, %v1028, 0
      %1041 = vmatpush.msra.mxu0 0.0
      %1042 = vmatpush.msra.mxu0 0.0
      %1043 = vmatpush.msra.mxu0 0.0
      %1044 = vmatpush.msra.mxu0 0.0
      %1045 = vmatpush.msra.mxu0 0.0
      %1046 = vmatpush.msra.mxu0 0.0
      %1047 = vmatpush.msra.mxu0 0.0
      %1048 = vmatpush.msra.mxu0 0.0
      %1049 = vmatpush.msra.mxu0 0.0
      %1050 = vmatpush.msra.mxu0 0.0
      %1051 = vmatpush.msra.mxu0 0.0
      %1052 = vmatpush.msra.mxu0 0.0
      %1053 = vmatpush.msra.mxu0 0.0
      %1054 = vmatpush.msra.mxu0 0.0
      %1055 = vmatpush.msra.mxu0 0.0
      %v1056 = vand.u32 %v578, 4294901760
      %1057 = vmatpush.msra.mxu0 %v1056
      %v1058 = vand.u32 %v1036, 4294901760
      %v1059 = vsub.f32 %v1036, %v1058
      %v1060 = vand.u32 %v1059, 4294901760
      %v1061 = vsub.f32 %v1059, %v1060
      %v1062 = vand.u32 %v1061, 4294901760
      %1063 = vmatmul.f32.gmra.mxu0 %v1062
      %v1064 = vpop.f32.mrf.mxu0
      %v1065 = vadd.f32 0.0, %v1064
      %v1066 = vand.u32 %v1039, 4294901760
      %v1067 = vsub.f32 %v1039, %v1066
      %v1068 = vand.u32 %v1067, 4294901760
      %v1069 = vsub.f32 %v1067, %v1068
      %v1070 = vand.u32 %v1069, 4294901760
      %1071 = vmatmul.f32.gmra.mxu0 %v1070
      %v1072 = vpop.f32.mrf.mxu0
      %v1073 = vadd.f32 0.0, %v1072
      %1074 = vdwg.mxu0
      %1075 = vmatpush.msra.mxu0 0.0
      %1076 = vmatpush.msra.mxu0 0.0
      %1077 = vmatpush.msra.mxu0 0.0
      %1078 = vmatpush.msra.mxu0 0.0
      %1079 = vmatpush.msra.mxu0 0.0
      %1080 = vmatpush.msra.mxu0 0.0
      %1081 = vmatpush.msra.mxu0 0.0
      %1082 = vmatpush.msra.mxu0 0.0
      %1083 = vmatpush.msra.mxu0 0.0
      %1084 = vmatpush.msra.mxu0 0.0
      %1085 = vmatpush.msra.mxu0 0.0
      %1086 = vmatpush.msra.mxu0 0.0
      %1087 = vmatpush.msra.mxu0 0.0
      %1088 = vmatpush.msra.mxu0 0.0
      %1089 = vmatpush.msra.mxu0 0.0
      %v1090 = vand.u32 %v578, 4294901760
      %v1091 = vsub.f32 %v578, %v1090
      %v1092 = vand.u32 %v1091, 4294901760
      %v1093 = vsub.f32 %v1091, %v1092
      %v1094 = vand.u32 %v1093, 4294901760
      %1095 = vmatpush.msra.mxu0 %v1094
      %v1096 = vand.u32 %v1036, 4294901760
      %1097 = vmatmul.f32.gmra.mxu0 %v1096
      %v1098 = vpop.f32.mrf.mxu0
      %v1099 = vadd.f32 %v1065, %v1098
      %v1100 = vand.u32 %v1039, 4294901760
      %1101 = vmatmul.f32.gmra.mxu0 %v1100
      %v1102 = vpop.f32.mrf.mxu0
      %v1103 = vadd.f32 %v1073, %v1102
      %1104 = vdwg.mxu0
      %1105 = vmatpush.msra.mxu0 0.0
      %1106 = vmatpush.msra.mxu0 0.0
      %1107 = vmatpush.msra.mxu0 0.0
      %1108 = vmatpush.msra.mxu0 0.0
      %1109 = vmatpush.msra.mxu0 0.0
      %1110 = vmatpush.msra.mxu0 0.0
      %1111 = vmatpush.msra.mxu0 0.0
      %1112 = vmatpush.msra.mxu0 0.0
      %1113 = vmatpush.msra.mxu0 0.0
      %1114 = vmatpush.msra.mxu0 0.0
      %1115 = vmatpush.msra.mxu0 0.0
      %1116 = vmatpush.msra.mxu0 0.0
      %1117 = vmatpush.msra.mxu0 0.0
      %1118 = vmatpush.msra.mxu0 0.0
      %1119 = vmatpush.msra.mxu0 0.0
      %v1120 = vand.u32 %v578, 4294901760
      %v1121 = vsub.f32 %v578, %v1120
      %1122 = vmatpush.msra.mxu0 %v1121
      %v1123 = vand.u32 %v1036, 4294901760
      %v1124 = vsub.f32 %v1036, %v1123
      %1125 = vmatmul.f32.gmra.mxu0 %v1124
      %v1126 = vpop.f32.mrf.mxu0
      %v1127 = vadd.f32 %v1099, %v1126
      %v1128 = vand.u32 %v1039, 4294901760
      %v1129 = vsub.f32 %v1039, %v1128
      %1130 = vmatmul.f32.gmra.mxu0 %v1129
      %v1131 = vpop.f32.mrf.mxu0
      %v1132 = vadd.f32 %v1103, %v1131
      %1133 = vdwg.mxu0
      %1134 = vmatpush.msra.mxu0 0.0
      %1135 = vmatpush.msra.mxu0 0.0
      %1136 = vmatpush.msra.mxu0 0.0
      %1137 = vmatpush.msra.mxu0 0.0
      %1138 = vmatpush.msra.mxu0 0.0
      %1139 = vmatpush.msra.mxu0 0.0
      %1140 = vmatpush.msra.mxu0 0.0
      %1141 = vmatpush.msra.mxu0 0.0
      %1142 = vmatpush.msra.mxu0 0.0
      %1143 = vmatpush.msra.mxu0 0.0
      %1144 = vmatpush.msra.mxu0 0.0
      %1145 = vmatpush.msra.mxu0 0.0
      %1146 = vmatpush.msra.mxu0 0.0
      %1147 = vmatpush.msra.mxu0 0.0
      %1148 = vmatpush.msra.mxu0 0.0
      %v1149 = vand.u32 %v578, 4294901760
      %1150 = vmatpush.msra.mxu0 %v1149
      %v1151 = vand.u32 %v1036, 4294901760
      %v1152 = vsub.f32 %v1036, %v1151
      %v1153 = vand.u32 %v1152, 4294901760
      %1154 = vmatmul.f32.gmra.mxu0 %v1153
      %v1155 = vpop.f32.mrf.mxu0
      %v1156 = vadd.f32 %v1127, %v1155
      %v1157 = vand.u32 %v1039, 4294901760
      %v1158 = vsub.f32 %v1039, %v1157
      %v1159 = vand.u32 %v1158, 4294901760
      %1160 = vmatmul.f32.gmra.mxu0 %v1159
      %v1161 = vpop.f32.mrf.mxu0
      %v1162 = vadd.f32 %v1132, %v1161
      %1163 = vdwg.mxu0
      %1164 = vmatpush.msra.mxu0 0.0
      %1165 = vmatpush.msra.mxu0 0.0
      %1166 = vmatpush.msra.mxu0 0.0
      %1167 = vmatpush.msra.mxu0 0.0
      %1168 = vmatpush.msra.mxu0 0.0
      %1169 = vmatpush.msra.mxu0 0.0
      %1170 = vmatpush.msra.mxu0 0.0
      %1171 = vmatpush.msra.mxu0 0.0
      %1172 = vmatpush.msra.mxu0 0.0
      %1173 = vmatpush.msra.mxu0 0.0
      %1174 = vmatpush.msra.mxu0 0.0
      %1175 = vmatpush.msra.mxu0 0.0
      %1176 = vmatpush.msra.mxu0 0.0
      %1177 = vmatpush.msra.mxu0 0.0
      %1178 = vmatpush.msra.mxu0 0.0
      %v1179 = vand.u32 %v578, 4294901760
      %v1180 = vsub.f32 %v578, %v1179
      %v1181 = vand.u32 %v1180, 4294901760
      %1182 = vmatpush.msra.mxu0 %v1181
      %v1183 = vand.u32 %v1036, 4294901760
      %1184 = vmatmul.f32.gmra.mxu0 %v1183
      %v1185 = vpop.f32.mrf.mxu0
      %v1186 = vadd.f32 %v1156, %v1185
      %v1187 = vand.u32 %v1039, 4294901760
      %1188 = vmatmul.f32.gmra.mxu0 %v1187
      %v1189 = vpop.f32.mrf.mxu0
      %v1190 = vadd.f32 %v1162, %v1189
      %1191 = vdwg.mxu0
      %1192 = vmatpush.msra.mxu0 0.0
      %1193 = vmatpush.msra.mxu0 0.0
      %1194 = vmatpush.msra.mxu0 0.0
      %1195 = vmatpush.msra.mxu0 0.0
      %1196 = vmatpush.msra.mxu0 0.0
      %1197 = vmatpush.msra.mxu0 0.0
      %1198 = vmatpush.msra.mxu0 0.0
      %1199 = vmatpush.msra.mxu0 0.0
      %1200 = vmatpush.msra.mxu0 0.0
      %1201 = vmatpush.msra.mxu0 0.0
      %1202 = vmatpush.msra.mxu0 0.0
      %1203 = vmatpush.msra.mxu0 0.0
      %1204 = vmatpush.msra.mxu0 0.0
      %1205 = vmatpush.msra.mxu0 0.0
      %1206 = vmatpush.msra.mxu0 0.0
      %v1207 = vand.u32 %v578, 4294901760
      %1208 = vmatpush.msra.mxu0 %v1207
      %v1209 = vand.u32 %v1036, 4294901760
      %1210 = vmatmul.f32.gmra.mxu0 %v1209
      %v1211 = vpop.f32.mrf.mxu0
      %v1212 = vadd.f32 %v1186, %v1211
      %v1213 = vand.u32 %v1039, 4294901760
      %1214 = vmatmul.f32.gmra.mxu0 %v1213
      %v1215 = vpop.f32.mrf.mxu0
      %v1216 = vadd.f32 %v1190, %v1215
      %1217 = vdwg.mxu0
      %v1219 = vsel %vm430, %v1029, 0
      %v1222 = vsel %vm430, %v1030, 0
      %1224 = vmatpush.msra.mxu0 0.0
      %1225 = vmatpush.msra.mxu0 0.0
      %1226 = vmatpush.msra.mxu0 0.0
      %1227 = vmatpush.msra.mxu0 0.0
      %1228 = vmatpush.msra.mxu0 0.0
      %1229 = vmatpush.msra.mxu0 0.0
      %1230 = vmatpush.msra.mxu0 0.0
      %1231 = vmatpush.msra.mxu0 0.0
      %1232 = vmatpush.msra.mxu0 0.0
      %1233 = vmatpush.msra.mxu0 0.0
      %1234 = vmatpush.msra.mxu0 0.0
      %1235 = vmatpush.msra.mxu0 0.0
      %1236 = vmatpush.msra.mxu0 0.0
      %1237 = vmatpush.msra.mxu0 0.0
      %1238 = vmatpush.msra.mxu0 0.0
      %v1239 = vand.u32 %v727, 4294901760
      %1240 = vmatpush.msra.mxu0 %v1239
      %v1241 = vand.u32 %v1219, 4294901760
      %v1242 = vsub.f32 %v1219, %v1241
      %v1243 = vand.u32 %v1242, 4294901760
      %v1244 = vsub.f32 %v1242, %v1243
      %v1245 = vand.u32 %v1244, 4294901760
      %1246 = vmatmul.f32.gmra.mxu0 %v1245
      %v1247 = vpop.f32.mrf.mxu0
      %v1248 = vadd.f32 0.0, %v1247
      %v1249 = vand.u32 %v1222, 4294901760
      %v1250 = vsub.f32 %v1222, %v1249
      %v1251 = vand.u32 %v1250, 4294901760
      %v1252 = vsub.f32 %v1250, %v1251
      %v1253 = vand.u32 %v1252, 4294901760
      %1254 = vmatmul.f32.gmra.mxu0 %v1253
      %v1255 = vpop.f32.mrf.mxu0
      %v1256 = vadd.f32 0.0, %v1255
      %1257 = vdwg.mxu0
      %1258 = vmatpush.msra.mxu0 0.0
      %1259 = vmatpush.msra.mxu0 0.0
      %1260 = vmatpush.msra.mxu0 0.0
      %1261 = vmatpush.msra.mxu0 0.0
      %1262 = vmatpush.msra.mxu0 0.0
      %1263 = vmatpush.msra.mxu0 0.0
      %1264 = vmatpush.msra.mxu0 0.0
      %1265 = vmatpush.msra.mxu0 0.0
      %1266 = vmatpush.msra.mxu0 0.0
      %1267 = vmatpush.msra.mxu0 0.0
      %1268 = vmatpush.msra.mxu0 0.0
      %1269 = vmatpush.msra.mxu0 0.0
      %1270 = vmatpush.msra.mxu0 0.0
      %1271 = vmatpush.msra.mxu0 0.0
      %1272 = vmatpush.msra.mxu0 0.0
      %v1273 = vand.u32 %v727, 4294901760
      %v1274 = vsub.f32 %v727, %v1273
      %v1275 = vand.u32 %v1274, 4294901760
      %v1276 = vsub.f32 %v1274, %v1275
      %v1277 = vand.u32 %v1276, 4294901760
      %1278 = vmatpush.msra.mxu0 %v1277
      %v1279 = vand.u32 %v1219, 4294901760
      %1280 = vmatmul.f32.gmra.mxu0 %v1279
      %v1281 = vpop.f32.mrf.mxu0
      %v1282 = vadd.f32 %v1248, %v1281
      %v1283 = vand.u32 %v1222, 4294901760
      %1284 = vmatmul.f32.gmra.mxu0 %v1283
      %v1285 = vpop.f32.mrf.mxu0
      %v1286 = vadd.f32 %v1256, %v1285
      %1287 = vdwg.mxu0
      %1288 = vmatpush.msra.mxu0 0.0
      %1289 = vmatpush.msra.mxu0 0.0
      %1290 = vmatpush.msra.mxu0 0.0
      %1291 = vmatpush.msra.mxu0 0.0
      %1292 = vmatpush.msra.mxu0 0.0
      %1293 = vmatpush.msra.mxu0 0.0
      %1294 = vmatpush.msra.mxu0 0.0
      %1295 = vmatpush.msra.mxu0 0.0
      %1296 = vmatpush.msra.mxu0 0.0
      %1297 = vmatpush.msra.mxu0 0.0
      %1298 = vmatpush.msra.mxu0 0.0
      %1299 = vmatpush.msra.mxu0 0.0
      %1300 = vmatpush.msra.mxu0 0.0
      %1301 = vmatpush.msra.mxu0 0.0
      %1302 = vmatpush.msra.mxu0 0.0
      %v1303 = vand.u32 %v727, 4294901760
      %v1304 = vsub.f32 %v727, %v1303
      %1305 = vmatpush.msra.mxu0 %v1304
      %v1306 = vand.u32 %v1219, 4294901760
      %v1307 = vsub.f32 %v1219, %v1306
      %1308 = vmatmul.f32.gmra.mxu0 %v1307
      %v1309 = vpop.f32.mrf.mxu0
      %v1310 = vadd.f32 %v1282, %v1309
      %v1311 = vand.u32 %v1222, 4294901760
      %v1312 = vsub.f32 %v1222, %v1311
      %1313 = vmatmul.f32.gmra.mxu0 %v1312
      %v1314 = vpop.f32.mrf.mxu0
      %v1315 = vadd.f32 %v1286, %v1314
      %1316 = vdwg.mxu0
      %1317 = vmatpush.msra.mxu0 0.0
      %1318 = vmatpush.msra.mxu0 0.0
      %1319 = vmatpush.msra.mxu0 0.0
      %1320 = vmatpush.msra.mxu0 0.0
      %1321 = vmatpush.msra.mxu0 0.0
      %1322 = vmatpush.msra.mxu0 0.0
      %1323 = vmatpush.msra.mxu0 0.0
      %1324 = vmatpush.msra.mxu0 0.0
      %1325 = vmatpush.msra.mxu0 0.0
      %1326 = vmatpush.msra.mxu0 0.0
      %1327 = vmatpush.msra.mxu0 0.0
      %1328 = vmatpush.msra.mxu0 0.0
      %1329 = vmatpush.msra.mxu0 0.0
      %1330 = vmatpush.msra.mxu0 0.0
      %1331 = vmatpush.msra.mxu0 0.0
      %v1332 = vand.u32 %v727, 4294901760
      %1333 = vmatpush.msra.mxu0 %v1332
      %v1334 = vand.u32 %v1219, 4294901760
      %v1335 = vsub.f32 %v1219, %v1334
      %v1336 = vand.u32 %v1335, 4294901760
      %1337 = vmatmul.f32.gmra.mxu0 %v1336
      %v1338 = vpop.f32.mrf.mxu0
      %v1339 = vadd.f32 %v1310, %v1338
      %v1340 = vand.u32 %v1222, 4294901760
      %v1341 = vsub.f32 %v1222, %v1340
      %v1342 = vand.u32 %v1341, 4294901760
      %1343 = vmatmul.f32.gmra.mxu0 %v1342
      %v1344 = vpop.f32.mrf.mxu0
      %v1345 = vadd.f32 %v1315, %v1344
      %1346 = vdwg.mxu0
      %1347 = vmatpush.msra.mxu0 0.0
      %1348 = vmatpush.msra.mxu0 0.0
      %1349 = vmatpush.msra.mxu0 0.0
      %1350 = vmatpush.msra.mxu0 0.0
      %1351 = vmatpush.msra.mxu0 0.0
      %1352 = vmatpush.msra.mxu0 0.0
      %1353 = vmatpush.msra.mxu0 0.0
      %1354 = vmatpush.msra.mxu0 0.0
      %1355 = vmatpush.msra.mxu0 0.0
      %1356 = vmatpush.msra.mxu0 0.0
      %1357 = vmatpush.msra.mxu0 0.0
      %1358 = vmatpush.msra.mxu0 0.0
      %1359 = vmatpush.msra.mxu0 0.0
      %1360 = vmatpush.msra.mxu0 0.0
      %1361 = vmatpush.msra.mxu0 0.0
      %v1362 = vand.u32 %v727, 4294901760
      %v1363 = vsub.f32 %v727, %v1362
      %v1364 = vand.u32 %v1363, 4294901760
      %1365 = vmatpush.msra.mxu0 %v1364
      %v1366 = vand.u32 %v1219, 4294901760
      %1367 = vmatmul.f32.gmra.mxu0 %v1366
      %v1368 = vpop.f32.mrf.mxu0
      %v1369 = vadd.f32 %v1339, %v1368
      %v1370 = vand.u32 %v1222, 4294901760
      %1371 = vmatmul.f32.gmra.mxu0 %v1370
      %v1372 = vpop.f32.mrf.mxu0
      %v1373 = vadd.f32 %v1345, %v1372
      %1374 = vdwg.mxu0
      %1375 = vmatpush.msra.mxu0 0.0
      %1376 = vmatpush.msra.mxu0 0.0
      %1377 = vmatpush.msra.mxu0 0.0
      %1378 = vmatpush.msra.mxu0 0.0
      %1379 = vmatpush.msra.mxu0 0.0
      %1380 = vmatpush.msra.mxu0 0.0
      %1381 = vmatpush.msra.mxu0 0.0
      %1382 = vmatpush.msra.mxu0 0.0
      %1383 = vmatpush.msra.mxu0 0.0
      %1384 = vmatpush.msra.mxu0 0.0
      %1385 = vmatpush.msra.mxu0 0.0
      %1386 = vmatpush.msra.mxu0 0.0
      %1387 = vmatpush.msra.mxu0 0.0
      %1388 = vmatpush.msra.mxu0 0.0
      %1389 = vmatpush.msra.mxu0 0.0
      %v1390 = vand.u32 %v727, 4294901760
      %1391 = vmatpush.msra.mxu0 %v1390
      %v1392 = vand.u32 %v1219, 4294901760
      %1393 = vmatmul.f32.gmra.mxu0 %v1392
      %v1394 = vpop.f32.mrf.mxu0
      %v1395 = vadd.f32 %v1369, %v1394
      %v1396 = vand.u32 %v1222, 4294901760
      %1397 = vmatmul.f32.gmra.mxu0 %v1396
      %v1398 = vpop.f32.mrf.mxu0
      %v1399 = vadd.f32 %v1373, %v1398
      %1400 = vdwg.mxu0
      %v1402 = vsel %vm430, %v1031, 0
      %v1405 = vsel %vm430, %v1032, 0
      %1407 = vmatpush.msra.mxu0 0.0
      %1408 = vmatpush.msra.mxu0 0.0
      %1409 = vmatpush.msra.mxu0 0.0
      %1410 = vmatpush.msra.mxu0 0.0
      %1411 = vmatpush.msra.mxu0 0.0
      %1412 = vmatpush.msra.mxu0 0.0
      %1413 = vmatpush.msra.mxu0 0.0
      %1414 = vmatpush.msra.mxu0 0.0
      %1415 = vmatpush.msra.mxu0 0.0
      %1416 = vmatpush.msra.mxu0 0.0
      %1417 = vmatpush.msra.mxu0 0.0
      %1418 = vmatpush.msra.mxu0 0.0
      %1419 = vmatpush.msra.mxu0 0.0
      %1420 = vmatpush.msra.mxu0 0.0
      %1421 = vmatpush.msra.mxu0 0.0
      %v1422 = vand.u32 %v876, 4294901760
      %1423 = vmatpush.msra.mxu0 %v1422
      %v1424 = vand.u32 %v1402, 4294901760
      %v1425 = vsub.f32 %v1402, %v1424
      %v1426 = vand.u32 %v1425, 4294901760
      %v1427 = vsub.f32 %v1425, %v1426
      %v1428 = vand.u32 %v1427, 4294901760
      %1429 = vmatmul.f32.gmra.mxu0 %v1428
      %v1430 = vpop.f32.mrf.mxu0
      %v1431 = vadd.f32 0.0, %v1430
      %v1432 = vand.u32 %v1405, 4294901760
      %v1433 = vsub.f32 %v1405, %v1432
      %v1434 = vand.u32 %v1433, 4294901760
      %v1435 = vsub.f32 %v1433, %v1434
      %v1436 = vand.u32 %v1435, 4294901760
      %1437 = vmatmul.f32.gmra.mxu0 %v1436
      %v1438 = vpop.f32.mrf.mxu0
      %v1439 = vadd.f32 0.0, %v1438
      %1440 = vdwg.mxu0
      %1441 = vmatpush.msra.mxu0 0.0
      %1442 = vmatpush.msra.mxu0 0.0
      %1443 = vmatpush.msra.mxu0 0.0
      %1444 = vmatpush.msra.mxu0 0.0
      %1445 = vmatpush.msra.mxu0 0.0
      %1446 = vmatpush.msra.mxu0 0.0
      %1447 = vmatpush.msra.mxu0 0.0
      %1448 = vmatpush.msra.mxu0 0.0
      %1449 = vmatpush.msra.mxu0 0.0
      %1450 = vmatpush.msra.mxu0 0.0
      %1451 = vmatpush.msra.mxu0 0.0
      %1452 = vmatpush.msra.mxu0 0.0
      %1453 = vmatpush.msra.mxu0 0.0
      %1454 = vmatpush.msra.mxu0 0.0
      %1455 = vmatpush.msra.mxu0 0.0
      %v1456 = vand.u32 %v876, 4294901760
      %v1457 = vsub.f32 %v876, %v1456
      %v1458 = vand.u32 %v1457, 4294901760
      %v1459 = vsub.f32 %v1457, %v1458
      %v1460 = vand.u32 %v1459, 4294901760
      %1461 = vmatpush.msra.mxu0 %v1460
      %v1462 = vand.u32 %v1402, 4294901760
      %1463 = vmatmul.f32.gmra.mxu0 %v1462
      %v1464 = vpop.f32.mrf.mxu0
      %v1465 = vadd.f32 %v1431, %v1464
      %v1466 = vand.u32 %v1405, 4294901760
      %1467 = vmatmul.f32.gmra.mxu0 %v1466
      %v1468 = vpop.f32.mrf.mxu0
      %v1469 = vadd.f32 %v1439, %v1468
      %1470 = vdwg.mxu0
      %1471 = vmatpush.msra.mxu0 0.0
      %1472 = vmatpush.msra.mxu0 0.0
      %1473 = vmatpush.msra.mxu0 0.0
      %1474 = vmatpush.msra.mxu0 0.0
      %1475 = vmatpush.msra.mxu0 0.0
      %1476 = vmatpush.msra.mxu0 0.0
      %1477 = vmatpush.msra.mxu0 0.0
      %1478 = vmatpush.msra.mxu0 0.0
      %1479 = vmatpush.msra.mxu0 0.0
      %1480 = vmatpush.msra.mxu0 0.0
      %1481 = vmatpush.msra.mxu0 0.0
      %1482 = vmatpush.msra.mxu0 0.0
      %1483 = vmatpush.msra.mxu0 0.0
      %1484 = vmatpush.msra.mxu0 0.0
      %1485 = vmatpush.msra.mxu0 0.0
      %v1486 = vand.u32 %v876, 4294901760
      %v1487 = vsub.f32 %v876, %v1486
      %1488 = vmatpush.msra.mxu0 %v1487
      %v1489 = vand.u32 %v1402, 4294901760
      %v1490 = vsub.f32 %v1402, %v1489
      %1491 = vmatmul.f32.gmra.mxu0 %v1490
      %v1492 = vpop.f32.mrf.mxu0
      %v1493 = vadd.f32 %v1465, %v1492
      %v1494 = vand.u32 %v1405, 4294901760
      %v1495 = vsub.f32 %v1405, %v1494
      %1496 = vmatmul.f32.gmra.mxu0 %v1495
      %v1497 = vpop.f32.mrf.mxu0
      %v1498 = vadd.f32 %v1469, %v1497
      %1499 = vdwg.mxu0
      %1500 = vmatpush.msra.mxu0 0.0
      %1501 = vmatpush.msra.mxu0 0.0
      %1502 = vmatpush.msra.mxu0 0.0
      %1503 = vmatpush.msra.mxu0 0.0
      %1504 = vmatpush.msra.mxu0 0.0
      %1505 = vmatpush.msra.mxu0 0.0
      %1506 = vmatpush.msra.mxu0 0.0
      %1507 = vmatpush.msra.mxu0 0.0
      %1508 = vmatpush.msra.mxu0 0.0
      %1509 = vmatpush.msra.mxu0 0.0
      %1510 = vmatpush.msra.mxu0 0.0
      %1511 = vmatpush.msra.mxu0 0.0
      %1512 = vmatpush.msra.mxu0 0.0
      %1513 = vmatpush.msra.mxu0 0.0
      %1514 = vmatpush.msra.mxu0 0.0
      %v1515 = vand.u32 %v876, 4294901760
      %1516 = vmatpush.msra.mxu0 %v1515
      %v1517 = vand.u32 %v1402, 4294901760
      %v1518 = vsub.f32 %v1402, %v1517
      %v1519 = vand.u32 %v1518, 4294901760
      %1520 = vmatmul.f32.gmra.mxu0 %v1519
      %v1521 = vpop.f32.mrf.mxu0
      %v1522 = vadd.f32 %v1493, %v1521
      %v1523 = vand.u32 %v1405, 4294901760
      %v1524 = vsub.f32 %v1405, %v1523
      %v1525 = vand.u32 %v1524, 4294901760
      %1526 = vmatmul.f32.gmra.mxu0 %v1525
      %v1527 = vpop.f32.mrf.mxu0
      %v1528 = vadd.f32 %v1498, %v1527
      %1529 = vdwg.mxu0
      %1530 = vmatpush.msra.mxu0 0.0
      %1531 = vmatpush.msra.mxu0 0.0
      %1532 = vmatpush.msra.mxu0 0.0
      %1533 = vmatpush.msra.mxu0 0.0
      %1534 = vmatpush.msra.mxu0 0.0
      %1535 = vmatpush.msra.mxu0 0.0
      %1536 = vmatpush.msra.mxu0 0.0
      %1537 = vmatpush.msra.mxu0 0.0
      %1538 = vmatpush.msra.mxu0 0.0
      %1539 = vmatpush.msra.mxu0 0.0
      %1540 = vmatpush.msra.mxu0 0.0
      %1541 = vmatpush.msra.mxu0 0.0
      %1542 = vmatpush.msra.mxu0 0.0
      %1543 = vmatpush.msra.mxu0 0.0
      %1544 = vmatpush.msra.mxu0 0.0
      %v1545 = vand.u32 %v876, 4294901760
      %v1546 = vsub.f32 %v876, %v1545
      %v1547 = vand.u32 %v1546, 4294901760
      %1548 = vmatpush.msra.mxu0 %v1547
      %v1549 = vand.u32 %v1402, 4294901760
      %1550 = vmatmul.f32.gmra.mxu0 %v1549
      %v1551 = vpop.f32.mrf.mxu0
      %v1552 = vadd.f32 %v1522, %v1551
      %v1553 = vand.u32 %v1405, 4294901760
      %1554 = vmatmul.f32.gmra.mxu0 %v1553
      %v1555 = vpop.f32.mrf.mxu0
      %v1556 = vadd.f32 %v1528, %v1555
      %1557 = vdwg.mxu0
      %1558 = vmatpush.msra.mxu0 0.0
      %1559 = vmatpush.msra.mxu0 0.0
      %1560 = vmatpush.msra.mxu0 0.0
      %1561 = vmatpush.msra.mxu0 0.0
      %1562 = vmatpush.msra.mxu0 0.0
      %1563 = vmatpush.msra.mxu0 0.0
      %1564 = vmatpush.msra.mxu0 0.0
      %1565 = vmatpush.msra.mxu0 0.0
      %1566 = vmatpush.msra.mxu0 0.0
      %1567 = vmatpush.msra.mxu0 0.0
      %1568 = vmatpush.msra.mxu0 0.0
      %1569 = vmatpush.msra.mxu0 0.0
      %1570 = vmatpush.msra.mxu0 0.0
      %1571 = vmatpush.msra.mxu0 0.0
      %1572 = vmatpush.msra.mxu0 0.0
      %v1573 = vand.u32 %v876, 4294901760
      %1574 = vmatpush.msra.mxu0 %v1573
      %v1575 = vand.u32 %v1402, 4294901760
      %1576 = vmatmul.f32.gmra.mxu0 %v1575
      %v1577 = vpop.f32.mrf.mxu0
      %v1578 = vadd.f32 %v1552, %v1577
      %v1579 = vand.u32 %v1405, 4294901760
      %1580 = vmatmul.f32.gmra.mxu0 %v1579
      %v1581 = vpop.f32.mrf.mxu0
      %v1582 = vadd.f32 %v1556, %v1581
      %1583 = vdwg.mxu0
      %v1585 = vsel %vm430, %v1033, 0
      %v1588 = vsel %vm430, %v1034, 0
      %1590 = vmatpush.msra.mxu0 0.0
      %1591 = vmatpush.msra.mxu0 0.0
      %1592 = vmatpush.msra.mxu0 0.0
      %1593 = vmatpush.msra.mxu0 0.0
      %1594 = vmatpush.msra.mxu0 0.0
      %1595 = vmatpush.msra.mxu0 0.0
      %1596 = vmatpush.msra.mxu0 0.0
      %1597 = vmatpush.msra.mxu0 0.0
      %1598 = vmatpush.msra.mxu0 0.0
      %1599 = vmatpush.msra.mxu0 0.0
      %1600 = vmatpush.msra.mxu0 0.0
      %1601 = vmatpush.msra.mxu0 0.0
      %1602 = vmatpush.msra.mxu0 0.0
      %1603 = vmatpush.msra.mxu0 0.0
      %1604 = vmatpush.msra.mxu0 0.0
      %v1605 = vand.u32 %v1025, 4294901760
      %1606 = vmatpush.msra.mxu0 %v1605
      %v1607 = vand.u32 %v1585, 4294901760
      %v1608 = vsub.f32 %v1585, %v1607
      %v1609 = vand.u32 %v1608, 4294901760
      %v1610 = vsub.f32 %v1608, %v1609
      %v1611 = vand.u32 %v1610, 4294901760
      %1612 = vmatmul.f32.gmra.mxu0 %v1611
      %v1613 = vpop.f32.mrf.mxu0
      %v1614 = vadd.f32 0.0, %v1613
      %v1615 = vand.u32 %v1588, 4294901760
      %v1616 = vsub.f32 %v1588, %v1615
      %v1617 = vand.u32 %v1616, 4294901760
      %v1618 = vsub.f32 %v1616, %v1617
      %v1619 = vand.u32 %v1618, 4294901760
      %1620 = vmatmul.f32.gmra.mxu0 %v1619
      %v1621 = vpop.f32.mrf.mxu0
      %v1622 = vadd.f32 0.0, %v1621
      %1623 = vdwg.mxu0
      %1624 = vmatpush.msra.mxu0 0.0
      %1625 = vmatpush.msra.mxu0 0.0
      %1626 = vmatpush.msra.mxu0 0.0
      %1627 = vmatpush.msra.mxu0 0.0
      %1628 = vmatpush.msra.mxu0 0.0
      %1629 = vmatpush.msra.mxu0 0.0
      %1630 = vmatpush.msra.mxu0 0.0
      %1631 = vmatpush.msra.mxu0 0.0
      %1632 = vmatpush.msra.mxu0 0.0
      %1633 = vmatpush.msra.mxu0 0.0
      %1634 = vmatpush.msra.mxu0 0.0
      %1635 = vmatpush.msra.mxu0 0.0
      %1636 = vmatpush.msra.mxu0 0.0
      %1637 = vmatpush.msra.mxu0 0.0
      %1638 = vmatpush.msra.mxu0 0.0
      %v1639 = vand.u32 %v1025, 4294901760
      %v1640 = vsub.f32 %v1025, %v1639
      %v1641 = vand.u32 %v1640, 4294901760
      %v1642 = vsub.f32 %v1640, %v1641
      %v1643 = vand.u32 %v1642, 4294901760
      %1644 = vmatpush.msra.mxu0 %v1643
      %v1645 = vand.u32 %v1585, 4294901760
      %1646 = vmatmul.f32.gmra.mxu0 %v1645
      %v1647 = vpop.f32.mrf.mxu0
      %v1648 = vadd.f32 %v1614, %v1647
      %v1649 = vand.u32 %v1588, 4294901760
      %1650 = vmatmul.f32.gmra.mxu0 %v1649
      %v1651 = vpop.f32.mrf.mxu0
      %v1652 = vadd.f32 %v1622, %v1651
      %1653 = vdwg.mxu0
      %1654 = vmatpush.msra.mxu0 0.0
      %1655 = vmatpush.msra.mxu0 0.0
      %1656 = vmatpush.msra.mxu0 0.0
      %1657 = vmatpush.msra.mxu0 0.0
      %1658 = vmatpush.msra.mxu0 0.0
      %1659 = vmatpush.msra.mxu0 0.0
      %1660 = vmatpush.msra.mxu0 0.0
      %1661 = vmatpush.msra.mxu0 0.0
      %1662 = vmatpush.msra.mxu0 0.0
      %1663 = vmatpush.msra.mxu0 0.0
      %1664 = vmatpush.msra.mxu0 0.0
      %1665 = vmatpush.msra.mxu0 0.0
      %1666 = vmatpush.msra.mxu0 0.0
      %1667 = vmatpush.msra.mxu0 0.0
      %1668 = vmatpush.msra.mxu0 0.0
      %v1669 = vand.u32 %v1025, 4294901760
      %v1670 = vsub.f32 %v1025, %v1669
      %1671 = vmatpush.msra.mxu0 %v1670
      %v1672 = vand.u32 %v1585, 4294901760
      %v1673 = vsub.f32 %v1585, %v1672
      %1674 = vmatmul.f32.gmra.mxu0 %v1673
      %v1675 = vpop.f32.mrf.mxu0
      %v1676 = vadd.f32 %v1648, %v1675
      %v1677 = vand.u32 %v1588, 4294901760
      %v1678 = vsub.f32 %v1588, %v1677
      %1679 = vmatmul.f32.gmra.mxu0 %v1678
      %v1680 = vpop.f32.mrf.mxu0
      %v1681 = vadd.f32 %v1652, %v1680
      %1682 = vdwg.mxu0
      %1683 = vmatpush.msra.mxu0 0.0
      %1684 = vmatpush.msra.mxu0 0.0
      %1685 = vmatpush.msra.mxu0 0.0
      %1686 = vmatpush.msra.mxu0 0.0
      %1687 = vmatpush.msra.mxu0 0.0
      %1688 = vmatpush.msra.mxu0 0.0
      %1689 = vmatpush.msra.mxu0 0.0
      %1690 = vmatpush.msra.mxu0 0.0
      %1691 = vmatpush.msra.mxu0 0.0
      %1692 = vmatpush.msra.mxu0 0.0
      %1693 = vmatpush.msra.mxu0 0.0
      %1694 = vmatpush.msra.mxu0 0.0
      %1695 = vmatpush.msra.mxu0 0.0
      %1696 = vmatpush.msra.mxu0 0.0
      %1697 = vmatpush.msra.mxu0 0.0
      %v1698 = vand.u32 %v1025, 4294901760
      %1699 = vmatpush.msra.mxu0 %v1698
      %v1700 = vand.u32 %v1585, 4294901760
      %v1701 = vsub.f32 %v1585, %v1700
      %v1702 = vand.u32 %v1701, 4294901760
      %1703 = vmatmul.f32.gmra.mxu0 %v1702
      %v1704 = vpop.f32.mrf.mxu0
      %v1705 = vadd.f32 %v1676, %v1704
      %v1706 = vand.u32 %v1588, 4294901760
      %v1707 = vsub.f32 %v1588, %v1706
      %v1708 = vand.u32 %v1707, 4294901760
      %1709 = vmatmul.f32.gmra.mxu0 %v1708
      %v1710 = vpop.f32.mrf.mxu0
      %v1711 = vadd.f32 %v1681, %v1710
      %1712 = vdwg.mxu0
      %1713 = vmatpush.msra.mxu0 0.0
      %1714 = vmatpush.msra.mxu0 0.0
      %1715 = vmatpush.msra.mxu0 0.0
      %1716 = vmatpush.msra.mxu0 0.0
      %1717 = vmatpush.msra.mxu0 0.0
      %1718 = vmatpush.msra.mxu0 0.0
      %1719 = vmatpush.msra.mxu0 0.0
      %1720 = vmatpush.msra.mxu0 0.0
      %1721 = vmatpush.msra.mxu0 0.0
      %1722 = vmatpush.msra.mxu0 0.0
      %1723 = vmatpush.msra.mxu0 0.0
      %1724 = vmatpush.msra.mxu0 0.0
      %1725 = vmatpush.msra.mxu0 0.0
      %1726 = vmatpush.msra.mxu0 0.0
      %1727 = vmatpush.msra.mxu0 0.0
      %v1728 = vand.u32 %v1025, 4294901760
      %v1729 = vsub.f32 %v1025, %v1728
      %v1730 = vand.u32 %v1729, 4294901760
      %1731 = vmatpush.msra.mxu0 %v1730
      %v1732 = vand.u32 %v1585, 4294901760
      %1733 = vmatmul.f32.gmra.mxu0 %v1732
      %v1734 = vpop.f32.mrf.mxu0
      %v1735 = vadd.f32 %v1705, %v1734
      %v1736 = vand.u32 %v1588, 4294901760
      %1737 = vmatmul.f32.gmra.mxu0 %v1736
      %v1738 = vpop.f32.mrf.mxu0
      %v1739 = vadd.f32 %v1711, %v1738
      %1740 = vdwg.mxu0
      %1741 = vmatpush.msra.mxu0 0.0
      %1742 = vmatpush.msra.mxu0 0.0
      %1743 = vmatpush.msra.mxu0 0.0
      %1744 = vmatpush.msra.mxu0 0.0
      %1745 = vmatpush.msra.mxu0 0.0
      %1746 = vmatpush.msra.mxu0 0.0
      %1747 = vmatpush.msra.mxu0 0.0
      %1748 = vmatpush.msra.mxu0 0.0
      %1749 = vmatpush.msra.mxu0 0.0
      %1750 = vmatpush.msra.mxu0 0.0
      %1751 = vmatpush.msra.mxu0 0.0
      %1752 = vmatpush.msra.mxu0 0.0
      %1753 = vmatpush.msra.mxu0 0.0
      %1754 = vmatpush.msra.mxu0 0.0
      %1755 = vmatpush.msra.mxu0 0.0
      %v1756 = vand.u32 %v1025, 4294901760
      %1757 = vmatpush.msra.mxu0 %v1756
      %v1758 = vand.u32 %v1585, 4294901760
      %1759 = vmatmul.f32.gmra.mxu0 %v1758
      %v1760 = vpop.f32.mrf.mxu0
      %v1761 = vadd.f32 %v1735, %v1760
      %v1762 = vand.u32 %v1588, 4294901760
      %1763 = vmatmul.f32.gmra.mxu0 %v1762
      %v1764 = vpop.f32.mrf.mxu0
      %v1765 = vadd.f32 %v1739, %v1764
      %1766 = vdwg.mxu0
      %vm1767 = vcmask 130048
      %1768 = vst.msk [vmem:[#allocation2] sm:$0xff] %vm1767, %v1212
      %1769 = vst.msk [vmem:[#allocation2 + $0x8] sm:$0xff] %vm1767, %v1216
      %1770 = vst.msk [vmem:[#allocation2 + $0x10] sm:$0xff] %vm1767, %v1395
      %1771 = vst.msk [vmem:[#allocation2 + $0x18] sm:$0xff] %vm1767, %v1399
      %1772 = vst.msk [vmem:[#allocation2 + $0x20] sm:$0xff] %vm1767, %v1578
      %1773 = vst.msk [vmem:[#allocation2 + $0x28] sm:$0xff] %vm1767, %v1582
      %1774 = vst.msk [vmem:[#allocation2 + $0x30] sm:$0xff] %vm1767, %v1761
      %1775 = vst.msk [vmem:[#allocation2 + $0x38] sm:$0xff] %vm1767, %v1765
      %v1776 = vld [vmem:[#allocation2] sm:$0x1]
      %v1777 = vld [vmem:[#allocation2 + $0x10] sm:$0x1]
      %v1778 = vld [vmem:[#allocation2 + $0x20] sm:$0x1]
      %v1779 = vld [vmem:[#allocation2 + $0x30] sm:$0x1]
      %v1784 = vrot.slane %v1777, 7
      %vm1785 = vcmask 1041409
      %v1786 = vsel %vm1785, %v1784, %v1776
      %vm1787 = vcmask 1045509
      %v1788 = vsel %vm1787, %v1784, %v1786
      %v1789 = vrot.slane %v1778, 6
      %vm1790 = vcmask 1042434
      %v1791 = vsel %vm1790, %v1789, %v1788
      %vm1792 = vcmask 1046534
      %v1793 = vsel %vm1792, %v1789, %v1791
      %v1794 = vrot.slane %v1779, 5
      %vm1795 = vcmask 1043459
      %v1796 = vsel %vm1795, %v1794, %v1793
      %vm1797 = vcmask 1047559
      %v1798 = vsel %vm1797, %v1794, %v1796
      %vm1800 = vcmask 125952
      %1801 = vst.msk [vmem:[#allocation3] sm:$0xf] %vm1800, %v1798
      %v1802 = vld [vmem:[#allocation2 + $0x1] sm:$0x1]
      %v1803 = vld [vmem:[#allocation2 + $0x11] sm:$0x1]
      %v1804 = vld [vmem:[#allocation2 + $0x21] sm:$0x1]
      %v1805 = vld [vmem:[#allocation2 + $0x31] sm:$0x1]
      %v1810 = vrot.slane %v1803, 7
      %v1811 = vsel %vm1785, %v1810, %v1802
      %v1812 = vsel %vm1787, %v1810, %v1811
      %v1813 = vrot.slane %v1804, 6
      %v1814 = vsel %vm1790, %v1813, %v1812
      %v1815 = vsel %vm1792, %v1813, %v1814
      %v1816 = vrot.slane %v1805, 5
      %v1817 = vsel %vm1795, %v1816, %v1815
      %v1818 = vsel %vm1797, %v1816, %v1817
      %1819 = vrot.lane.b32.xlu0 %v1818, 16
      %v1820 = vpop.permute.xlu0 %1819
      %vm1822 = vcmask 257152
      %1823 = vst.msk [vmem:[#allocation3] sm:$0xf] %vm1822, %v1820
      %v1824 = vld [vmem:[#allocation2 + $0x2] sm:$0x1]
      %v1825 = vld [vmem:[#allocation2 + $0x12] sm:$0x1]
      %v1826 = vld [vmem:[#allocation2 + $0x22] sm:$0x1]
      %v1827 = vld [vmem:[#allocation2 + $0x32] sm:$0x1]
      %v1832 = vrot.slane %v1825, 7
      %v1833 = vsel %vm1785, %v1832, %v1824
      %v1834 = vsel %vm1787, %v1832, %v1833
      %v1835 = vrot.slane %v1826, 6
      %v1836 = vsel %vm1790, %v1835, %v1834
      %v1837 = vsel %vm1792, %v1835, %v1836
      %v1838 = vrot.slane %v1827, 5
      %v1839 = vsel %vm1795, %v1838, %v1837
      %v1840 = vsel %vm1797, %v1838, %v1839
      %1841 = vrot.lane.b32.xlu0 %v1840, 32
      %v1842 = vpop.permute.xlu0 %1841
      %vm1844 = vcmask 388352
      %1845 = vst.msk [vmem:[#allocation3] sm:$0xf] %vm1844, %v1842
      %v1846 = vld [vmem:[#allocation2 + $0x3] sm:$0x1]
      %v1847 = vld [vmem:[#allocation2 + $0x13] sm:$0x1]
      %v1848 = vld [vmem:[#allocation2 + $0x23] sm:$0x1]
      %v1849 = vld [vmem:[#allocation2 + $0x33] sm:$0x1]
      %v1854 = vrot.slane %v1847, 7
      %v1855 = vsel %vm1785, %v1854, %v1846
      %v1856 = vsel %vm1787, %v1854, %v1855
      %v1857 = vrot.slane %v1848, 6
      %v1858 = vsel %vm1790, %v1857, %v1856
      %v1859 = vsel %vm1792, %v1857, %v1858
      %v1860 = vrot.slane %v1849, 5
      %v1861 = vsel %vm1795, %v1860, %v1859
      %v1862 = vsel %vm1797, %v1860, %v1861
      %1863 = vrot.lane.b32.xlu0 %v1862, 48
      %v1864 = vpop.permute.xlu0 %1863
      %vm1866 = vcmask 519552
      %1867 = vst.msk [vmem:[#allocation3] sm:$0xf] %vm1866, %v1864
      %v1868 = vld [vmem:[#allocation2 + $0x4] sm:$0x1]
      %v1869 = vld [vmem:[#allocation2 + $0x14] sm:$0x1]
      %v1870 = vld [vmem:[#allocation2 + $0x24] sm:$0x1]
      %v1871 = vld [vmem:[#allocation2 + $0x34] sm:$0x1]
      %v1876 = vrot.slane %v1869, 7
      %v1877 = vsel %vm1785, %v1876, %v1868
      %v1878 = vsel %vm1787, %v1876, %v1877
      %v1879 = vrot.slane %v1870, 6
      %v1880 = vsel %vm1790, %v1879, %v1878
      %v1881 = vsel %vm1792, %v1879, %v1880
      %v1882 = vrot.slane %v1871, 5
      %v1883 = vsel %vm1795, %v1882, %v1881
      %v1884 = vsel %vm1797, %v1882, %v1883
      %1885 = vrot.lane.b32.xlu0 %v1884, 64
      %v1886 = vpop.permute.xlu0 %1885
      %vm1888 = vcmask 650752
      %1889 = vst.msk [vmem:[#allocation3] sm:$0xf] %vm1888, %v1886
      %v1890 = vld [vmem:[#allocation2 + $0x5] sm:$0x1]
      %v1891 = vld [vmem:[#allocation2 + $0x15] sm:$0x1]
      %v1892 = vld [vmem:[#allocation2 + $0x25] sm:$0x1]
      %v1893 = vld [vmem:[#allocation2 + $0x35] sm:$0x1]
      %v1898 = vrot.slane %v1891, 7
      %v1899 = vsel %vm1785, %v1898, %v1890
      %v1900 = vsel %vm1787, %v1898, %v1899
      %v1901 = vrot.slane %v1892, 6
      %v1902 = vsel %vm1790, %v1901, %v1900
      %v1903 = vsel %vm1792, %v1901, %v1902
      %v1904 = vrot.slane %v1893, 5
      %v1905 = vsel %vm1795, %v1904, %v1903
      %v1906 = vsel %vm1797, %v1904, %v1905
      %1907 = vrot.lane.b32.xlu0 %v1906, 80
      %v1908 = vpop.permute.xlu0 %1907
      %vm1910 = vcmask 781952
      %1911 = vst.msk [vmem:[#allocation3] sm:$0xf] %vm1910, %v1908
      %v1912 = vld [vmem:[#allocation2 + $0x6] sm:$0x1]
      %v1913 = vld [vmem:[#allocation2 + $0x16] sm:$0x1]
      %v1914 = vld [vmem:[#allocation2 + $0x26] sm:$0x1]
      %v1915 = vld [vmem:[#allocation2 + $0x36] sm:$0x1]
      %v1920 = vrot.slane %v1913, 7
      %v1921 = vsel %vm1785, %v1920, %v1912
      %v1922 = vsel %vm1787, %v1920, %v1921
      %v1923 = vrot.slane %v1914, 6
      %v1924 = vsel %vm1790, %v1923, %v1922
      %v1925 = vsel %vm1792, %v1923, %v1924
      %v1926 = vrot.slane %v1915, 5
      %v1927 = vsel %vm1795, %v1926, %v1925
      %v1928 = vsel %vm1797, %v1926, %v1927
      %1929 = vrot.lane.b32.xlu0 %v1928, 96
      %v1930 = vpop.permute.xlu0 %1929
      %vm1932 = vcmask 913152
      %1933 = vst.msk [vmem:[#allocation3] sm:$0xf] %vm1932, %v1930
      %v1934 = vld [vmem:[#allocation2 + $0x7] sm:$0x1]
      %v1935 = vld [vmem:[#allocation2 + $0x17] sm:$0x1]
      %v1936 = vld [vmem:[#allocation2 + $0x27] sm:$0x1]
      %v1937 = vld [vmem:[#allocation2 + $0x37] sm:$0x1]
      %v1942 = vrot.slane %v1935, 7
      %v1943 = vsel %vm1785, %v1942, %v1934
      %v1944 = vsel %vm1787, %v1942, %v1943
      %v1945 = vrot.slane %v1936, 6
      %v1946 = vsel %vm1790, %v1945, %v1944
      %v1947 = vsel %vm1792, %v1945, %v1946
      %v1948 = vrot.slane %v1937, 5
      %v1949 = vsel %vm1795, %v1948, %v1947
      %v1950 = vsel %vm1797, %v1948, %v1949
      %1951 = vrot.lane.b32.xlu0 %v1950, 112
      %v1952 = vpop.permute.xlu0 %1951
      %vm1954 = vcmask 1044352
      %1955 = vst.msk [vmem:[#allocation3] sm:$0xf] %vm1954, %v1952
      %v1956 = vld [vmem:[#allocation2 + $0x8] sm:$0x1]
      %v1957 = vld [vmem:[#allocation2 + $0x18] sm:$0x1]
      %v1958 = vld [vmem:[#allocation2 + $0x28] sm:$0x1]
      %v1959 = vld [vmem:[#allocation2 + $0x38] sm:$0x1]
      %v1964 = vrot.slane %v1957, 7
      %v1965 = vsel %vm1785, %v1964, %v1956
      %v1966 = vsel %vm1787, %v1964, %v1965
      %v1967 = vrot.slane %v1958, 6
      %v1968 = vsel %vm1790, %v1967, %v1966
      %v1969 = vsel %vm1792, %v1967, %v1968
      %v1970 = vrot.slane %v1959, 5
      %v1971 = vsel %vm1795, %v1970, %v1969
      %v1972 = vsel %vm1797, %v1970, %v1971
      %1974 = vst.msk [vmem:[#allocation3 + $0x4] sm:$0xf] %vm1800, %v1972
      %v1975 = vld [vmem:[#allocation2 + $0x9] sm:$0x1]
      %v1976 = vld [vmem:[#allocation2 + $0x19] sm:$0x1]
      %v1977 = vld [vmem:[#allocation2 + $0x29] sm:$0x1]
      %v1978 = vld [vmem:[#allocation2 + $0x39] sm:$0x1]
      %v1983 = vrot.slane %v1976, 7
      %v1984 = vsel %vm1785, %v1983, %v1975
      %v1985 = vsel %vm1787, %v1983, %v1984
      %v1986 = vrot.slane %v1977, 6
      %v1987 = vsel %vm1790, %v1986, %v1985
      %v1988 = vsel %vm1792, %v1986, %v1987
      %v1989 = vrot.slane %v1978, 5
      %v1990 = vsel %vm1795, %v1989, %v1988
      %v1991 = vsel %vm1797, %v1989, %v1990
      %1992 = vrot.lane.b32.xlu0 %v1991, 16
      %v1993 = vpop.permute.xlu0 %1992
      %1995 = vst.msk [vmem:[#allocation3 + $0x4] sm:$0xf] %vm1822, %v1993
      %v1996 = vld [vmem:[#allocation2 + $0xa] sm:$0x1]
      %v1997 = vld [vmem:[#allocation2 + $0x1a] sm:$0x1]
      %v1998 = vld [vmem:[#allocation2 + $0x2a] sm:$0x1]
      %v1999 = vld [vmem:[#allocation2 + $0x3a] sm:$0x1]
      %v2004 = vrot.slane %v1997, 7
      %v2005 = vsel %vm1785, %v2004, %v1996
      %v2006 = vsel %vm1787, %v2004, %v2005
      %v2007 = vrot.slane %v1998, 6
      %v2008 = vsel %vm1790, %v2007, %v2006
      %v2009 = vsel %vm1792, %v2007, %v2008
      %v2010 = vrot.slane %v1999, 5
      %v2011 = vsel %vm1795, %v2010, %v2009
      %v2012 = vsel %vm1797, %v2010, %v2011
      %2013 = vrot.lane.b32.xlu0 %v2012, 32
      %v2014 = vpop.permute.xlu0 %2013
      %2016 = vst.msk [vmem:[#allocation3 + $0x4] sm:$0xf] %vm1844, %v2014
      %v2017 = vld [vmem:[#allocation2 + $0xb] sm:$0x1]
      %v2018 = vld [vmem:[#allocation2 + $0x1b] sm:$0x1]
      %v2019 = vld [vmem:[#allocation2 + $0x2b] sm:$0x1]
      %v2020 = vld [vmem:[#allocation2 + $0x3b] sm:$0x1]
      %v2025 = vrot.slane %v2018, 7
      %v2026 = vsel %vm1785, %v2025, %v2017
      %v2027 = vsel %vm1787, %v2025, %v2026
      %v2028 = vrot.slane %v2019, 6
      %v2029 = vsel %vm1790, %v2028, %v2027
      %v2030 = vsel %vm1792, %v2028, %v2029
      %v2031 = vrot.slane %v2020, 5
      %v2032 = vsel %vm1795, %v2031, %v2030
      %v2033 = vsel %vm1797, %v2031, %v2032
      %2034 = vrot.lane.b32.xlu0 %v2033, 48
      %v2035 = vpop.permute.xlu0 %2034
      %2037 = vst.msk [vmem:[#allocation3 + $0x4] sm:$0xf] %vm1866, %v2035
      %v2038 = vld [vmem:[#allocation2 + $0xc] sm:$0x1]
      %v2039 = vld [vmem:[#allocation2 + $0x1c] sm:$0x1]
      %v2040 = vld [vmem:[#allocation2 + $0x2c] sm:$0x1]
      %v2041 = vld [vmem:[#allocation2 + $0x3c] sm:$0x1]
      %v2046 = vrot.slane %v2039, 7
      %v2047 = vsel %vm1785, %v2046, %v2038
      %v2048 = vsel %vm1787, %v2046, %v2047
      %v2049 = vrot.slane %v2040, 6
      %v2050 = vsel %vm1790, %v2049, %v2048
      %v2051 = vsel %vm1792, %v2049, %v2050
      %v2052 = vrot.slane %v2041, 5
      %v2053 = vsel %vm1795, %v2052, %v2051
      %v2054 = vsel %vm1797, %v2052, %v2053
      %2055 = vrot.lane.b32.xlu0 %v2054, 64
      %v2056 = vpop.permute.xlu0 %2055
      %2058 = vst.msk [vmem:[#allocation3 + $0x4] sm:$0xf] %vm1888, %v2056
      %v2059 = vld [vmem:[#allocation2 + $0xd] sm:$0x1]
      %v2060 = vld [vmem:[#allocation2 + $0x1d] sm:$0x1]
      %v2061 = vld [vmem:[#allocation2 + $0x2d] sm:$0x1]
      %v2062 = vld [vmem:[#allocation2 + $0x3d] sm:$0x1]
      %v2067 = vrot.slane %v2060, 7
      %v2068 = vsel %vm1785, %v2067, %v2059
      %v2069 = vsel %vm1787, %v2067, %v2068
      %v2070 = vrot.slane %v2061, 6
      %v2071 = vsel %vm1790, %v2070, %v2069
      %v2072 = vsel %vm1792, %v2070, %v2071
      %v2073 = vrot.slane %v2062, 5
      %v2074 = vsel %vm1795, %v2073, %v2072
      %v2075 = vsel %vm1797, %v2073, %v2074
      %2076 = vrot.lane.b32.xlu0 %v2075, 80
      %v2077 = vpop.permute.xlu0 %2076
      %2079 = vst.msk [vmem:[#allocation3 + $0x4] sm:$0xf] %vm1910, %v2077
      %v2080 = vld [vmem:[#allocation2 + $0xe] sm:$0x1]
      %v2081 = vld [vmem:[#allocation2 + $0x1e] sm:$0x1]
      %v2082 = vld [vmem:[#allocation2 + $0x2e] sm:$0x1]
      %v2083 = vld [vmem:[#allocation2 + $0x3e] sm:$0x1]
      %v2088 = vrot.slane %v2081, 7
      %v2089 = vsel %vm1785, %v2088, %v2080
      %v2090 = vsel %vm1787, %v2088, %v2089
      %v2091 = vrot.slane %v2082, 6
      %v2092 = vsel %vm1790, %v2091, %v2090
      %v2093 = vsel %vm1792, %v2091, %v2092
      %v2094 = vrot.slane %v2083, 5
      %v2095 = vsel %vm1795, %v2094, %v2093
      %v2096 = vsel %vm1797, %v2094, %v2095
      %2097 = vrot.lane.b32.xlu0 %v2096, 96
      %v2098 = vpop.permute.xlu0 %2097
      %2100 = vst.msk [vmem:[#allocation3 + $0x4] sm:$0xf] %vm1932, %v2098
      %v2101 = vld [vmem:[#allocation2 + $0xf] sm:$0x1]
      %v2102 = vld [vmem:[#allocation2 + $0x1f] sm:$0x1]
      %v2103 = vld [vmem:[#allocation2 + $0x2f] sm:$0x1]
      %v2104 = vld [vmem:[#allocation2 + $0x3f] sm:$0x1]
      %v2109 = vrot.slane %v2102, 7
      %v2110 = vsel %vm1785, %v2109, %v2101
      %v2111 = vsel %vm1787, %v2109, %v2110
      %v2112 = vrot.slane %v2103, 6
      %v2113 = vsel %vm1790, %v2112, %v2111
      %v2114 = vsel %vm1792, %v2112, %v2113
      %v2115 = vrot.slane %v2104, 5
      %v2116 = vsel %vm1795, %v2115, %v2114
      %v2117 = vsel %vm1797, %v2115, %v2116
      %2118 = vrot.lane.b32.xlu0 %v2117, 112
      %v2119 = vpop.permute.xlu0 %2118
      %2121 = vst.msk [vmem:[#allocation3 + $0x4] sm:$0xf] %vm1954, %v2119
      %v2122 = vld [vmem:[#allocation3] sm:$0xff]
      %v2123 = vld [vmem:[%s396] sm:$0xff]
      %2125 = vst [vmem:[#allocation1] ss:$2 sm:$0xff] %v2123
      %v2126 = vld.sshfl [vmem:[#allocation1] sm:$0xff pattern:$0x75316420]
      %v2127 = vld.sshfl [vmem:[#allocation1 + $0x8] sm:$0xff pattern:$0x75316420]
      %2130 = vrot.lane.b32.xlu0 %v2126, 17
      %v2131 = vpop.permute.xlu0 %2130
      %2132 = vrot.lane.b32.xlu0 %v2127, 17
      %v2133 = vpop.permute.xlu0 %2132
      %v2134 = vlaneseq
      %v2135 = vand.u32 %v2134, 127
      %vm2136 = vcmp.lt.s32.totalorder %v2135, 17
      %v2137 = vsel %vm2136, %v2131, %v2133
      %v2138 = vsel %vm2136, %v2133, %v2131
      %v2140 = vperm.slane %v407, 0
      %v2141 = vperm.slane %v407, 1
      %v2144 = vmul.f32 %v2138, %v2140
      %v2145 = vmul.f32 %v2137, %v2141
      %2146 = vst [vmem:[#allocation4] sm:$0xf] %v2144
      %2147 = vst [vmem:[#allocation4 + $0x8] sm:$0xf] %v2145
      %2148 = vst [vmem:[#allocation1] ss:$2 sm:$0xff] %v2123
      %v2149 = vld.sshfl [vmem:[#allocation1] sm:$0xff pattern:$0x75316420]
      %v2150 = vld.sshfl [vmem:[#allocation1 + $0x8] sm:$0xff pattern:$0x75316420]
      %2153 = vrot.lane.b32.xlu0 %v2149, 16
      %v2154 = vpop.permute.xlu0 %2153
      %2155 = vrot.lane.b32.xlu0 %v2150, 16
      %v2156 = vpop.permute.xlu0 %2155
      %vm2157 = vcmp.lt.s32.totalorder %v2135, 16
      %v2158 = vsel %vm2157, %v2154, %v2156
      %v2159 = vsel %vm2157, %v2156, %v2154
      %v2161 = vperm.slane %v409, 0
      %v2162 = vperm.slane %v409, 1
      %v2165 = vmul.f32 %v2159, %v2161
      %v2166 = vmul.f32 %v2158, %v2162
      %2167 = vst [vmem:[#allocation4 + $0x10] sm:$0xf] %v2165
      %2168 = vst [vmem:[#allocation4 + $0x18] sm:$0xf] %v2166
      %2169 = vst [vmem:[#allocation1] ss:$2 sm:$0xff] %v2123
      %v2170 = vld.sshfl [vmem:[#allocation1] sm:$0xff pattern:$0x75316420]
      %v2171 = vld.sshfl [vmem:[#allocation1 + $0x8] sm:$0xff pattern:$0x75316420]
      %2174 = vrot.lane.b32.xlu0 %v2170, 15
      %v2175 = vpop.permute.xlu0 %2174
      %2176 = vrot.lane.b32.xlu0 %v2171, 15
      %v2177 = vpop.permute.xlu0 %2176
      %vm2178 = vcmp.lt.s32.totalorder %v2135, 15
      %v2179 = vsel %vm2178, %v2175, %v2177
      %v2180 = vsel %vm2178, %v2177, %v2175
      %v2182 = vperm.slane %v411, 0
      %v2183 = vperm.slane %v411, 1
      %v2186 = vmul.f32 %v2180, %v2182
      %v2187 = vmul.f32 %v2179, %v2183
      %2188 = vst [vmem:[#allocation4 + $0x20] sm:$0xf] %v2186
      %2189 = vst [vmem:[#allocation4 + $0x28] sm:$0xf] %v2187
      %2190 = vst [vmem:[#allocation1] ss:$2 sm:$0xff] %v2123
      %v2191 = vld.sshfl [vmem:[#allocation1] sm:$0xff pattern:$0x75316420]
      %v2192 = vld.sshfl [vmem:[#allocation1 + $0x8] sm:$0xff pattern:$0x75316420]
      %2195 = vrot.lane.b32.xlu0 %v2191, 1
      %v2196 = vpop.permute.xlu0 %2195
      %2197 = vrot.lane.b32.xlu0 %v2192, 1
      %v2198 = vpop.permute.xlu0 %2197
      %vm2199 = vcmp.lt.s32.totalorder %v2135, 1
      %v2200 = vsel %vm2199, %v2196, %v2198
      %v2201 = vsel %vm2199, %v2198, %v2196
      %v2203 = vperm.slane %v413, 0
      %v2204 = vperm.slane %v413, 1
      %v2207 = vmul.f32 %v2201, %v2203
      %v2208 = vmul.f32 %v2200, %v2204
      %2209 = vst [vmem:[#allocation4 + $0x30] sm:$0xf] %v2207
      %2210 = vst [vmem:[#allocation4 + $0x38] sm:$0xf] %v2208
      %2211 = vst [vmem:[#allocation1] ss:$2 sm:$0xff] %v2123
      %v2212 = vld.sshfl [vmem:[#allocation1] sm:$0xff pattern:$0x75316420]
      %v2213 = vld.sshfl [vmem:[#allocation1 + $0x8] sm:$0xff pattern:$0x75316420]
      %2216 = vst [vmem:[#allocation4 + $0x40] sm:$0xf] %v2212
      %2217 = vst [vmem:[#allocation4 + $0x48] sm:$0xf] %v2213
      %2218 = vst [vmem:[#allocation1] ss:$2 sm:$0xff] %v2123
      %v2219 = vld.sshfl [vmem:[#allocation1] sm:$0xff pattern:$0x75316420]
      %v2220 = vld.sshfl [vmem:[#allocation1 + $0x8] sm:$0xff pattern:$0x75316420]
      %2223 = vrot.lane.b32.xlu0 %v2219, 127
      %v2224 = vpop.permute.xlu0 %2223
      %2225 = vrot.lane.b32.xlu0 %v2220, 127
      %v2226 = vpop.permute.xlu0 %2225
      %vm2227 = vcmp.lt.s32.totalorder %v2135, 127
      %v2228 = vsel %vm2227, %v2224, %v2226
      %v2229 = vsel %vm2227, %v2226, %v2224
      %v2231 = vperm.slane %v415, 0
      %v2232 = vperm.slane %v415, 1
      %v2235 = vmul.f32 %v2228, %v2231
      %v2236 = vmul.f32 %v2229, %v2232
      %2237 = vst [vmem:[#allocation4 + $0x50] sm:$0xf] %v2235
      %2238 = vst [vmem:[#allocation4 + $0x58] sm:$0xf] %v2236
      %2239 = vst [vmem:[#allocation1] ss:$2 sm:$0xff] %v2123
      %v2240 = vld.sshfl [vmem:[#allocation1] sm:$0xff pattern:$0x75316420]
      %v2241 = vld.sshfl [vmem:[#allocation1 + $0x8] sm:$0xff pattern:$0x75316420]
      %2244 = vrot.lane.b32.xlu0 %v2240, 113
      %v2245 = vpop.permute.xlu0 %2244
      %2246 = vrot.lane.b32.xlu0 %v2241, 113
      %v2247 = vpop.permute.xlu0 %2246
      %vm2248 = vcmp.lt.s32.totalorder %v2135, 113
      %v2249 = vsel %vm2248, %v2245, %v2247
      %v2250 = vsel %vm2248, %v2247, %v2245
      %v2252 = vperm.slane %v417, 0
      %v2253 = vperm.slane %v417, 1
      %v2256 = vmul.f32 %v2249, %v2252
      %v2257 = vmul.f32 %v2250, %v2253
      %2258 = vst [vmem:[#allocation4 + $0x60] sm:$0xf] %v2256
      %2259 = vst [vmem:[#allocation4 + $0x68] sm:$0xf] %v2257
      %2260 = vst [vmem:[#allocation1] ss:$2 sm:$0xff] %v2123
      %v2261 = vld.sshfl [vmem:[#allocation1] sm:$0xff pattern:$0x75316420]
      %v2262 = vld.sshfl [vmem:[#allocation1 + $0x8] sm:$0xff pattern:$0x75316420]
      %2265 = vrot.lane.b32.xlu0 %v2261, 112
      %v2266 = vpop.permute.xlu0 %2265
      %2267 = vrot.lane.b32.xlu0 %v2262, 112
      %v2268 = vpop.permute.xlu0 %2267
      %vm2269 = vcmp.lt.s32.totalorder %v2135, 112
      %v2270 = vsel %vm2269, %v2266, %v2268
      %v2271 = vsel %vm2269, %v2268, %v2266
      %v2273 = vperm.slane %v419, 0
      %v2274 = vperm.slane %v419, 1
      %v2277 = vmul.f32 %v2270, %v2273
      %v2278 = vmul.f32 %v2271, %v2274
      %2279 = vst [vmem:[#allocation4 + $0x70] sm:$0xf] %v2277
      %2280 = vst [vmem:[#allocation4 + $0x78] sm:$0xf] %v2278
      %2281 = vst [vmem:[#allocation1] ss:$2 sm:$0xff] %v2123
      %v2282 = vld.sshfl [vmem:[#allocation1] sm:$0xff pattern:$0x75316420]
      %v2283 = vld.sshfl [vmem:[#allocation1 + $0x8] sm:$0xff pattern:$0x75316420]
      %2286 = vrot.lane.b32.xlu0 %v2282, 111
      %v2287 = vpop.permute.xlu0 %2286
      %2288 = vrot.lane.b32.xlu0 %v2283, 111
      %v2289 = vpop.permute.xlu0 %2288
      %vm2290 = vcmp.lt.s32.totalorder %v2135, 111
      %v2291 = vsel %vm2290, %v2287, %v2289
      %v2292 = vsel %vm2290, %v2289, %v2287
      %v2294 = vperm.slane %v421, 0
      %v2295 = vperm.slane %v421, 1
      %v2298 = vmul.f32 %v2291, %v2294
      %v2299 = vmul.f32 %v2292, %v2295
      %2300 = vst [vmem:[#allocation4 + $0x80] sm:$0xf] %v2298
      %2301 = vst [vmem:[#allocation4 + $0x88] sm:$0xf] %v2299
      %2303 = vst [vmem:[#allocation1] ss:$2 sm:$0xff] %v2122
      %v2304 = vld.sshfl [vmem:[#allocation1] sm:$0xff pattern:$0x75316420]
      %v2305 = vld.sshfl [vmem:[#allocation1 + $0x8] sm:$0xff pattern:$0x75316420]
      %2308 = vrot.lane.b32.xlu0 %v2304, 17
      %v2309 = vpop.permute.xlu0 %2308
      %2310 = vrot.lane.b32.xlu0 %v2305, 17
      %v2311 = vpop.permute.xlu0 %2310
      %v2312 = vsel %vm2136, %v2309, %v2311
      %v2313 = vsel %vm2136, %v2311, %v2309
      %v2314 = vmul.f32 %v2313, %v2140
      %v2315 = vmul.f32 %v2312, %v2141
      %v2318 = vrot.slane %v2314, 4
      %v2319 = vrot.slane %v2315, 4
      %2322 = vst [vmem:[#allocation4] sm:$0xf0] %v2318
      %2323 = vst [vmem:[#allocation4 + $0x8] sm:$0xf0] %v2319
      %2324 = vst [vmem:[#allocation1] ss:$2 sm:$0xff] %v2122
      %v2325 = vld.sshfl [vmem:[#allocation1] sm:$0xff pattern:$0x75316420]
      %v2326 = vld.sshfl [vmem:[#allocation1 + $0x8] sm:$0xff pattern:$0x75316420]
      %2329 = vrot.lane.b32.xlu0 %v2325, 16
      %v2330 = vpop.permute.xlu0 %2329
      %2331 = vrot.lane.b32.xlu0 %v2326, 16
      %v2332 = vpop.permute.xlu0 %2331
      %v2333 = vsel %vm2157, %v2330, %v2332
      %v2334 = vsel %vm2157, %v2332, %v2330
      %v2335 = vmul.f32 %v2334, %v2161
      %v2336 = vmul.f32 %v2333, %v2162
      %v2339 = vrot.slane %v2335, 4
      %v2340 = vrot.slane %v2336, 4
      %2343 = vst [vmem:[#allocation4 + $0x10] sm:$0xf0] %v2339
      %2344 = vst [vmem:[#allocation4 + $0x18] sm:$0xf0] %v2340
      %2345 = vst [vmem:[#allocation1] ss:$2 sm:$0xff] %v2122
      %v2346 = vld.sshfl [vmem:[#allocation1] sm:$0xff pattern:$0x75316420]
      %v2347 = vld.sshfl [vmem:[#allocation1 + $0x8] sm:$0xff pattern:$0x75316420]
      %2350 = vrot.lane.b32.xlu0 %v2346, 15
      %v2351 = vpop.permute.xlu0 %2350
      %2352 = vrot.lane.b32.xlu0 %v2347, 15
      %v2353 = vpop.permute.xlu0 %2352
      %v2354 = vsel %vm2178, %v2351, %v2353
      %v2355 = vsel %vm2178, %v2353, %v2351
      %v2356 = vmul.f32 %v2355, %v2182
      %v2357 = vmul.f32 %v2354, %v2183
      %v2360 = vrot.slane %v2356, 4
      %v2361 = vrot.slane %v2357, 4
      %2364 = vst [vmem:[#allocation4 + $0x20] sm:$0xf0] %v2360
      %2365 = vst [vmem:[#allocation4 + $0x28] sm:$0xf0] %v2361
      %2366 = vst [vmem:[#allocation1] ss:$2 sm:$0xff] %v2122
      %v2367 = vld.sshfl [vmem:[#allocation1] sm:$0xff pattern:$0x75316420]
      %v2368 = vld.sshfl [vmem:[#allocation1 + $0x8] sm:$0xff pattern:$0x75316420]
      %2371 = vrot.lane.b32.xlu0 %v2367, 1
      %v2372 = vpop.permute.xlu0 %2371
      %2373 = vrot.lane.b32.xlu0 %v2368, 1
      %v2374 = vpop.permute.xlu0 %2373
      %v2375 = vsel %vm2199, %v2372, %v2374
      %v2376 = vsel %vm2199, %v2374, %v2372
      %v2377 = vmul.f32 %v2376, %v2203
      %v2378 = vmul.f32 %v2375, %v2204
      %v2381 = vrot.slane %v2377, 4
      %v2382 = vrot.slane %v2378, 4
      %2385 = vst [vmem:[#allocation4 + $0x30] sm:$0xf0] %v2381
      %2386 = vst [vmem:[#allocation4 + $0x38] sm:$0xf0] %v2382
      %s2387 = scalar_lea.vmem [#allocation1], 1
      %2388 = vst [vmem:[%s2387] ss:$2 sm:$0xff] %v2122
      %v2389 = vld.sshfl [vmem:[#allocation1] sm:$0xff pattern:$0x75316420]
      %v2390 = vld.sshfl [vmem:[#allocation1 + $0x8] sm:$0xff pattern:$0x75316420]
      %2393 = vst [vmem:[#allocation4 + $0x40] sm:$0xf0] %v2389
      %2394 = vst [vmem:[#allocation4 + $0x48] sm:$0xf0] %v2390
      %2395 = vst [vmem:[#allocation1] ss:$2 sm:$0xff] %v2122
      %v2396 = vld.sshfl [vmem:[#allocation1] sm:$0xff pattern:$0x75316420]
      %v2397 = vld.sshfl [vmem:[#allocation1 + $0x8] sm:$0xff pattern:$0x75316420]
      %2400 = vrot.lane.b32.xlu0 %v2396, 127
      %v2401 = vpop.permute.xlu0 %2400
      %2402 = vrot.lane.b32.xlu0 %v2397, 127
      %v2403 = vpop.permute.xlu0 %2402
      %v2404 = vsel %vm2227, %v2401, %v2403
      %v2405 = vsel %vm2227, %v2403, %v2401
      %v2406 = vmul.f32 %v2404, %v2231
      %v2407 = vmul.f32 %v2405, %v2232
      %v2410 = vrot.slane %v2406, 4
      %v2411 = vrot.slane %v2407, 4
      %2414 = vst [vmem:[#allocation4 + $0x50] sm:$0xf0] %v2410
      %2415 = vst [vmem:[#allocation4 + $0x58] sm:$0xf0] %v2411
      %2416 = vst [vmem:[#allocation1] ss:$2 sm:$0xff] %v2122
      %v2417 = vld.sshfl [vmem:[#allocation1] sm:$0xff pattern:$0x75316420]
      %v2418 = vld.sshfl [vmem:[#allocation1 + $0x8] sm:$0xff pattern:$0x75316420]
      %2421 = vrot.lane.b32.xlu0 %v2417, 113
      %v2422 = vpop.permute.xlu0 %2421
      %2423 = vrot.lane.b32.xlu0 %v2418, 113
      %v2424 = vpop.permute.xlu0 %2423
      %v2425 = vsel %vm2248, %v2422, %v2424
      %v2426 = vsel %vm2248, %v2424, %v2422
      %v2427 = vmul.f32 %v2425, %v2252
      %v2428 = vmul.f32 %v2426, %v2253
      %v2431 = vrot.slane %v2427, 4
      %v2432 = vrot.slane %v2428, 4
      %2435 = vst [vmem:[#allocation4 + $0x60] sm:$0xf0] %v2431
      %2436 = vst [vmem:[#allocation4 + $0x68] sm:$0xf0] %v2432
      %2437 = vst [vmem:[#allocation1] ss:$2 sm:$0xff] %v2122
      %v2438 = vld.sshfl [vmem:[#allocation1] sm:$0xff pattern:$0x75316420]
      %v2439 = vld.sshfl [vmem:[#allocation1 + $0x8] sm:$0xff pattern:$0x75316420]
      %2442 = vrot.lane.b32.xlu0 %v2438, 112
      %v2443 = vpop.permute.xlu0 %2442
      %2444 = vrot.lane.b32.xlu0 %v2439, 112
      %v2445 = vpop.permute.xlu0 %2444
      %v2446 = vsel %vm2269, %v2443, %v2445
      %v2447 = vsel %vm2269, %v2445, %v2443
      %v2448 = vmul.f32 %v2446, %v2273
      %v2449 = vmul.f32 %v2447, %v2274
      %v2452 = vrot.slane %v2448, 4
      %v2453 = vrot.slane %v2449, 4
      %2456 = vst [vmem:[#allocation4 + $0x70] sm:$0xf0] %v2452
      %2457 = vst [vmem:[#allocation4 + $0x78] sm:$0xf0] %v2453
      %2458 = vst [vmem:[#allocation1] ss:$2 sm:$0xff] %v2122
      %v2459 = vld.sshfl [vmem:[#allocation1] sm:$0xff pattern:$0x75316420]
      %v2460 = vld.sshfl [vmem:[#allocation1 + $0x8] sm:$0xff pattern:$0x75316420]
      %2463 = vrot.lane.b32.xlu0 %v2459, 111
      %v2464 = vpop.permute.xlu0 %2463
      %2465 = vrot.lane.b32.xlu0 %v2460, 111
      %v2466 = vpop.permute.xlu0 %2465
      %v2467 = vsel %vm2290, %v2464, %v2466
      %v2468 = vsel %vm2290, %v2466, %v2464
      %v2469 = vmul.f32 %v2467, %v2294
      %v2470 = vmul.f32 %v2468, %v2295
      %v2473 = vrot.slane %v2469, 4
      %v2474 = vrot.slane %v2470, 4
      %2477 = vst [vmem:[#allocation4 + $0x80] sm:$0xf0] %v2473
      %2478 = vst [vmem:[#allocation4 + $0x88] sm:$0xf0] %v2474
      %v2479 = vld [vmem:[%s5] sm:$0xf]
      %v2480 = vld [vmem:[#allocation4] sm:$0xff]
      %v2481 = vld [vmem:[#allocation4 + $0x8] sm:$0xff]
      %v2482 = vld [vmem:[#allocation4 + $0x10] sm:$0xff]
      %v2483 = vld [vmem:[#allocation4 + $0x18] sm:$0xff]
      %v2484 = vld [vmem:[#allocation4 + $0x20] sm:$0xff]
      %v2485 = vld [vmem:[#allocation4 + $0x28] sm:$0xff]
      %v2486 = vld [vmem:[#allocation4 + $0x30] sm:$0xff]
      %v2487 = vld [vmem:[#allocation4 + $0x38] sm:$0xff]
      %v2488 = vld [vmem:[#allocation4 + $0x40] sm:$0xff]
      %v2489 = vld [vmem:[#allocation4 + $0x48] sm:$0xff]
      %v2490 = vld [vmem:[#allocation4 + $0x50] sm:$0xff]
      %v2491 = vld [vmem:[#allocation4 + $0x58] sm:$0xff]
      %v2492 = vld [vmem:[#allocation4 + $0x60] sm:$0xff]
      %v2493 = vld [vmem:[#allocation4 + $0x68] sm:$0xff]
      %v2494 = vld [vmem:[#allocation4 + $0x70] sm:$0xff]
      %v2495 = vld [vmem:[#allocation4 + $0x78] sm:$0xff]
      %v2496 = vld [vmem:[#allocation4 + $0x80] sm:$0xff]
      %v2497 = vld [vmem:[#allocation4 + $0x88] sm:$0xff]
      %vm2498 = vcmask 588800
      %v2500 = vsel %vm2498, %v2479, 0
      %2502 = vmatpush.msra.mxu0 0.0
      %2503 = vmatpush.msra.mxu0 0.0
      %2504 = vmatpush.msra.mxu0 0.0
      %2505 = vmatpush.msra.mxu0 0.0
      %2506 = vmatpush.msra.mxu0 0.0
      %2507 = vmatpush.msra.mxu0 0.0
      %2508 = vmatpush.msra.mxu0 0.0
      %v2509 = vand.u32 %v2496, 4294901760
      %2510 = vmatpush.msra.mxu0 %v2509
      %v2511 = vand.u32 %v2494, 4294901760
      %2512 = vmatpush.msra.mxu0 %v2511
      %v2513 = vand.u32 %v2492, 4294901760
      %2514 = vmatpush.msra.mxu0 %v2513
      %v2515 = vand.u32 %v2490, 4294901760
      %2516 = vmatpush.msra.mxu0 %v2515
      %v2517 = vand.u32 %v2488, 4294901760
      %2518 = vmatpush.msra.mxu0 %v2517
      %v2519 = vand.u32 %v2486, 4294901760
      %2520 = vmatpush.msra.mxu0 %v2519
      %v2521 = vand.u32 %v2484, 4294901760
      %2522 = vmatpush.msra.mxu0 %v2521
      %v2523 = vand.u32 %v2482, 4294901760
      %2524 = vmatpush.msra.mxu0 %v2523
      %v2525 = vand.u32 %v2480, 4294901760
      %2526 = vmatpush.msra.mxu0 %v2525
      %v2527 = vand.u32 %v2500, 4294901760
      %v2528 = vsub.f32 %v2500, %v2527
      %v2529 = vand.u32 %v2528, 4294901760
      %v2530 = vsub.f32 %v2528, %v2529
      %v2531 = vand.u32 %v2530, 4294901760
      %2532 = vmatmul.f32.gmra.mxu0 %v2531
      %v2533 = vpop.f32.mrf.mxu0
      %v2534 = vadd.f32 0.0, %v2533
      %2535 = vdwg.mxu0
      %2536 = vmatpush.msra.mxu0 0.0
      %2537 = vmatpush.msra.mxu0 0.0
      %2538 = vmatpush.msra.mxu0 0.0
      %2539 = vmatpush.msra.mxu0 0.0
      %2540 = vmatpush.msra.mxu0 0.0
      %2541 = vmatpush.msra.mxu0 0.0
      %2542 = vmatpush.msra.mxu0 0.0
      %v2543 = vand.u32 %v2496, 4294901760
      %v2544 = vsub.f32 %v2496, %v2543
      %v2545 = vand.u32 %v2544, 4294901760
      %v2546 = vsub.f32 %v2544, %v2545
      %v2547 = vand.u32 %v2546, 4294901760
      %2548 = vmatpush.msra.mxu0 %v2547
      %v2549 = vand.u32 %v2494, 4294901760
      %v2550 = vsub.f32 %v2494, %v2549
      %v2551 = vand.u32 %v2550, 4294901760
      %v2552 = vsub.f32 %v2550, %v2551
      %v2553 = vand.u32 %v2552, 4294901760
      %2554 = vmatpush.msra.mxu0 %v2553
      %v2555 = vand.u32 %v2492, 4294901760
      %v2556 = vsub.f32 %v2492, %v2555
      %v2557 = vand.u32 %v2556, 4294901760
      %v2558 = vsub.f32 %v2556, %v2557
      %v2559 = vand.u32 %v2558, 4294901760
      %2560 = vmatpush.msra.mxu0 %v2559
      %v2561 = vand.u32 %v2490, 4294901760
      %v2562 = vsub.f32 %v2490, %v2561
      %v2563 = vand.u32 %v2562, 4294901760
      %v2564 = vsub.f32 %v2562, %v2563
      %v2565 = vand.u32 %v2564, 4294901760
      %2566 = vmatpush.msra.mxu0 %v2565
      %v2567 = vand.u32 %v2488, 4294901760
      %v2568 = vsub.f32 %v2488, %v2567
      %v2569 = vand.u32 %v2568, 4294901760
      %v2570 = vsub.f32 %v2568, %v2569
      %v2571 = vand.u32 %v2570, 4294901760
      %2572 = vmatpush.msra.mxu0 %v2571
      %v2573 = vand.u32 %v2486, 4294901760
      %v2574 = vsub.f32 %v2486, %v2573
      %v2575 = vand.u32 %v2574, 4294901760
      %v2576 = vsub.f32 %v2574, %v2575
      %v2577 = vand.u32 %v2576, 4294901760
      %2578 = vmatpush.msra.mxu0 %v2577
      %v2579 = vand.u32 %v2484, 4294901760
      %v2580 = vsub.f32 %v2484, %v2579
      %v2581 = vand.u32 %v2580, 4294901760
      %v2582 = vsub.f32 %v2580, %v2581
      %v2583 = vand.u32 %v2582, 4294901760
      %2584 = vmatpush.msra.mxu0 %v2583
      %v2585 = vand.u32 %v2482, 4294901760
      %v2586 = vsub.f32 %v2482, %v2585
      %v2587 = vand.u32 %v2586, 4294901760
      %v2588 = vsub.f32 %v2586, %v2587
      %v2589 = vand.u32 %v2588, 4294901760
      %2590 = vmatpush.msra.mxu0 %v2589
      %v2591 = vand.u32 %v2480, 4294901760
      %v2592 = vsub.f32 %v2480, %v2591
      %v2593 = vand.u32 %v2592, 4294901760
      %v2594 = vsub.f32 %v2592, %v2593
      %v2595 = vand.u32 %v2594, 4294901760
      %2596 = vmatpush.msra.mxu0 %v2595
      %v2597 = vand.u32 %v2500, 4294901760
      %2598 = vmatmul.f32.gmra.mxu0 %v2597
      %v2599 = vpop.f32.mrf.mxu0
      %v2600 = vadd.f32 %v2534, %v2599
      %2601 = vdwg.mxu0
      %2602 = vmatpush.msra.mxu0 0.0
      %2603 = vmatpush.msra.mxu0 0.0
      %2604 = vmatpush.msra.mxu0 0.0
      %2605 = vmatpush.msra.mxu0 0.0
      %2606 = vmatpush.msra.mxu0 0.0
      %2607 = vmatpush.msra.mxu0 0.0
      %2608 = vmatpush.msra.mxu0 0.0
      %v2609 = vand.u32 %v2496, 4294901760
      %v2610 = vsub.f32 %v2496, %v2609
      %2611 = vmatpush.msra.mxu0 %v2610
      %v2612 = vand.u32 %v2494, 4294901760
      %v2613 = vsub.f32 %v2494, %v2612
      %2614 = vmatpush.msra.mxu0 %v2613
      %v2615 = vand.u32 %v2492, 4294901760
      %v2616 = vsub.f32 %v2492, %v2615
      %2617 = vmatpush.msra.mxu0 %v2616
      %v2618 = vand.u32 %v2490, 4294901760
      %v2619 = vsub.f32 %v2490, %v2618
      %2620 = vmatpush.msra.mxu0 %v2619
      %v2621 = vand.u32 %v2488, 4294901760
      %v2622 = vsub.f32 %v2488, %v2621
      %2623 = vmatpush.msra.mxu0 %v2622
      %v2624 = vand.u32 %v2486, 4294901760
      %v2625 = vsub.f32 %v2486, %v2624
      %2626 = vmatpush.msra.mxu0 %v2625
      %v2627 = vand.u32 %v2484, 4294901760
      %v2628 = vsub.f32 %v2484, %v2627
      %2629 = vmatpush.msra.mxu0 %v2628
      %v2630 = vand.u32 %v2482, 4294901760
      %v2631 = vsub.f32 %v2482, %v2630
      %2632 = vmatpush.msra.mxu0 %v2631
      %v2633 = vand.u32 %v2480, 4294901760
      %v2634 = vsub.f32 %v2480, %v2633
      %2635 = vmatpush.msra.mxu0 %v2634
      %v2636 = vand.u32 %v2500, 4294901760
      %v2637 = vsub.f32 %v2500, %v2636
      %2638 = vmatmul.f32.gmra.mxu0 %v2637
      %v2639 = vpop.f32.mrf.mxu0
      %v2640 = vadd.f32 %v2600, %v2639
      %2641 = vdwg.mxu0
      %2642 = vmatpush.msra.mxu0 0.0
      %2643 = vmatpush.msra.mxu0 0.0
      %2644 = vmatpush.msra.mxu0 0.0
      %2645 = vmatpush.msra.mxu0 0.0
      %2646 = vmatpush.msra.mxu0 0.0
      %2647 = vmatpush.msra.mxu0 0.0
      %2648 = vmatpush.msra.mxu0 0.0
      %v2649 = vand.u32 %v2496, 4294901760
      %2650 = vmatpush.msra.mxu0 %v2649
      %v2651 = vand.u32 %v2494, 4294901760
      %2652 = vmatpush.msra.mxu0 %v2651
      %v2653 = vand.u32 %v2492, 4294901760
      %2654 = vmatpush.msra.mxu0 %v2653
      %v2655 = vand.u32 %v2490, 4294901760
      %2656 = vmatpush.msra.mxu0 %v2655
      %v2657 = vand.u32 %v2488, 4294901760
      %2658 = vmatpush.msra.mxu0 %v2657
      %v2659 = vand.u32 %v2486, 4294901760
      %2660 = vmatpush.msra.mxu0 %v2659
      %v2661 = vand.u32 %v2484, 4294901760
      %2662 = vmatpush.msra.mxu0 %v2661
      %v2663 = vand.u32 %v2482, 4294901760
      %2664 = vmatpush.msra.mxu0 %v2663
      %v2665 = vand.u32 %v2480, 4294901760
      %2666 = vmatpush.msra.mxu0 %v2665
      %v2667 = vand.u32 %v2500, 4294901760
      %v2668 = vsub.f32 %v2500, %v2667
      %v2669 = vand.u32 %v2668, 4294901760
      %2670 = vmatmul.f32.gmra.mxu0 %v2669
      %v2671 = vpop.f32.mrf.mxu0
      %v2672 = vadd.f32 %v2640, %v2671
      %2673 = vdwg.mxu0
      %2674 = vmatpush.msra.mxu0 0.0
      %2675 = vmatpush.msra.mxu0 0.0
      %2676 = vmatpush.msra.mxu0 0.0
      %2677 = vmatpush.msra.mxu0 0.0
      %2678 = vmatpush.msra.mxu0 0.0
      %2679 = vmatpush.msra.mxu0 0.0
      %2680 = vmatpush.msra.mxu0 0.0
      %v2681 = vand.u32 %v2496, 4294901760
      %v2682 = vsub.f32 %v2496, %v2681
      %v2683 = vand.u32 %v2682, 4294901760
      %2684 = vmatpush.msra.mxu0 %v2683
      %v2685 = vand.u32 %v2494, 4294901760
      %v2686 = vsub.f32 %v2494, %v2685
      %v2687 = vand.u32 %v2686, 4294901760
      %2688 = vmatpush.msra.mxu0 %v2687
      %v2689 = vand.u32 %v2492, 4294901760
      %v2690 = vsub.f32 %v2492, %v2689
      %v2691 = vand.u32 %v2690, 4294901760
      %2692 = vmatpush.msra.mxu0 %v2691
      %v2693 = vand.u32 %v2490, 4294901760
      %v2694 = vsub.f32 %v2490, %v2693
      %v2695 = vand.u32 %v2694, 4294901760
      %2696 = vmatpush.msra.mxu0 %v2695
      %v2697 = vand.u32 %v2488, 4294901760
      %v2698 = vsub.f32 %v2488, %v2697
      %v2699 = vand.u32 %v2698, 4294901760
      %2700 = vmatpush.msra.mxu0 %v2699
      %v2701 = vand.u32 %v2486, 4294901760
      %v2702 = vsub.f32 %v2486, %v2701
      %v2703 = vand.u32 %v2702, 4294901760
      %2704 = vmatpush.msra.mxu0 %v2703
      %v2705 = vand.u32 %v2484, 4294901760
      %v2706 = vsub.f32 %v2484, %v2705
      %v2707 = vand.u32 %v2706, 4294901760
      %2708 = vmatpush.msra.mxu0 %v2707
      %v2709 = vand.u32 %v2482, 4294901760
      %v2710 = vsub.f32 %v2482, %v2709
      %v2711 = vand.u32 %v2710, 4294901760
      %2712 = vmatpush.msra.mxu0 %v2711
      %v2713 = vand.u32 %v2480, 4294901760
      %v2714 = vsub.f32 %v2480, %v2713
      %v2715 = vand.u32 %v2714, 4294901760
      %2716 = vmatpush.msra.mxu0 %v2715
      %v2717 = vand.u32 %v2500, 4294901760
      %2718 = vmatmul.f32.gmra.mxu0 %v2717
      %v2719 = vpop.f32.mrf.mxu0
      %v2720 = vadd.f32 %v2672, %v2719
      %2721 = vdwg.mxu0
      %2722 = vmatpush.msra.mxu0 0.0
      %2723 = vmatpush.msra.mxu0 0.0
      %2724 = vmatpush.msra.mxu0 0.0
      %2725 = vmatpush.msra.mxu0 0.0
      %2726 = vmatpush.msra.mxu0 0.0
      %2727 = vmatpush.msra.mxu0 0.0
      %2728 = vmatpush.msra.mxu0 0.0
      %v2729 = vand.u32 %v2496, 4294901760
      %2730 = vmatpush.msra.mxu0 %v2729
      %v2731 = vand.u32 %v2494, 4294901760
      %2732 = vmatpush.msra.mxu0 %v2731
      %v2733 = vand.u32 %v2492, 4294901760
      %2734 = vmatpush.msra.mxu0 %v2733
      %v2735 = vand.u32 %v2490, 4294901760
      %2736 = vmatpush.msra.mxu0 %v2735
      %v2737 = vand.u32 %v2488, 4294901760
      %2738 = vmatpush.msra.mxu0 %v2737
      %v2739 = vand.u32 %v2486, 4294901760
      %2740 = vmatpush.msra.mxu0 %v2739
      %v2741 = vand.u32 %v2484, 4294901760
      %2742 = vmatpush.msra.mxu0 %v2741
      %v2743 = vand.u32 %v2482, 4294901760
      %2744 = vmatpush.msra.mxu0 %v2743
      %v2745 = vand.u32 %v2480, 4294901760
      %2746 = vmatpush.msra.mxu0 %v2745
      %v2747 = vand.u32 %v2500, 4294901760
      %2748 = vmatmul.f32.gmra.mxu0 %v2747
      %v2749 = vpop.f32.mrf.mxu0
      %v2750 = vadd.f32 %v2720, %v2749
      %2751 = vdwg.mxu0
      %2752 = vmatpush.msra.mxu0 0.0
      %2753 = vmatpush.msra.mxu0 0.0
      %2754 = vmatpush.msra.mxu0 0.0
      %2755 = vmatpush.msra.mxu0 0.0
      %2756 = vmatpush.msra.mxu0 0.0
      %2757 = vmatpush.msra.mxu0 0.0
      %2758 = vmatpush.msra.mxu0 0.0
      %v2759 = vand.u32 %v2497, 4294901760
      %2760 = vmatpush.msra.mxu0 %v2759
      %v2761 = vand.u32 %v2495, 4294901760
      %2762 = vmatpush.msra.mxu0 %v2761
      %v2763 = vand.u32 %v2493, 4294901760
      %2764 = vmatpush.msra.mxu0 %v2763
      %v2765 = vand.u32 %v2491, 4294901760
      %2766 = vmatpush.msra.mxu0 %v2765
      %v2767 = vand.u32 %v2489, 4294901760
      %2768 = vmatpush.msra.mxu0 %v2767
      %v2769 = vand.u32 %v2487, 4294901760
      %2770 = vmatpush.msra.mxu0 %v2769
      %v2771 = vand.u32 %v2485, 4294901760
      %2772 = vmatpush.msra.mxu0 %v2771
      %v2773 = vand.u32 %v2483, 4294901760
      %2774 = vmatpush.msra.mxu0 %v2773
      %v2775 = vand.u32 %v2481, 4294901760
      %2776 = vmatpush.msra.mxu0 %v2775
      %v2777 = vand.u32 %v2500, 4294901760
      %v2778 = vsub.f32 %v2500, %v2777
      %v2779 = vand.u32 %v2778, 4294901760
      %v2780 = vsub.f32 %v2778, %v2779
      %v2781 = vand.u32 %v2780, 4294901760
      %2782 = vmatmul.f32.gmra.mxu0 %v2781
      %v2783 = vpop.f32.mrf.mxu0
      %v2784 = vadd.f32 0.0, %v2783
      %2785 = vdwg.mxu0
      %2786 = vmatpush.msra.mxu0 0.0
      %2787 = vmatpush.msra.mxu0 0.0
      %2788 = vmatpush.msra.mxu0 0.0
      %2789 = vmatpush.msra.mxu0 0.0
      %2790 = vmatpush.msra.mxu0 0.0
      %2791 = vmatpush.msra.mxu0 0.0
      %2792 = vmatpush.msra.mxu0 0.0
      %v2793 = vand.u32 %v2497, 4294901760
      %v2794 = vsub.f32 %v2497, %v2793
      %v2795 = vand.u32 %v2794, 4294901760
      %v2796 = vsub.f32 %v2794, %v2795
      %v2797 = vand.u32 %v2796, 4294901760
      %2798 = vmatpush.msra.mxu0 %v2797
      %v2799 = vand.u32 %v2495, 4294901760
      %v2800 = vsub.f32 %v2495, %v2799
      %v2801 = vand.u32 %v2800, 4294901760
      %v2802 = vsub.f32 %v2800, %v2801
      %v2803 = vand.u32 %v2802, 4294901760
      %2804 = vmatpush.msra.mxu0 %v2803
      %v2805 = vand.u32 %v2493, 4294901760
      %v2806 = vsub.f32 %v2493, %v2805
      %v2807 = vand.u32 %v2806, 4294901760
      %v2808 = vsub.f32 %v2806, %v2807
      %v2809 = vand.u32 %v2808, 4294901760
      %2810 = vmatpush.msra.mxu0 %v2809
      %v2811 = vand.u32 %v2491, 4294901760
      %v2812 = vsub.f32 %v2491, %v2811
      %v2813 = vand.u32 %v2812, 4294901760
      %v2814 = vsub.f32 %v2812, %v2813
      %v2815 = vand.u32 %v2814, 4294901760
      %2816 = vmatpush.msra.mxu0 %v2815
      %v2817 = vand.u32 %v2489, 4294901760
      %v2818 = vsub.f32 %v2489, %v2817
      %v2819 = vand.u32 %v2818, 4294901760
      %v2820 = vsub.f32 %v2818, %v2819
      %v2821 = vand.u32 %v2820, 4294901760
      %2822 = vmatpush.msra.mxu0 %v2821
      %v2823 = vand.u32 %v2487, 4294901760
      %v2824 = vsub.f32 %v2487, %v2823
      %v2825 = vand.u32 %v2824, 4294901760
      %v2826 = vsub.f32 %v2824, %v2825
      %v2827 = vand.u32 %v2826, 4294901760
      %2828 = vmatpush.msra.mxu0 %v2827
      %v2829 = vand.u32 %v2485, 4294901760
      %v2830 = vsub.f32 %v2485, %v2829
      %v2831 = vand.u32 %v2830, 4294901760
      %v2832 = vsub.f32 %v2830, %v2831
      %v2833 = vand.u32 %v2832, 4294901760
      %2834 = vmatpush.msra.mxu0 %v2833
      %v2835 = vand.u32 %v2483, 4294901760
      %v2836 = vsub.f32 %v2483, %v2835
      %v2837 = vand.u32 %v2836, 4294901760
      %v2838 = vsub.f32 %v2836, %v2837
      %v2839 = vand.u32 %v2838, 4294901760
      %2840 = vmatpush.msra.mxu0 %v2839
      %v2841 = vand.u32 %v2481, 4294901760
      %v2842 = vsub.f32 %v2481, %v2841
      %v2843 = vand.u32 %v2842, 4294901760
      %v2844 = vsub.f32 %v2842, %v2843
      %v2845 = vand.u32 %v2844, 4294901760
      %2846 = vmatpush.msra.mxu0 %v2845
      %v2847 = vand.u32 %v2500, 4294901760
      %2848 = vmatmul.f32.gmra.mxu0 %v2847
      %v2849 = vpop.f32.mrf.mxu0
      %v2850 = vadd.f32 %v2784, %v2849
      %2851 = vdwg.mxu0
      %2852 = vmatpush.msra.mxu0 0.0
      %2853 = vmatpush.msra.mxu0 0.0
      %2854 = vmatpush.msra.mxu0 0.0
      %2855 = vmatpush.msra.mxu0 0.0
      %2856 = vmatpush.msra.mxu0 0.0
      %2857 = vmatpush.msra.mxu0 0.0
      %2858 = vmatpush.msra.mxu0 0.0
      %v2859 = vand.u32 %v2497, 4294901760
      %v2860 = vsub.f32 %v2497, %v2859
      %2861 = vmatpush.msra.mxu0 %v2860
      %v2862 = vand.u32 %v2495, 4294901760
      %v2863 = vsub.f32 %v2495, %v2862
      %2864 = vmatpush.msra.mxu0 %v2863
      %v2865 = vand.u32 %v2493, 4294901760
      %v2866 = vsub.f32 %v2493, %v2865
      %2867 = vmatpush.msra.mxu0 %v2866
      %v2868 = vand.u32 %v2491, 4294901760
      %v2869 = vsub.f32 %v2491, %v2868
      %2870 = vmatpush.msra.mxu0 %v2869
      %v2871 = vand.u32 %v2489, 4294901760
      %v2872 = vsub.f32 %v2489, %v2871
      %2873 = vmatpush.msra.mxu0 %v2872
      %v2874 = vand.u32 %v2487, 4294901760
      %v2875 = vsub.f32 %v2487, %v2874
      %2876 = vmatpush.msra.mxu0 %v2875
      %v2877 = vand.u32 %v2485, 4294901760
      %v2878 = vsub.f32 %v2485, %v2877
      %2879 = vmatpush.msra.mxu0 %v2878
      %v2880 = vand.u32 %v2483, 4294901760
      %v2881 = vsub.f32 %v2483, %v2880
      %2882 = vmatpush.msra.mxu0 %v2881
      %v2883 = vand.u32 %v2481, 4294901760
      %v2884 = vsub.f32 %v2481, %v2883
      %2885 = vmatpush.msra.mxu0 %v2884
      %v2886 = vand.u32 %v2500, 4294901760
      %v2887 = vsub.f32 %v2500, %v2886
      %2888 = vmatmul.f32.gmra.mxu0 %v2887
      %v2889 = vpop.f32.mrf.mxu0
      %v2890 = vadd.f32 %v2850, %v2889
      %2891 = vdwg.mxu0
      %2892 = vmatpush.msra.mxu0 0.0
      %2893 = vmatpush.msra.mxu0 0.0
      %2894 = vmatpush.msra.mxu0 0.0
      %2895 = vmatpush.msra.mxu0 0.0
      %2896 = vmatpush.msra.mxu0 0.0
      %2897 = vmatpush.msra.mxu0 0.0
      %2898 = vmatpush.msra.mxu0 0.0
      %v2899 = vand.u32 %v2497, 4294901760
      %2900 = vmatpush.msra.mxu0 %v2899
      %v2901 = vand.u32 %v2495, 4294901760
      %2902 = vmatpush.msra.mxu0 %v2901
      %v2903 = vand.u32 %v2493, 4294901760
      %2904 = vmatpush.msra.mxu0 %v2903
      %v2905 = vand.u32 %v2491, 4294901760
      %2906 = vmatpush.msra.mxu0 %v2905
      %v2907 = vand.u32 %v2489, 4294901760
      %2908 = vmatpush.msra.mxu0 %v2907
      %v2909 = vand.u32 %v2487, 4294901760
      %2910 = vmatpush.msra.mxu0 %v2909
      %v2911 = vand.u32 %v2485, 4294901760
      %2912 = vmatpush.msra.mxu0 %v2911
      %v2913 = vand.u32 %v2483, 4294901760
      %2914 = vmatpush.msra.mxu0 %v2913
      %v2915 = vand.u32 %v2481, 4294901760
      %2916 = vmatpush.msra.mxu0 %v2915
      %v2917 = vand.u32 %v2500, 4294901760
      %v2918 = vsub.f32 %v2500, %v2917
      %v2919 = vand.u32 %v2918, 4294901760
      %2920 = vmatmul.f32.gmra.mxu0 %v2919
      %v2921 = vpop.f32.mrf.mxu0
      %v2922 = vadd.f32 %v2890, %v2921
      %2923 = vdwg.mxu0
      %2924 = vmatpush.msra.mxu0 0.0
      %2925 = vmatpush.msra.mxu0 0.0
      %2926 = vmatpush.msra.mxu0 0.0
      %2927 = vmatpush.msra.mxu0 0.0
      %2928 = vmatpush.msra.mxu0 0.0
      %2929 = vmatpush.msra.mxu0 0.0
      %2930 = vmatpush.msra.mxu0 0.0
      %v2931 = vand.u32 %v2497, 4294901760
      %v2932 = vsub.f32 %v2497, %v2931
      %v2933 = vand.u32 %v2932, 4294901760
      %2934 = vmatpush.msra.mxu0 %v2933
      %v2935 = vand.u32 %v2495, 4294901760
      %v2936 = vsub.f32 %v2495, %v2935
      %v2937 = vand.u32 %v2936, 4294901760
      %2938 = vmatpush.msra.mxu0 %v2937
      %v2939 = vand.u32 %v2493, 4294901760
      %v2940 = vsub.f32 %v2493, %v2939
      %v2941 = vand.u32 %v2940, 4294901760
      %2942 = vmatpush.msra.mxu0 %v2941
      %v2943 = vand.u32 %v2491, 4294901760
      %v2944 = vsub.f32 %v2491, %v2943
      %v2945 = vand.u32 %v2944, 4294901760
      %2946 = vmatpush.msra.mxu0 %v2945
      %v2947 = vand.u32 %v2489, 4294901760
      %v2948 = vsub.f32 %v2489, %v2947
      %v2949 = vand.u32 %v2948, 4294901760
      %2950 = vmatpush.msra.mxu0 %v2949
      %v2951 = vand.u32 %v2487, 4294901760
      %v2952 = vsub.f32 %v2487, %v2951
      %v2953 = vand.u32 %v2952, 4294901760
      %2954 = vmatpush.msra.mxu0 %v2953
      %v2955 = vand.u32 %v2485, 4294901760
      %v2956 = vsub.f32 %v2485, %v2955
      %v2957 = vand.u32 %v2956, 4294901760
      %2958 = vmatpush.msra.mxu0 %v2957
      %v2959 = vand.u32 %v2483, 4294901760
      %v2960 = vsub.f32 %v2483, %v2959
      %v2961 = vand.u32 %v2960, 4294901760
      %2962 = vmatpush.msra.mxu0 %v2961
      %v2963 = vand.u32 %v2481, 4294901760
      %v2964 = vsub.f32 %v2481, %v2963
      %v2965 = vand.u32 %v2964, 4294901760
      %2966 = vmatpush.msra.mxu0 %v2965
      %v2967 = vand.u32 %v2500, 4294901760
      %2968 = vmatmul.f32.gmra.mxu0 %v2967
      %v2969 = vpop.f32.mrf.mxu0
      %v2970 = vadd.f32 %v2922, %v2969
      %2971 = vdwg.mxu0
      %2972 = vmatpush.msra.mxu0 0.0
      %2973 = vmatpush.msra.mxu0 0.0
      %2974 = vmatpush.msra.mxu0 0.0
      %2975 = vmatpush.msra.mxu0 0.0
      %2976 = vmatpush.msra.mxu0 0.0
      %2977 = vmatpush.msra.mxu0 0.0
      %2978 = vmatpush.msra.mxu0 0.0
      %v2979 = vand.u32 %v2497, 4294901760
      %2980 = vmatpush.msra.mxu0 %v2979
      %v2981 = vand.u32 %v2495, 4294901760
      %2982 = vmatpush.msra.mxu0 %v2981
      %v2983 = vand.u32 %v2493, 4294901760
      %2984 = vmatpush.msra.mxu0 %v2983
      %v2985 = vand.u32 %v2491, 4294901760
      %2986 = vmatpush.msra.mxu0 %v2985
      %v2987 = vand.u32 %v2489, 4294901760
      %2988 = vmatpush.msra.mxu0 %v2987
      %v2989 = vand.u32 %v2487, 4294901760
      %2990 = vmatpush.msra.mxu0 %v2989
      %v2991 = vand.u32 %v2485, 4294901760
      %2992 = vmatpush.msra.mxu0 %v2991
      %v2993 = vand.u32 %v2483, 4294901760
      %2994 = vmatpush.msra.mxu0 %v2993
      %v2995 = vand.u32 %v2481, 4294901760
      %2996 = vmatpush.msra.mxu0 %v2995
      %v2997 = vand.u32 %v2500, 4294901760
      %2998 = vmatmul.f32.gmra.mxu0 %v2997
      %v2999 = vpop.f32.mrf.mxu0
      %v3000 = vadd.f32 %v2970, %v2999
      %3001 = vdwg.mxu0
      %vm3002 = vcmask 1043456
      %v3003 = vsel %vm3002, %v2750, 0.0
      %v3004 = vsel %vm3002, %v3000, 0.0
      %v3005 = vadd.f32 %v3003, %v3004
      %3006 = vadd.xlane.f32.xlu0 %v3005
      %v3007 = vpop.xlane.xlu0 %3006
      %v3008 = vrcp.pop 256.0
      %v3009 = vmul.f32 256.0, %v3008
      %v3010 = vsub.f32 1.0, %v3009
      %v3011 = vmul.f32 %v3008, %v3010
      %v3012 = vadd.f32 %v3008, %v3011
      %vm3013 = vweird.f32 %v3008
      %v3014 = vsel %vm3013, %v3008, %v3012
      %v3015 = vmul.f32 %v3007, %v3014
      %v3016 = vmul.f32 %v2750, %v2750
      %v3017 = vmul.f32 %v3000, %v3000
      %v3018 = vsel %vm3002, %v3016, 0.0
      %v3019 = vsel %vm3002, %v3017, 0.0
      %v3020 = vadd.f32 %v3018, %v3019
      %3021 = vadd.xlane.f32.xlu0 %v3020
      %v3022 = vpop.xlane.xlu0 %3021
      %v3023 = vmul.f32 %v3022, %v3014
      %v3024 = vmul.f32 %v3015, %v3015
      %v3025 = vsub.f32 %v3023, %v3024
      %v3026 = vld [vmem:[%s7] sm:$0xf]
      %v3027 = vadd.f32 %v3025, 1e-05
      %v3028 = vrsqrt.pop %v3027
      %v3029 = vmul.f32 %v3028, %v3027
      %v3030 = vmul.f32 %v3029, %v3028
      %v3031 = vmul.f32 0.5, %v3030
      %v3032 = vsub.f32 1.5, %v3031
      %v3033 = vmul.f32 %v3028, %v3032
      %vm3034 = vweird.f32 %v3027
      %vm3035 = vweird.f32 %v3028
      %vm3036 = vmor %vm3034, %vm3035
      %v3037 = vsel %vm3036, %v3028, %v3033
      %v3038 = vmul.f32 %v3026, %v3037
      %v3039 = vld [vmem:[%s8] sm:$0xf]
      %v3040 = vmul.f32 %v3015, %v3038
      %v3041 = vsub.f32 %v3039, %v3040
      %3043 = vset.pattern.permute.xlu0 0
      %3044 = vperm.xlu0 %3043, %v3038
      %v3045 = vpop.permute.xlu0 %3044
      %v3047 = vmul.f32 %v2750, %v3045
      %v3048 = vmul.f32 %v3000, %v3045
      %3050 = vset.pattern.permute.xlu0 0
      %3051 = vperm.xlu0 %3050, %v3041
      %v3052 = vpop.permute.xlu0 %3051
      %v3054 = vadd.f32 %v3047, %v3052
      %v3055 = vadd.f32 %v3048, %v3052
      %v3056 = vmax.f32 %v3054, 0.0
      %v3057 = vmax.f32 %v3055, 0.0
      %3058 = vrot.lane.b32.xlu0 %v3056, 17
      %v3059 = vpop.permute.xlu0 %3058
      %3060 = vrot.lane.b32.xlu0 %v3057, 17
      %v3061 = vpop.permute.xlu0 %3060
      %v3062 = vsel %vm2136, %v3059, %v3061
      %v3063 = vsel %vm2136, %v3061, %v3059
      %v3064 = vmul.f32 %v3063, %v2140
      %v3065 = vmul.f32 %v3062, %v2141
      %3066 = vst [vmem:[#allocation4] sm:$0xf] %v3064
      %3067 = vst [vmem:[#allocation4 + $0x8] sm:$0xf] %v3065
      %3068 = vrot.lane.b32.xlu0 %v3056, 16
      %v3069 = vpop.permute.xlu0 %3068
      %3070 = vrot.lane.b32.xlu0 %v3057, 16
      %v3071 = vpop.permute.xlu0 %3070
      %v3072 = vsel %vm2157, %v3069, %v3071
      %v3073 = vsel %vm2157, %v3071, %v3069
      %v3074 = vmul.f32 %v3073, %v2161
      %v3075 = vmul.f32 %v3072, %v2162
      %v3078 = vrot.slane %v3074, 4
      %v3079 = vrot.slane %v3075, 4
      %3082 = vst [vmem:[#allocation4] sm:$0xf0] %v3078
      %3083 = vst [vmem:[#allocation4 + $0x8] sm:$0xf0] %v3079
      %3084 = vrot.lane.b32.xlu0 %v3056, 15
      %v3085 = vpop.permute.xlu0 %3084
      %3086 = vrot.lane.b32.xlu0 %v3057, 15
      %v3087 = vpop.permute.xlu0 %3086
      %v3088 = vsel %vm2178, %v3085, %v3087
      %v3089 = vsel %vm2178, %v3087, %v3085
      %v3090 = vmul.f32 %v3089, %v2182
      %v3091 = vmul.f32 %v3088, %v2183
      %3092 = vst [vmem:[#allocation4 + $0x10] sm:$0xf] %v3090
      %3093 = vst [vmem:[#allocation4 + $0x18] sm:$0xf] %v3091
      %3094 = vrot.lane.b32.xlu0 %v3056, 1
      %v3095 = vpop.permute.xlu0 %3094
      %3096 = vrot.lane.b32.xlu0 %v3057, 1
      %v3097 = vpop.permute.xlu0 %3096
      %v3098 = vsel %vm2199, %v3095, %v3097
      %v3099 = vsel %vm2199, %v3097, %v3095
      %v3100 = vmul.f32 %v3099, %v2203
      %v3101 = vmul.f32 %v3098, %v2204
      %v3104 = vrot.slane %v3100, 4
      %v3105 = vrot.slane %v3101, 4
      %3108 = vst [vmem:[#allocation4 + $0x10] sm:$0xf0] %v3104
      %3109 = vst [vmem:[#allocation4 + $0x18] sm:$0xf0] %v3105
      %3110 = vst [vmem:[#allocation4 + $0x20] sm:$0xf] %v3056
      %3111 = vst [vmem:[#allocation4 + $0x28] sm:$0xf] %v3057
      %3112 = vrot.lane.b32.xlu0 %v3056, 127
      %v3113 = vpop.permute.xlu0 %3112
      %3114 = vrot.lane.b32.xlu0 %v3057, 127
      %v3115 = vpop.permute.xlu0 %3114
      %v3116 = vsel %vm2227, %v3113, %v3115
      %v3117 = vsel %vm2227, %v3115, %v3113
      %v3118 = vmul.f32 %v3116, %v2231
      %v3119 = vmul.f32 %v3117, %v2232
      %v3122 = vrot.slane %v3118, 4
      %v3123 = vrot.slane %v3119, 4
      %3126 = vst [vmem:[#allocation4 + $0x20] sm:$0xf0] %v3122
      %3127 = vst [vmem:[#allocation4 + $0x28] sm:$0xf0] %v3123
      %3128 = vrot.lane.b32.xlu0 %v3056, 113
      %v3129 = vpop.permute.xlu0 %3128
      %3130 = vrot.lane.b32.xlu0 %v3057, 113
      %v3131 = vpop.permute.xlu0 %3130
      %v3132 = vsel %vm2248, %v3129, %v3131
      %v3133 = vsel %vm2248, %v3131, %v3129
      %v3134 = vmul.f32 %v3132, %v2252
      %v3135 = vmul.f32 %v3133, %v2253
      %3136 = vst [vmem:[#allocation4 + $0x30] sm:$0xf] %v3134
      %3137 = vst [vmem:[#allocation4 + $0x38] sm:$0xf] %v3135
      %3138 = vrot.lane.b32.xlu0 %v3056, 112
      %v3139 = vpop.permute.xlu0 %3138
      %3140 = vrot.lane.b32.xlu0 %v3057, 112
      %v3141 = vpop.permute.xlu0 %3140
      %v3142 = vsel %vm2269, %v3139, %v3141
      %v3143 = vsel %vm2269, %v3141, %v3139
      %v3144 = vmul.f32 %v3142, %v2273
      %v3145 = vmul.f32 %v3143, %v2274
      %v3148 = vrot.slane %v3144, 4
      %v3149 = vrot.slane %v3145, 4
      %3152 = vst [vmem:[#allocation4 + $0x30] sm:$0xf0] %v3148
      %3153 = vst [vmem:[#allocation4 + $0x38] sm:$0xf0] %v3149
      %3154 = vrot.lane.b32.xlu0 %v3056, 111
      %v3155 = vpop.permute.xlu0 %3154
      %3156 = vrot.lane.b32.xlu0 %v3057, 111
      %v3157 = vpop.permute.xlu0 %3156
      %v3158 = vsel %vm2290, %v3155, %v3157
      %v3159 = vsel %vm2290, %v3157, %v3155
      %v3160 = vmul.f32 %v3158, %v2294
      %v3161 = vmul.f32 %v3159, %v2295
      %3162 = vst [vmem:[#allocation4 + $0x40] sm:$0xf] %v3160
      %3163 = vst [vmem:[#allocation4 + $0x48] sm:$0xf] %v3161
      %v3164 = vld [vmem:[%s6] sm:$0xf]
      %v3165 = vld [vmem:[#allocation4] sm:$0xff]
      %v3166 = vld [vmem:[#allocation4 + $0x8] sm:$0xff]
      %v3167 = vld [vmem:[#allocation4 + $0x10] sm:$0xff]
      %v3168 = vld [vmem:[#allocation4 + $0x18] sm:$0xff]
      %v3169 = vld [vmem:[#allocation4 + $0x20] sm:$0xff]
      %v3170 = vld [vmem:[#allocation4 + $0x28] sm:$0xff]
      %v3171 = vld [vmem:[#allocation4 + $0x30] sm:$0xff]
      %v3172 = vld [vmem:[#allocation4 + $0x38] sm:$0xff]
      %v3173 = vld [vmem:[#allocation4 + $0x40] sm:$0xf]
      %v3174 = vld [vmem:[#allocation4 + $0x48] sm:$0xf]
      %vm3175 = vcmask 293888
      %v3177 = vsel %vm3175, %v3164, 0
      %v3180 = vsel %vm3002, %v3173, 0
      %v3183 = vsel %vm3002, %v3174, 0
      %3185 = vmatpush.msra.mxu0 0.0
      %3186 = vmatpush.msra.mxu0 0.0
      %3187 = vmatpush.msra.mxu0 0.0
      %3188 = vmatpush.msra.mxu0 0.0
      %3189 = vmatpush.msra.mxu0 0.0
      %3190 = vmatpush.msra.mxu0 0.0
      %3191 = vmatpush.msra.mxu0 0.0
      %3192 = vmatpush.msra.mxu0 0.0
      %3193 = vmatpush.msra.mxu0 0.0
      %3194 = vmatpush.msra.mxu0 0.0
      %3195 = vmatpush.msra.mxu0 0.0
      %v3196 = vand.u32 %v3180, 4294901760
      %3197 = vmatpush.msra.mxu0 %v3196
      %v3198 = vand.u32 %v3171, 4294901760
      %3199 = vmatpush.msra.mxu0 %v3198
      %v3200 = vand.u32 %v3169, 4294901760
      %3201 = vmatpush.msra.mxu0 %v3200
      %v3202 = vand.u32 %v3167, 4294901760
      %3203 = vmatpush.msra.mxu0 %v3202
      %v3204 = vand.u32 %v3165, 4294901760
      %3205 = vmatpush.msra.mxu0 %v3204
      %v3206 = vand.u32 %v3177, 4294901760
      %v3207 = vsub.f32 %v3177, %v3206
      %v3208 = vand.u32 %v3207, 4294901760
      %v3209 = vsub.f32 %v3207, %v3208
      %v3210 = vand.u32 %v3209, 4294901760
      %3211 = vmatmul.f32.gmra.mxu0 %v3210
      %v3212 = vpop.f32.mrf.mxu0
      %v3213 = vadd.f32 0.0, %v3212
      %3214 = vdwg.mxu0
      %3215 = vmatpush.msra.mxu0 0.0
      %3216 = vmatpush.msra.mxu0 0.0
      %3217 = vmatpush.msra.mxu0 0.0
      %3218 = vmatpush.msra.mxu0 0.0
      %3219 = vmatpush.msra.mxu0 0.0
      %3220 = vmatpush.msra.mxu0 0.0
      %3221 = vmatpush.msra.mxu0 0.0
      %3222 = vmatpush.msra.mxu0 0.0
      %3223 = vmatpush.msra.mxu0 0.0
      %3224 = vmatpush.msra.mxu0 0.0
      %3225 = vmatpush.msra.mxu0 0.0
      %v3226 = vand.u32 %v3180, 4294901760
      %v3227 = vsub.f32 %v3180, %v3226
      %v3228 = vand.u32 %v3227, 4294901760
      %v3229 = vsub.f32 %v3227, %v3228
      %v3230 = vand.u32 %v3229, 4294901760
      %3231 = vmatpush.msra.mxu0 %v3230
      %v3232 = vand.u32 %v3171, 4294901760
      %v3233 = vsub.f32 %v3171, %v3232
      %v3234 = vand.u32 %v3233, 4294901760
      %v3235 = vsub.f32 %v3233, %v3234
      %v3236 = vand.u32 %v3235, 4294901760
      %3237 = vmatpush.msra.mxu0 %v3236
      %v3238 = vand.u32 %v3169, 4294901760
      %v3239 = vsub.f32 %v3169, %v3238
      %v3240 = vand.u32 %v3239, 4294901760
      %v3241 = vsub.f32 %v3239, %v3240
      %v3242 = vand.u32 %v3241, 4294901760
      %3243 = vmatpush.msra.mxu0 %v3242
      %v3244 = vand.u32 %v3167, 4294901760
      %v3245 = vsub.f32 %v3167, %v3244
      %v3246 = vand.u32 %v3245, 4294901760
      %v3247 = vsub.f32 %v3245, %v3246
      %v3248 = vand.u32 %v3247, 4294901760
      %3249 = vmatpush.msra.mxu0 %v3248
      %v3250 = vand.u32 %v3165, 4294901760
      %v3251 = vsub.f32 %v3165, %v3250
      %v3252 = vand.u32 %v3251, 4294901760
      %v3253 = vsub.f32 %v3251, %v3252
      %v3254 = vand.u32 %v3253, 4294901760
      %3255 = vmatpush.msra.mxu0 %v3254
      %v3256 = vand.u32 %v3177, 4294901760
      %3257 = vmatmul.f32.gmra.mxu0 %v3256
      %v3258 = vpop.f32.mrf.mxu0
      %v3259 = vadd.f32 %v3213, %v3258
      %3260 = vdwg.mxu0
      %3261 = vmatpush.msra.mxu0 0.0
      %3262 = vmatpush.msra.mxu0 0.0
      %3263 = vmatpush.msra.mxu0 0.0
      %3264 = vmatpush.msra.mxu0 0.0
      %3265 = vmatpush.msra.mxu0 0.0
      %3266 = vmatpush.msra.mxu0 0.0
      %3267 = vmatpush.msra.mxu0 0.0
      %3268 = vmatpush.msra.mxu0 0.0
      %3269 = vmatpush.msra.mxu0 0.0
      %3270 = vmatpush.msra.mxu0 0.0
      %3271 = vmatpush.msra.mxu0 0.0
      %v3272 = vand.u32 %v3180, 4294901760
      %v3273 = vsub.f32 %v3180, %v3272
      %3274 = vmatpush.msra.mxu0 %v3273
      %v3275 = vand.u32 %v3171, 4294901760
      %v3276 = vsub.f32 %v3171, %v3275
      %3277 = vmatpush.msra.mxu0 %v3276
      %v3278 = vand.u32 %v3169, 4294901760
      %v3279 = vsub.f32 %v3169, %v3278
      %3280 = vmatpush.msra.mxu0 %v3279
      %v3281 = vand.u32 %v3167, 4294901760
      %v3282 = vsub.f32 %v3167, %v3281
      %3283 = vmatpush.msra.mxu0 %v3282
      %v3284 = vand.u32 %v3165, 4294901760
      %v3285 = vsub.f32 %v3165, %v3284
      %3286 = vmatpush.msra.mxu0 %v3285
      %v3287 = vand.u32 %v3177, 4294901760
      %v3288 = vsub.f32 %v3177, %v3287
      %3289 = vmatmul.f32.gmra.mxu0 %v3288
      %v3290 = vpop.f32.mrf.mxu0
      %v3291 = vadd.f32 %v3259, %v3290
      %3292 = vdwg.mxu0
      %3293 = vmatpush.msra.mxu0 0.0
      %3294 = vmatpush.msra.mxu0 0.0
      %3295 = vmatpush.msra.mxu0 0.0
      %3296 = vmatpush.msra.mxu0 0.0
      %3297 = vmatpush.msra.mxu0 0.0
      %3298 = vmatpush.msra.mxu0 0.0
      %3299 = vmatpush.msra.mxu0 0.0
      %3300 = vmatpush.msra.mxu0 0.0
      %3301 = vmatpush.msra.mxu0 0.0
      %3302 = vmatpush.msra.mxu0 0.0
      %3303 = vmatpush.msra.mxu0 0.0
      %v3304 = vand.u32 %v3180, 4294901760
      %3305 = vmatpush.msra.mxu0 %v3304
      %v3306 = vand.u32 %v3171, 4294901760
      %3307 = vmatpush.msra.mxu0 %v3306
      %v3308 = vand.u32 %v3169, 4294901760
      %3309 = vmatpush.msra.mxu0 %v3308
      %v3310 = vand.u32 %v3167, 4294901760
      %3311 = vmatpush.msra.mxu0 %v3310
      %v3312 = vand.u32 %v3165, 4294901760
      %3313 = vmatpush.msra.mxu0 %v3312
      %v3314 = vand.u32 %v3177, 4294901760
      %v3315 = vsub.f32 %v3177, %v3314
      %v3316 = vand.u32 %v3315, 4294901760
      %3317 = vmatmul.f32.gmra.mxu0 %v3316
      %v3318 = vpop.f32.mrf.mxu0
      %v3319 = vadd.f32 %v3291, %v3318
      %3320 = vdwg.mxu0
      %3321 = vmatpush.msra.mxu0 0.0
      %3322 = vmatpush.msra.mxu0 0.0
      %3323 = vmatpush.msra.mxu0 0.0
      %3324 = vmatpush.msra.mxu0 0.0
      %3325 = vmatpush.msra.mxu0 0.0
      %3326 = vmatpush.msra.mxu0 0.0
      %3327 = vmatpush.msra.mxu0 0.0
      %3328 = vmatpush.msra.mxu0 0.0
      %3329 = vmatpush.msra.mxu0 0.0
      %3330 = vmatpush.msra.mxu0 0.0
      %3331 = vmatpush.msra.mxu0 0.0
      %v3332 = vand.u32 %v3180, 4294901760
      %v3333 = vsub.f32 %v3180, %v3332
      %v3334 = vand.u32 %v3333, 4294901760
      %3335 = vmatpush.msra.mxu0 %v3334
      %v3336 = vand.u32 %v3171, 4294901760
      %v3337 = vsub.f32 %v3171, %v3336
      %v3338 = vand.u32 %v3337, 4294901760
      %3339 = vmatpush.msra.mxu0 %v3338
      %v3340 = vand.u32 %v3169, 4294901760
      %v3341 = vsub.f32 %v3169, %v3340
      %v3342 = vand.u32 %v3341, 4294901760
      %3343 = vmatpush.msra.mxu0 %v3342
      %v3344 = vand.u32 %v3167, 4294901760
      %v3345 = vsub.f32 %v3167, %v3344
      %v3346 = vand.u32 %v3345, 4294901760
      %3347 = vmatpush.msra.mxu0 %v3346
      %v3348 = vand.u32 %v3165, 4294901760
      %v3349 = vsub.f32 %v3165, %v3348
      %v3350 = vand.u32 %v3349, 4294901760
      %3351 = vmatpush.msra.mxu0 %v3350
      %v3352 = vand.u32 %v3177, 4294901760
      %3353 = vmatmul.f32.gmra.mxu0 %v3352
      %v3354 = vpop.f32.mrf.mxu0
      %v3355 = vadd.f32 %v3319, %v3354
      %3356 = vdwg.mxu0
      %3357 = vmatpush.msra.mxu0 0.0
      %3358 = vmatpush.msra.mxu0 0.0
      %3359 = vmatpush.msra.mxu0 0.0
      %3360 = vmatpush.msra.mxu0 0.0
      %3361 = vmatpush.msra.mxu0 0.0
      %3362 = vmatpush.msra.mxu0 0.0
      %3363 = vmatpush.msra.mxu0 0.0
      %3364 = vmatpush.msra.mxu0 0.0
      %3365 = vmatpush.msra.mxu0 0.0
      %3366 = vmatpush.msra.mxu0 0.0
      %3367 = vmatpush.msra.mxu0 0.0
      %v3368 = vand.u32 %v3180, 4294901760
      %3369 = vmatpush.msra.mxu0 %v3368
      %v3370 = vand.u32 %v3171, 4294901760
      %3371 = vmatpush.msra.mxu0 %v3370
      %v3372 = vand.u32 %v3169, 4294901760
      %3373 = vmatpush.msra.mxu0 %v3372
      %v3374 = vand.u32 %v3167, 4294901760
      %3375 = vmatpush.msra.mxu0 %v3374
      %v3376 = vand.u32 %v3165, 4294901760
      %3377 = vmatpush.msra.mxu0 %v3376
      %v3378 = vand.u32 %v3177, 4294901760
      %3379 = vmatmul.f32.gmra.mxu0 %v3378
      %v3380 = vpop.f32.mrf.mxu0
      %v3381 = vadd.f32 %v3355, %v3380
      %3382 = vdwg.mxu0
      %3383 = vmatpush.msra.mxu0 0.0
      %3384 = vmatpush.msra.mxu0 0.0
      %3385 = vmatpush.msra.mxu0 0.0
      %3386 = vmatpush.msra.mxu0 0.0
      %3387 = vmatpush.msra.mxu0 0.0
      %3388 = vmatpush.msra.mxu0 0.0
      %3389 = vmatpush.msra.mxu0 0.0
      %3390 = vmatpush.msra.mxu0 0.0
      %3391 = vmatpush.msra.mxu0 0.0
      %3392 = vmatpush.msra.mxu0 0.0
      %3393 = vmatpush.msra.mxu0 0.0
      %v3394 = vand.u32 %v3183, 4294901760
      %3395 = vmatpush.msra.mxu0 %v3394
      %v3396 = vand.u32 %v3172, 4294901760
      %3397 = vmatpush.msra.mxu0 %v3396
      %v3398 = vand.u32 %v3170, 4294901760
      %3399 = vmatpush.msra.mxu0 %v3398
      %v3400 = vand.u32 %v3168, 4294901760
      %3401 = vmatpush.msra.mxu0 %v3400
      %v3402 = vand.u32 %v3166, 4294901760
      %3403 = vmatpush.msra.mxu0 %v3402
      %v3404 = vand.u32 %v3177, 4294901760
      %v3405 = vsub.f32 %v3177, %v3404
      %v3406 = vand.u32 %v3405, 4294901760
      %v3407 = vsub.f32 %v3405, %v3406
      %v3408 = vand.u32 %v3407, 4294901760
      %3409 = vmatmul.f32.gmra.mxu0 %v3408
      %v3410 = vpop.f32.mrf.mxu0
      %v3411 = vadd.f32 0.0, %v3410
      %3412 = vdwg.mxu0
      %3413 = vmatpush.msra.mxu0 0.0
      %3414 = vmatpush.msra.mxu0 0.0
      %3415 = vmatpush.msra.mxu0 0.0
      %3416 = vmatpush.msra.mxu0 0.0
      %3417 = vmatpush.msra.mxu0 0.0
      %3418 = vmatpush.msra.mxu0 0.0
      %3419 = vmatpush.msra.mxu0 0.0
      %3420 = vmatpush.msra.mxu0 0.0
      %3421 = vmatpush.msra.mxu0 0.0
      %3422 = vmatpush.msra.mxu0 0.0
      %3423 = vmatpush.msra.mxu0 0.0
      %v3424 = vand.u32 %v3183, 4294901760
      %v3425 = vsub.f32 %v3183, %v3424
      %v3426 = vand.u32 %v3425, 4294901760
      %v3427 = vsub.f32 %v3425, %v3426
      %v3428 = vand.u32 %v3427, 4294901760
      %3429 = vmatpush.msra.mxu0 %v3428
      %v3430 = vand.u32 %v3172, 4294901760
      %v3431 = vsub.f32 %v3172, %v3430
      %v3432 = vand.u32 %v3431, 4294901760
      %v3433 = vsub.f32 %v3431, %v3432
      %v3434 = vand.u32 %v3433, 4294901760
      %3435 = vmatpush.msra.mxu0 %v3434
      %v3436 = vand.u32 %v3170, 4294901760
      %v3437 = vsub.f32 %v3170, %v3436
      %v3438 = vand.u32 %v3437, 4294901760
      %v3439 = vsub.f32 %v3437, %v3438
      %v3440 = vand.u32 %v3439, 4294901760
      %3441 = vmatpush.msra.mxu0 %v3440
      %v3442 = vand.u32 %v3168, 4294901760
      %v3443 = vsub.f32 %v3168, %v3442
      %v3444 = vand.u32 %v3443, 4294901760
      %v3445 = vsub.f32 %v3443, %v3444
      %v3446 = vand.u32 %v3445, 4294901760
      %3447 = vmatpush.msra.mxu0 %v3446
      %v3448 = vand.u32 %v3166, 4294901760
      %v3449 = vsub.f32 %v3166, %v3448
      %v3450 = vand.u32 %v3449, 4294901760
      %v3451 = vsub.f32 %v3449, %v3450
      %v3452 = vand.u32 %v3451, 4294901760
      %3453 = vmatpush.msra.mxu0 %v3452
      %v3454 = vand.u32 %v3177, 4294901760
      %3455 = vmatmul.f32.gmra.mxu0 %v3454
      %v3456 = vpop.f32.mrf.mxu0
      %v3457 = vadd.f32 %v3411, %v3456
      %3458 = vdwg.mxu0
      %3459 = vmatpush.msra.mxu0 0.0
      %3460 = vmatpush.msra.mxu0 0.0
      %3461 = vmatpush.msra.mxu0 0.0
      %3462 = vmatpush.msra.mxu0 0.0
      %3463 = vmatpush.msra.mxu0 0.0
      %3464 = vmatpush.msra.mxu0 0.0
      %3465 = vmatpush.msra.mxu0 0.0
      %3466 = vmatpush.msra.mxu0 0.0
      %3467 = vmatpush.msra.mxu0 0.0
      %3468 = vmatpush.msra.mxu0 0.0
      %3469 = vmatpush.msra.mxu0 0.0
      %v3470 = vand.u32 %v3183, 4294901760
      %v3471 = vsub.f32 %v3183, %v3470
      %3472 = vmatpush.msra.mxu0 %v3471
      %v3473 = vand.u32 %v3172, 4294901760
      %v3474 = vsub.f32 %v3172, %v3473
      %3475 = vmatpush.msra.mxu0 %v3474
      %v3476 = vand.u32 %v3170, 4294901760
      %v3477 = vsub.f32 %v3170, %v3476
      %3478 = vmatpush.msra.mxu0 %v3477
      %v3479 = vand.u32 %v3168, 4294901760
      %v3480 = vsub.f32 %v3168, %v3479
      %3481 = vmatpush.msra.mxu0 %v3480
      %v3482 = vand.u32 %v3166, 4294901760
      %v3483 = vsub.f32 %v3166, %v3482
      %3484 = vmatpush.msra.mxu0 %v3483
      %v3485 = vand.u32 %v3177, 4294901760
      %v3486 = vsub.f32 %v3177, %v3485
      %3487 = vmatmul.f32.gmra.mxu0 %v3486
      %v3488 = vpop.f32.mrf.mxu0
      %v3489 = vadd.f32 %v3457, %v3488
      %3490 = vdwg.mxu0
      %3491 = vmatpush.msra.mxu0 0.0
      %3492 = vmatpush.msra.mxu0 0.0
      %3493 = vmatpush.msra.mxu0 0.0
      %3494 = vmatpush.msra.mxu0 0.0
      %3495 = vmatpush.msra.mxu0 0.0
      %3496 = vmatpush.msra.mxu0 0.0
      %3497 = vmatpush.msra.mxu0 0.0
      %3498 = vmatpush.msra.mxu0 0.0
      %3499 = vmatpush.msra.mxu0 0.0
      %3500 = vmatpush.msra.mxu0 0.0
      %3501 = vmatpush.msra.mxu0 0.0
      %v3502 = vand.u32 %v3183, 4294901760
      %3503 = vmatpush.msra.mxu0 %v3502
      %v3504 = vand.u32 %v3172, 4294901760
      %3505 = vmatpush.msra.mxu0 %v3504
      %v3506 = vand.u32 %v3170, 4294901760
      %3507 = vmatpush.msra.mxu0 %v3506
      %v3508 = vand.u32 %v3168, 4294901760
      %3509 = vmatpush.msra.mxu0 %v3508
      %v3510 = vand.u32 %v3166, 4294901760
      %3511 = vmatpush.msra.mxu0 %v3510
      %v3512 = vand.u32 %v3177, 4294901760
      %v3513 = vsub.f32 %v3177, %v3512
      %v3514 = vand.u32 %v3513, 4294901760
      %3515 = vmatmul.f32.gmra.mxu0 %v3514
      %v3516 = vpop.f32.mrf.mxu0
      %v3517 = vadd.f32 %v3489, %v3516
      %3518 = vdwg.mxu0
      %3519 = vmatpush.msra.mxu0 0.0
      %3520 = vmatpush.msra.mxu0 0.0
      %3521 = vmatpush.msra.mxu0 0.0
      %3522 = vmatpush.msra.mxu0 0.0
      %3523 = vmatpush.msra.mxu0 0.0
      %3524 = vmatpush.msra.mxu0 0.0
      %3525 = vmatpush.msra.mxu0 0.0
      %3526 = vmatpush.msra.mxu0 0.0
      %3527 = vmatpush.msra.mxu0 0.0
      %3528 = vmatpush.msra.mxu0 0.0
      %3529 = vmatpush.msra.mxu0 0.0
      %v3530 = vand.u32 %v3183, 4294901760
      %v3531 = vsub.f32 %v3183, %v3530
      %v3532 = vand.u32 %v3531, 4294901760
      %3533 = vmatpush.msra.mxu0 %v3532
      %v3534 = vand.u32 %v3172, 4294901760
      %v3535 = vsub.f32 %v3172, %v3534
      %v3536 = vand.u32 %v3535, 4294901760
      %3537 = vmatpush.msra.mxu0 %v3536
      %v3538 = vand.u32 %v3170, 4294901760
      %v3539 = vsub.f32 %v3170, %v3538
      %v3540 = vand.u32 %v3539, 4294901760
      %3541 = vmatpush.msra.mxu0 %v3540
      %v3542 = vand.u32 %v3168, 4294901760
      %v3543 = vsub.f32 %v3168, %v3542
      %v3544 = vand.u32 %v3543, 4294901760
      %3545 = vmatpush.msra.mxu0 %v3544
      %v3546 = vand.u32 %v3166, 4294901760
      %v3547 = vsub.f32 %v3166, %v3546
      %v3548 = vand.u32 %v3547, 4294901760
      %3549 = vmatpush.msra.mxu0 %v3548
      %v3550 = vand.u32 %v3177, 4294901760
      %3551 = vmatmul.f32.gmra.mxu0 %v3550
      %v3552 = vpop.f32.mrf.mxu0
      %v3553 = vadd.f32 %v3517, %v3552
      %3554 = vdwg.mxu0
      %3555 = vmatpush.msra.mxu0 0.0
      %3556 = vmatpush.msra.mxu0 0.0
      %3557 = vmatpush.msra.mxu0 0.0
      %3558 = vmatpush.msra.mxu0 0.0
      %3559 = vmatpush.msra.mxu0 0.0
      %3560 = vmatpush.msra.mxu0 0.0
      %3561 = vmatpush.msra.mxu0 0.0
      %3562 = vmatpush.msra.mxu0 0.0
      %3563 = vmatpush.msra.mxu0 0.0
      %3564 = vmatpush.msra.mxu0 0.0
      %3565 = vmatpush.msra.mxu0 0.0
      %v3566 = vand.u32 %v3183, 4294901760
      %3567 = vmatpush.msra.mxu0 %v3566
      %v3568 = vand.u32 %v3172, 4294901760
      %3569 = vmatpush.msra.mxu0 %v3568
      %v3570 = vand.u32 %v3170, 4294901760
      %3571 = vmatpush.msra.mxu0 %v3570
      %v3572 = vand.u32 %v3168, 4294901760
      %3573 = vmatpush.msra.mxu0 %v3572
      %v3574 = vand.u32 %v3166, 4294901760
      %3575 = vmatpush.msra.mxu0 %v3574
      %v3576 = vand.u32 %v3177, 4294901760
      %3577 = vmatmul.f32.gmra.mxu0 %v3576
      %v3578 = vpop.f32.mrf.mxu0
      %v3579 = vadd.f32 %v3553, %v3578
      %3580 = vdwg.mxu0
      %v3581 = vsel %vm3002, %v3381, 0.0
      %v3582 = vsel %vm3002, %v3579, 0.0
      %v3583 = vadd.f32 %v3581, %v3582
      %3584 = vadd.xlane.f32.xlu0 %v3583
      %v3585 = vpop.xlane.xlu0 %3584
      %v3586 = vmul.f32 %v3585, %v3014
      %v3587 = vmul.f32 %v3381, %v3381
      %v3588 = vmul.f32 %v3579, %v3579
      %v3589 = vsel %vm3002, %v3587, 0.0
      %v3590 = vsel %vm3002, %v3588, 0.0
      %v3591 = vadd.f32 %v3589, %v3590
      %3592 = vadd.xlane.f32.xlu0 %v3591
      %v3593 = vpop.xlane.xlu0 %3592
      %v3594 = vmul.f32 %v3593, %v3014
      %v3595 = vmul.f32 %v3586, %v3586
      %v3596 = vsub.f32 %v3594, %v3595
      %v3597 = vld [vmem:[%s9] sm:$0xf]
      %v3598 = vadd.f32 %v3596, 1e-05
      %v3599 = vrsqrt.pop %v3598
      %v3600 = vmul.f32 %v3599, %v3598
      %v3601 = vmul.f32 %v3600, %v3599
      %v3602 = vmul.f32 0.5, %v3601
      %v3603 = vsub.f32 1.5, %v3602
      %v3604 = vmul.f32 %v3599, %v3603
      %vm3605 = vweird.f32 %v3598
      %vm3606 = vweird.f32 %v3599
      %vm3607 = vmor %vm3605, %vm3606
      %v3608 = vsel %vm3607, %v3599, %v3604
      %v3609 = vmul.f32 %v3597, %v3608
      %v3610 = vld [vmem:[%s10] sm:$0xf]
      %v3611 = vmul.f32 %v3586, %v3609
      %v3612 = vsub.f32 %v3610, %v3611
      %3614 = vset.pattern.permute.xlu0 0
      %3615 = vperm.xlu0 %3614, %v3609
      %v3616 = vpop.permute.xlu0 %3615
      %v3618 = vmul.f32 %v3381, %v3616
      %v3619 = vmul.f32 %v3579, %v3616
      %3621 = vset.pattern.permute.xlu0 0
      %3622 = vperm.xlu0 %3621, %v3612
      %v3623 = vpop.permute.xlu0 %3622
      %v3625 = vadd.f32 %v3618, %v3623
      %v3626 = vadd.f32 %v3619, %v3623
      %v3627 = vmax.f32 %v3625, 0.0
      %v3628 = vmax.f32 %v3626, 0.0
      %v3631 = vrot.slane %v3628, 4
      %v3632 = vsel %vm3002, %v3627, %v3631
      %3634 = vst [vmem:[%s406] sm:$0xff] %v3632
      %p3635 = scmp.lt.s32.totalorder %s22, 1
      %s3636 = scalar_select %p3635, %s22, 1
      %s3637 = smul.addr %s3636, 2
      %s3638 = smul.addr %s3637, 4
      %s3639 = scalar_lea.vmem %s11, %s3638
      // Predicated region
      $region65: #{up_forward.1} parent=63 // pred_check
        %p3640 = pneg %p281
      $region66: #{up_forward.1} parent=63 // pred_check_branch
        %3642 = sbr.rel (%p3640) target = $region68
      $region67: #{up_forward.1} parent=63 // pred_region
        _
      $region68: #{up_forward.1} parent=63 // pred_fallthru
        _
    $region64: #{up_forward.1} parent=5 // pred_fallthru
      _
    %p3643 = scmp.le.s32.totalorder 2, %s17
    // Predicated region
    $region69: #{up_forward.1} parent=5 // pred_check
      %p3644 = pneg %p3643
    $region70: #{up_forward.1} parent=5 // pred_check_branch
      %3646 = sbr.rel (%p3644) target = $region72
    $region71: #{up_forward.1} parent=5 // pred_region
      %s3647 = ssub.s32 %s17, 2
      // Predicated region
      $region73: #{up_forward.1} parent=71 // pred_check
        %p3648 = pneg %p287
      $region74: #{up_forward.1} parent=71 // pred_check_branch
        %3650 = sbr.rel (%p3648) target = $region76
      $region75: #{up_forward.1} parent=71 // pred_region
        %p3651 = scmp.lt.s32.totalorder %s23, 1
        %s3652 = scalar_select %p3651, %s23, 1
        %s3653 = smul.addr %s3652, 2
        %s3654 = smul.addr %s3653, 4
        %s3655 = scalar_lea.vmem %s11, %s3654
      $region76: #{up_forward.1} parent=71 // pred_fallthru
        _
    $region72: #{up_forward.1} parent=5 // pred_fallthru
      _
  $region6: #{up_forward.1} parent=0 // loop_footer
    %s21 = sadd.s32 1, %s17
  $region7: #{up_forward.1} parent=0 // loop_footer_branch
    %16 = sbr.rel target = $region3
  $region8: #{up_forward.1} parent=0 // loop_exit
    _

</llo_original>
